<compile_context>
chip_gen: v7x
topology: tpu7x:2x2x1
jax: 0.10.0
libtpu: 0.0.40
codegen_flags: <defaults>
</compile_context>

<pallas_src>
import math
from functools import partial

import jax
import jax.numpy as jnp
from jax.experimental import pallas as pl
from jax.experimental.pallas import tpu as pltpu


# ----------------------------------------------------------------------------
# helpers
# ----------------------------------------------------------------------------
def _lcm(a, b):
    return a * b // math.gcd(a, b)


_VMEM_LIMIT_CACHE = None


def _vmem_limit_bytes():
    """64 MiB scoped VMEM on 128-MiB parts (v5e/v6e), 32 MiB on v7x (64 MiB phys)."""
    global _VMEM_LIMIT_CACHE
    if _VMEM_LIMIT_CACHE is None:
        limit = 32 * 1024 * 1024
        try:
            cap = int(pltpu.get_tpu_info().vmem_capacity_bytes)
            if cap >= 128 * 1024 * 1024:
                limit = 64 * 1024 * 1024
        except Exception:
            pass
        _VMEM_LIMIT_CACHE = limit
    return _VMEM_LIMIT_CACHE


def _pick_lane_tile(m, unit, bytes_per_lane, max_bytes, max_lanes=16384):
    """Largest multiple of `unit` dividing m (m is pre-padded to a multiple of unit),
    capped by a per-buffer VMEM budget so double-buffering always fits."""
    cap = min(max_lanes, max(unit, max_bytes // max(bytes_per_lane, 1)))
    t = min(m, max(unit, (cap // unit) * unit))
    while t > unit and m % t != 0:
        t -= unit
    return t


def _im2col_dm(x, k, stride, pad):
    """Depth-major channel-major im2col.

    x: (C, D, B, H, W) bf16  ->  cols (k^3*C, Do*B*Ho*Wo) bf16, M ordered (D, B, H, W).
    Row ordering is (kd, kh, kw, c_in), matching _weight_cm, so the Pallas GEMM
    output (C_out, Do*B*Ho*Wo) is already in the internal layout.
    """
    # TODO(synk): for large cubes, fuse im2col into the conv kernel as a reduction
    # grid axis over (kd, kh, kw) to avoid the k^3 HBM blow-up of this XLA buffer.
    c, d, b, h, w = x.shape
    xp = jnp.pad(x, ((0, 0), (pad, pad), (0, 0), (pad, pad), (pad, pad)))
    do = (d + 2 * pad - k) // stride + 1
    ho = (h + 2 * pad - k) // stride + 1
    wo = (w + 2 * pad - k) // stride + 1
    patches = []
    for kd in range(k):
        for kh in range(k):
            for kw in range(k):
                patches.append(xp[:, kd:kd + stride * do:stride, :,
                                  kh:kh + stride * ho:stride,
                                  kw:kw + stride * wo:stride])
    cols = jnp.stack(patches, axis=0)                 # (k^3, C, Do, B, Ho, Wo)
    return cols.reshape(k ** 3 * c, do * b * ho * wo), (do, ho, wo)


def _weight_cm(w):
    """(C_out, C_in, kd, kh, kw) -> (C_out, kd*kh*kw*C_in) bf16 (matches _im2col_dm)."""
    c_out = w.shape[0]
    return jnp.transpose(w, (0, 2, 3, 4, 1)).reshape(c_out, -1).astype(jnp.bfloat16)


def _bn_scale_shift(s, ssq, n, gamma, beta, eps=1e-5):
    """Training-mode BatchNorm scale/shift from per-core partial sum / sum-of-squares."""
    s = jnp.sum(s, axis=0)                             # (C, 1): combine per-core partials
    ssq = jnp.sum(ssq, axis=0)
    mean = s / n
    var = jnp.maximum(ssq / n - mean * mean, 0.0)      # biased variance
    scale = gamma.reshape(-1, 1) / jnp.sqrt(var + eps)
    shift = beta.reshape(-1, 1) - mean * scale
    return scale.astype(jnp.float32), shift.astype(jnp.float32)


def _affine_act(y, scale, shift, *, swish):
    """BN affine (+ optional swish) on a (C, M) activation.  Deliberately plain jnp:
    XLA fuses it into the pad/stack/reshape of the next stage's im2col, so it costs
    no extra pallas_call and no extra HBM round trip."""
    z = y.astype(jnp.float32) * scale + shift
    if swish:
        z = z * jax.nn.sigmoid(z)
    return z.astype(jnp.bfloat16)


# ----------------------------------------------------------------------------
# kernel 1/2/3: conv-as-GEMM (+ fused depth avg-pool, + BN-stats accumulator)
# ----------------------------------------------------------------------------
def _conv_stage_kernel(w_ref, cols_ref, y_ref, sum_ref, ssq_ref, *, pool_f, pool_lanes):
    # (C_out, K) @ (K, tn): bf16 operands, f32 accumulation, lane-dense output.
    acc = jnp.dot(w_ref[...], cols_ref[...], preferred_element_type=jnp.float32)

    if pool_f > 1:
        # AdaptiveAvgPool3d over depth fused into the epilogue.  With D-major M
        # ordering the pool partners are whole pool_lanes-wide (>=128-lane) chunks,
        # so this is a few full-vreg VPU adds + one lane-dense store.
        group = pool_f * pool_lanes
        inv = 1.0 / pool_f
        parts = []
        for g in range(acc.shape[-1] // group):
            base = g * group
            ps = acc[:, base:base + pool_lanes]
            for j in range(1, pool_f):
                ps = ps + acc[:, base + j * pool_lanes:base + (j + 1) * pool_lanes]
            parts.append(ps * inv)
        acc = parts[0] if len(parts) == 1 else jnp.concatenate(parts, axis=-1)

    y_ref[...] = acc.astype(y_ref.dtype)               # bf16 writeback (half the bytes)

    # Per-channel BatchNorm statistics (on the pooled activation), accumulated across
    # lane tiles; one accumulator slab per slice of the leading "parallel" axis so
    # v7x megacore can split the grid.  Zero-padded lane tiles contribute exactly 0
    # (no conv bias), so padding never pollutes the stats.
    @pl.when(pl.program_id(1) == 0)
    def _init():
        sum_ref[...] = jnp.zeros_like(sum_ref)
        ssq_ref[...] = jnp.zeros_like(ssq_ref)

    sum_ref[...] += jnp.sum(acc, axis=-1, keepdims=True)[None]
    ssq_ref[...] += jnp.sum(acc * acc, axis=-1, keepdims=True)[None]


def conv_stage_pallas(w_cm, cols, *, pool_f, pool_lanes):
    """Fused conv stage: GEMM [+ depth avg-pool] -> pooled activation (C_out, M/pool_f)
    in bf16, plus per-channel sum / sum-of-squares (per core) for the following BN."""
    c_out, k = w_cm.shape
    k2, m = cols.shape
    assert k == k2

    # unit keeps both the pooled-output width a multiple of 128 and lane tiles made
    # of whole pool groups; pad M (zero columns) so tiling never degenerates.
    unit = 128 if pool_f == 1 else pool_f * _lcm(128, pool_lanes)
    m_pad = ((m + unit - 1) // unit) * unit
    if m_pad != m:
        cols = jnp.pad(cols, ((0, 0), (0, m_pad - m)))

    vmem_limit = _vmem_limit_bytes()
    tn = _pick_lane_tile(m_pad, unit, bytes_per_lane=2 * k + 2 * c_out,
                         max_bytes=vmem_limit // 8)
    tiles = m_pad // tn
    nc = 2 if (tiles % 2 == 0 and tiles >= 2) else 1   # leading parallel axis for v7x
    tiles_per_core = tiles // nc
    tn_out = tn // pool_f
    m_out_pad = m_pad // pool_f
    m_out = m // pool_f

    y, s, q = pl.pallas_call(
        partial(_conv_stage_kernel, pool_f=pool_f, pool_lanes=pool_lanes),
        out_shape=(jax.ShapeDtypeStruct((c_out, m_out_pad), jnp.bfloat16),
                   jax.ShapeDtypeStruct((nc, c_out, 1), jnp.float32),
                   jax.ShapeDtypeStruct((nc, c_out, 1), jnp.float32)),
        grid=(nc, tiles_per_core),
        in_specs=[
            pl.BlockSpec((c_out, k), lambda c, i: (0, 0)),
            pl.BlockSpec((k, tn), lambda c, i: (0, c * tiles_per_core + i)),
        ],
        out_specs=(
            pl.BlockSpec((c_out, tn_out), lambda c, i: (0, c * tiles_per_core + i)),
            pl.BlockSpec((1, c_out, 1), lambda c, i: (c, 0, 0)),
            pl.BlockSpec((1, c_out, 1), lambda c, i: (c, 0, 0)),
        ),
        compiler_params=pltpu.CompilerParams(
            dimension_semantics=("parallel", "arbitrary"),
            vmem_limit_bytes=vmem_limit),
    )(w_cm, cols)

    if m_out_pad != m_out:
        y = y[:, :m_out]
    return y, s, q, m_out


# ----------------------------------------------------------------------------
# kernel 4: bn_l1 affine + swish + SE2D + adaptive_avg_pool3d(.,(1,H,W)) + bn2
# ----------------------------------------------------------------------------
def _se_pool_bn2_kernel(z_ref, sc_ref, sh_ref, w1t_ref, b1_ref, w2t_ref, b2_ref,
                        g_ref, bt_ref, o_ref, *, batch, depth, se_c, hw, eps):
    # Fused prologue: layer-1 BN affine + swish on the (bf16) conv output.
    z = z_ref[...].astype(jnp.float32) * sc_ref[...] + sh_ref[...]
    z = z * jax.nn.sigmoid(z)                          # (C, D*B*hw), D-major lanes

    inv_hw = 1.0 / hw
    inv_d = 1.0 / depth
    out_parts = []
    for b in range(batch):
        # squeeze: spatial mean per depth channel -> D columns of shape (C, 1)
        pooled = [jnp.sum(z[:, (d * batch + b) * hw:(d * batch + b + 1) * hw],
                          axis=-1, keepdims=True) * inv_hw
                  for d in range(depth)]
        # excitation MLP (1x1 convs) vectorized over the C rows via broadcast
        # rank-1 updates (no scalar-SMEM broadcasts):
        #   h = swish(P @ W1^T + b1), gate = sigmoid(h @ W2^T + b2)
        h = b1_ref[...]                                # (1, se_c) -> broadcasts to (C, se_c)
        for d in range(depth):
            h = h + pooled[d] * w1t_ref[d:d + 1, :]
        h = h * jax.nn.sigmoid(h)                      # (C, se_c)
        gate = b2_ref[...]                             # (1, D)
        for s in range(se_c):
            gate = gate + h[:, s:s + 1] * w2t_ref[s:s + 1, :]
        gate = jax.nn.sigmoid(gate)                    # (C, D)
        # gate multiply + adaptive_avg_pool3d(., (1, H, W)) = mean over depth
        acc = None
        for d in range(depth):
            sl = z[:, (d * batch + b) * hw:(d * batch + b + 1) * hw] * gate[:, d:d + 1]
            acc = sl if acc is None else acc + sl
        out_parts.append(acc * inv_d)
    y = out_parts[0] if batch == 1 else jnp.concatenate(out_parts, axis=-1)   # (C, B*hw)

    # bn2: training-mode batch statistics + affine, all within the same block.
    n = y.shape[-1]
    mean = jnp.sum(y, axis=-1, keepdims=True) * (1.0 / n)
    var = jnp.maximum(jnp.sum(y * y, axis=-1, keepdims=True) * (1.0 / n) - mean * mean, 0.0)
    scale = g_ref[...] * jax.lax.rsqrt(var + eps)
    shift = bt_ref[...] - mean * scale
    o_ref[...] = y * scale + shift


def se_pool_bn2_pallas(z, scale1, shift1, w1, b1, w2, b2, gamma, beta,
                       *, B, D, se_c, HW, eps=1e-5):
    C, M = z.shape
    assert M == B * D * HW

    def full2(shape):
        return pl.BlockSpec(shape, lambda i: (0, 0))

    return pl.pallas_call(
        partial(_se_pool_bn2_kernel, batch=B, depth=D, se_c=se_c, hw=HW, eps=eps),
        out_shape=jax.ShapeDtypeStruct((C, B * HW), jnp.float32),
        grid=(1,),
        in_specs=[
            full2((C, M)),
            full2((C, 1)), full2((C, 1)),
            full2((D, se_c)), full2((1, se_c)),
            full2((se_c, D)), full2((1, D)),
            full2((C, 1)), full2((C, 1)),
        ],
        out_specs=full2((C, B * HW)),
        compiler_params=pltpu.CompilerParams(vmem_limit_bytes=_vmem_limit_bytes()),
    )(z,
      scale1.astype(jnp.float32), shift1.astype(jnp.float32),
      w1.T.astype(jnp.float32), b1.reshape(1, se_c).astype(jnp.float32),
      w2.T.astype(jnp.float32), b2.reshape(1, D).astype(jnp.float32),
      gamma.reshape(C, 1).astype(jnp.float32), beta.reshape(C, 1).astype(jnp.float32))


# ----------------------------------------------------------------------------
# module config (mirrors DualVectorFoil.__init__ bookkeeping) and params
# ----------------------------------------------------------------------------
def build_config(cube_size, depth_dim, in_channels=1):
    cube = list(cube_size)
    feature_order = list(range(5))
    dd = depth_dim + 2
    if dd != 2:
        feature_order[2] = dd
        feature_order[dd] = 2
    d = dd - 2
    if d != 0:
        cube[0], cube[d] = cube[d], cube[0]

    c_conv1_in = in_channels
    c_conv1_out = in_channels * 1
    # _make_layers(kernel_list=(5, 3), pooling=True)
    c0_in, c0_out = c_conv1_out, c_conv1_out * (5 - 1)
    cube = [math.ceil(cube[i] / 2) for i in range(3)]      # stride-2 conv
    cube[0] = max(cube[0] // 2, 1)
    pool0_target = tuple(cube)
    c1_in, c1_out = c0_out, c0_out * (3 - 1)
    cube[0] = max(cube[0] // 2, 1)
    pool1_target = tuple(cube)
    se_in = cube[0]
    se_ch = max(int(cube[0] * 0.25), 2)
    return dict(
        feature_order=tuple(feature_order),
        c_conv1_in=c_conv1_in, c_conv1_out=c_conv1_out,
        c0_in=c0_in, c0_out=c0_out, c1_in=c1_in, c1_out=c1_out,
        pool0_target=pool0_target, pool1_target=pool1_target,
        se_in=se_in, se_ch=se_ch, final_cube=tuple(cube),
    )


def init_params(key, cfg):
    ks = jax.random.split(key, 9)

    def w(k, shape, scale=0.1):
        return scale * jax.random.normal(k, shape, jnp.float32)

    p = {}
    p["conv1_w"] = w(ks[0], (cfg["c_conv1_out"], cfg["c_conv1_in"], 3, 3, 3))
    p["bn1_g"] = jnp.ones((cfg["c_conv1_out"],), jnp.float32)
    p["bn1_b"] = jnp.zeros((cfg["c_conv1_out"],), jnp.float32)
    p["l0_w"] = w(ks[1], (cfg["c0_out"], cfg["c0_in"], 5, 5, 5))
    # Conv biases exist in the torch module but are exactly cancelled by the
    # following training-mode BatchNorm, so the kernels never consume them.
    p["l0_b"] = w(ks[2], (cfg["c0_out"],), 0.01)
    p["bn_l0_g"] = jnp.ones((cfg["c0_out"],), jnp.float32)
    p["bn_l0_b"] = jnp.zeros((cfg["c0_out"],), jnp.float32)
    p["l1_w"] = w(ks[3], (cfg["c1_out"], cfg["c1_in"], 3, 3, 3))
    p["l1_b"] = w(ks[4], (cfg["c1_out"],), 0.01)
    p["bn_l1_g"] = jnp.ones((cfg["c1_out"],), jnp.float32)
    p["bn_l1_b"] = jnp.zeros((cfg["c1_out"],), jnp.float32)
    p["se1_w"] = w(ks[5], (cfg["se_ch"], cfg["se_in"], 1, 1))
    p["se1_b"] = w(ks[6], (cfg["se_ch"],), 0.01)
    p["se2_w"] = w(ks[7], (cfg["se_in"], cfg["se_ch"], 1, 1))
    p["se2_b"] = w(ks[8], (cfg["se_in"],), 0.01)
    p["bn2_g"] = jnp.ones((cfg["c1_out"],), jnp.float32)
    p["bn2_b"] = jnp.zeros((cfg["c1_out"],), jnp.float32)
    return p


# ----------------------------------------------------------------------------
# forward pass
# ----------------------------------------------------------------------------
def dual_vector_foil_forward(x, p, cfg):
    x = jnp.transpose(x, cfg["feature_order"])                 # x.permute(feature_order)
    B = x.shape[0]
    # channel-major, depth-major internal layout: (C, D, B, H, W), bf16 GEMM operands
    act = jnp.transpose(x, (1, 2, 0, 3, 4)).astype(jnp.bfloat16)

    # ---- conv1 (k3,s1,p1, no bias) -> bn1 -> swish --------------------------------
    C1 = cfg["c_conv1_out"]
    cols, sp = _im2col_dm(act, 3, 1, 1)
    y, s, q, n = conv_stage_pallas(_weight_cm(p["conv1_w"]), cols, pool_f=1, pool_lanes=1)
    scale, shift = _bn_scale_shift(s, q, n, p["bn1_g"], p["bn1_b"])
    act = _affine_act(y, scale, shift, swish=True)             # fused into next im2col
    act = act.reshape((C1, sp[0], B, sp[1], sp[2]))

    # ---- layers[0]: conv k5 s2 p2 -> AdaptiveAvgPool3d(depth) -> bn ---------------
    C0 = cfg["c0_out"]
    cols, sp = _im2col_dm(act, 5, 2, 2)
    Dt, Ht, Wt = cfg["pool0_target"]
    # TODO(synk): general AdaptiveAvgPool3d with non-divisible bins / changed H,W is
    # not implemented; this module's config only shrinks depth by an integer factor.
    assert Ht == sp[1] and Wt == sp[2] and sp[0] % Dt == 0
    y, s, q, n = conv_stage_pallas(_weight_cm(p["l0_w"]), cols,
                                   pool_f=sp[0] // Dt, pool_lanes=B * Ht * Wt)
    scale, shift = _bn_scale_shift(s, q, n, p["bn_l0_g"], p["bn_l0_b"])
    act = _affine_act(y, scale, shift, swish=False)            # fused into next im2col
    act = act.reshape((C0, Dt, B, Ht, Wt))

    # ---- layers[1]: conv k3 s1 p1 -> AdaptiveAvgPool3d(depth) ---------------------
    Cf = cfg["c1_out"]
    cols, sp = _im2col_dm(act, 3, 1, 1)
    Dt, Ht, Wt = cfg["pool1_target"]
    assert Ht == sp[1] and Wt == sp[2] and sp[0] % Dt == 0
    y, s, q, n = conv_stage_pallas(_weight_cm(p["l1_w"]), cols,
                                   pool_f=sp[0] // Dt, pool_lanes=B * Ht * Wt)
    scale1, shift1 = _bn_scale_shift(s, q, n, p["bn_l1_g"], p["bn_l1_b"])

    # ---- bn_l1 affine + swish + SE2D + adaptive_avg_pool3d(.,(1,H,W)) + bn2 -------
    se_c = cfg["se_ch"]
    out_cm = se_pool_bn2_pallas(
        y, scale1, shift1,
        p["se1_w"].reshape(se_c, Dt), p["se1_b"],
        p["se2_w"].reshape(Dt, se_c), p["se2_b"],
        p["bn2_g"], p["bn2_b"],
        B=B, D=Dt, se_c=se_c, HW=Ht * Wt)                      # (Cf, B*H*W)

    return jnp.transpose(out_cm.reshape(Cf, B, Ht, Wt), (1, 0, 2, 3))   # (B, C, H, W)


# ----------------------------------------------------------------------------
if __name__ == "__main__":
    cube_size = (16, 16, 16)
    depth_dim = 0
    in_channels = 1
    B = 2

    cfg = build_config(cube_size, depth_dim, in_channels)
    key = jax.random.PRNGKey(0)
    params = init_params(key, cfg)
    x = jax.random.normal(jax.random.fold_in(key, 123),
                          (B, in_channels) + tuple(cube_size), jnp.float32)

    fwd = jax.jit(lambda x_, p_: dual_vector_foil_forward(x_, p_, cfg))
    out = jax.block_until_ready(fwd(x, params))

    expected = (B, cfg["c1_out"], cfg["final_cube"][1], cfg["final_cube"][2])
    assert out.shape == expected, (out.shape, expected)
    assert bool(jnp.all(jnp.isfinite(out)))
    print("KERNEL_OK")
</pallas_src>

<mosaic_0001>
module attributes {stable_mosaic.version = 11 : i64} {
  func.func @_conv_stage_kernel(%arg0: i32, %arg1: i32, %arg2: memref<1x27xbf16, #tpu.memory_space<vmem>>, %arg3: memref<27x8192xbf16, #tpu.memory_space<vmem>>, %arg4: memref<1x8192xbf16, #tpu.memory_space<vmem>>, %arg5: memref<1x1x1xf32, #tpu.memory_space<vmem>>, %arg6: memref<1x1x1xf32, #tpu.memory_space<vmem>>) attributes {dimension_semantics = [#tpu.dimension_semantics<parallel>, #tpu.dimension_semantics<arbitrary>], iteration_bounds = array<i64: 1, 1>, scalar_prefetch = 0 : i64, scratch_operands = 0 : i64, tpu.core_type = #tpu.core_type<tc>, window_params = [{pipeline_mode = #tpu.pipeline_mode<synchronous>, transform_indices = @transform_0, window_bounds = array<i64: 1, 27>}, {transform_indices = @transform_1, window_bounds = array<i64: 27, 8192>}, {transform_indices = @transform_2, window_bounds = array<i64: 1, 8192>}, {transform_indices = @transform_3, window_bounds = array<i64: 1, 1, 1>}, {transform_indices = @transform_4, window_bounds = array<i64: 1, 1, 1>}]} {
    %c0 = arith.constant 0 : index
    %c0_0 = arith.constant 0 : index
    %0 = vector.load %arg2[%c0, %c0_0] : memref<1x27xbf16, #tpu.memory_space<vmem>>, vector<1x27xbf16>
    %c0_1 = arith.constant 0 : index
    %c0_2 = arith.constant 0 : index
    %1 = vector.load %arg3[%c0_1, %c0_2] : memref<27x8192xbf16, #tpu.memory_space<vmem>>, vector<27x8192xbf16>
    %cst = arith.constant dense<0.000000e+00> : vector<1x8192xf32>
    %2 = tpu.matmul %0, %1, %cst {dimension_numbers = #tpu.dot_dimension_numbers<[1], [0], [0], [1], [0, 0, 1, 1], [], []>} : vector<1x27xbf16>, vector<27x8192xbf16>, vector<1x8192xf32> -> vector<1x8192xf32>
    %3 = arith.truncf %2 : vector<1x8192xf32> to vector<1x8192xbf16>
    %c0_3 = arith.constant 0 : index
    %c0_4 = arith.constant 0 : index
    %4 = vector.load %arg4[%c0_3, %c0_4] : memref<1x8192xbf16, #tpu.memory_space<vmem>>, vector<1x8192xbf16>
    tpu.vector_store %arg4[%c0_3, %c0_4], %3 {strides = array<i32>} : memref<1x8192xbf16, #tpu.memory_space<vmem>>, vector<1x8192xbf16>,
    %c0_i32 = arith.constant 0 : i32
    %5 = arith.cmpi eq, %arg1, %c0_i32 : i32
    %6 = arith.extui %5 : i1 to i32
    %c0_i32_5 = arith.constant 0 : i32
    %7 = arith.cmpi ne, %6, %c0_i32_5 : i32
    scf.if %7 {
      %cst_20 = arith.constant 0.000000e+00 : f32
      %21 = vector.broadcast %cst_20 : f32 to vector<1x1x1xf32>
      %c0_21 = arith.constant 0 : index
      %c0_22 = arith.constant 0 : index
      %c0_23 = arith.constant 0 : index
      %22 = vector.load %arg5[%c0_21, %c0_22, %c0_23] : memref<1x1x1xf32, #tpu.memory_space<vmem>>, vector<1x1x1xf32>
      tpu.vector_store %arg5[%c0_21, %c0_22, %c0_23], %21 {strides = array<i32>} : memref<1x1x1xf32, #tpu.memory_space<vmem>>, vector<1x1x1xf32>,
      %cst_24 = arith.constant 0.000000e+00 : f32
      %23 = vector.broadcast %cst_24 : f32 to vector<1x1x1xf32>
      %c0_25 = arith.constant 0 : index
      %c0_26 = arith.constant 0 : index
      %c0_27 = arith.constant 0 : index
      %24 = vector.load %arg6[%c0_25, %c0_26, %c0_27] : memref<1x1x1xf32, #tpu.memory_space<vmem>>, vector<1x1x1xf32>
      tpu.vector_store %arg6[%c0_25, %c0_26, %c0_27], %23 {strides = array<i32>} : memref<1x1x1xf32, #tpu.memory_space<vmem>>, vector<1x1x1xf32>,
    } else {
    }
    %c0_6 = arith.constant 0 : index
    %c0_7 = arith.constant 0 : index
    %c0_8 = arith.constant 0 : index
    %8 = vector.load %arg5[%c0_6, %c0_7, %c0_8] : memref<1x1x1xf32, #tpu.memory_space<vmem>>, vector<1x1x1xf32>
    %cst_9 = arith.constant dense<0.000000e+00> : vector<1xf32>
    %9 = vector.multi_reduction <add>, %2, %cst_9 [1] : vector<1x8192xf32> to vector<1xf32>
    %10 = vector.shape_cast %9 : vector<1xf32> to vector<1x1xf32>
    %11 = vector.shape_cast %10 : vector<1x1xf32> to vector<1x1x1xf32>
    %12 = arith.addf %8, %11 : vector<1x1x1xf32>
    %c0_10 = arith.constant 0 : index
    %c0_11 = arith.constant 0 : index
    %c0_12 = arith.constant 0 : index
    %13 = vector.load %arg5[%c0_10, %c0_11, %c0_12] : memref<1x1x1xf32, #tpu.memory_space<vmem>>, vector<1x1x1xf32>
    tpu.vector_store %arg5[%c0_10, %c0_11, %c0_12], %12 {strides = array<i32>} : memref<1x1x1xf32, #tpu.memory_space<vmem>>, vector<1x1x1xf32>,
    %c0_13 = arith.constant 0 : index
    %c0_14 = arith.constant 0 : index
    %c0_15 = arith.constant 0 : index
    %14 = vector.load %arg6[%c0_13, %c0_14, %c0_15] : memref<1x1x1xf32, #tpu.memory_space<vmem>>, vector<1x1x1xf32>
    %15 = arith.mulf %2, %2 : vector<1x8192xf32>
    %cst_16 = arith.constant dense<0.000000e+00> : vector<1xf32>
    %16 = vector.multi_reduction <add>, %15, %cst_16 [1] : vector<1x8192xf32> to vector<1xf32>
    %17 = vector.shape_cast %16 : vector<1xf32> to vector<1x1xf32>
    %18 = vector.shape_cast %17 : vector<1x1xf32> to vector<1x1x1xf32>
    %19 = arith.addf %14, %18 : vector<1x1x1xf32>
    %c0_17 = arith.constant 0 : index
    %c0_18 = arith.constant 0 : index
    %c0_19 = arith.constant 0 : index
    %20 = vector.load %arg6[%c0_17, %c0_18, %c0_19] : memref<1x1x1xf32, #tpu.memory_space<vmem>>, vector<1x1x1xf32>
    tpu.vector_store %arg6[%c0_17, %c0_18, %c0_19], %19 {strides = array<i32>} : memref<1x1x1xf32, #tpu.memory_space<vmem>>, vector<1x1x1xf32>,
    return
  }
  func.func @transform_0(%arg0: i32, %arg1: i32) -> (i32, i32) {
    %c0_i32 = arith.constant 0 : i32
    %c0_i32_0 = arith.constant 0 : i32
    %c0_i32_1 = arith.constant 0 : i32
    return %c0_i32, %c0_i32_0 : i32, i32
  }
  func.func @transform_1(%arg0: i32, %arg1: i32) -> (i32, i32) {
    %c1_i32 = arith.constant 1 : i32
    %0 = arith.muli %arg0, %c1_i32 : i32
    %1 = arith.addi %0, %arg1 : i32
    %c0_i32 = arith.constant 0 : i32
    %c0_i32_0 = arith.constant 0 : i32
    return %c0_i32, %1 : i32, i32
  }
  func.func @transform_2(%arg0: i32, %arg1: i32) -> (i32, i32) {
    %c1_i32 = arith.constant 1 : i32
    %0 = arith.muli %arg0, %c1_i32 : i32
    %1 = arith.addi %0, %arg1 : i32
    %c0_i32 = arith.constant 0 : i32
    %c0_i32_0 = arith.constant 0 : i32
    return %c0_i32, %1 : i32, i32
  }
  func.func @transform_3(%arg0: i32, %arg1: i32) -> (i32, i32, i32) {
    %c0_i32 = arith.constant 0 : i32
    %c0_i32_0 = arith.constant 0 : i32
    %c0_i32_1 = arith.constant 0 : i32
    return %arg0, %c0_i32, %c0_i32_0 : i32, i32, i32
  }
  func.func @transform_4(%arg0: i32, %arg1: i32) -> (i32, i32, i32) {
    %c0_i32 = arith.constant 0 : i32
    %c0_i32_0 = arith.constant 0 : i32
    %c0_i32_1 = arith.constant 0 : i32
    return %arg0, %c0_i32, %c0_i32_0 : i32, i32, i32
  }
}

module attributes {stable_mosaic.version = 11 : i64} {
  func.func @_conv_stage_kernel(%arg0: i32, %arg1: i32, %arg2: memref<4x125xbf16, #tpu.memory_space<vmem>>, %arg3: memref<125x1024xbf16, #tpu.memory_space<vmem>>, %arg4: memref<4x512xbf16, #tpu.memory_space<vmem>>, %arg5: memref<1x4x1xf32, #tpu.memory_space<vmem>>, %arg6: memref<1x4x1xf32, #tpu.memory_space<vmem>>) attributes {dimension_semantics = [#tpu.dimension_semantics<parallel>, #tpu.dimension_semantics<arbitrary>], iteration_bounds = array<i64: 1, 1>, scalar_prefetch = 0 : i64, scratch_operands = 0 : i64, tpu.core_type = #tpu.core_type<tc>, window_params = [{pipeline_mode = #tpu.pipeline_mode<synchronous>, transform_indices = @transform_0, window_bounds = array<i64: 4, 125>}, {transform_indices = @transform_1, window_bounds = array<i64: 125, 1024>}, {transform_indices = @transform_2, window_bounds = array<i64: 4, 512>}, {transform_indices = @transform_3, window_bounds = array<i64: 1, 4, 1>}, {transform_indices = @transform_4, window_bounds = array<i64: 1, 4, 1>}]} {
    %c0 = arith.constant 0 : index
    %c0_0 = arith.constant 0 : index
    %0 = vector.load %arg2[%c0, %c0_0] : memref<4x125xbf16, #tpu.memory_space<vmem>>, vector<4x125xbf16>
    %c0_1 = arith.constant 0 : index
    %c0_2 = arith.constant 0 : index
    %1 = vector.load %arg3[%c0_1, %c0_2] : memref<125x1024xbf16, #tpu.memory_space<vmem>>, vector<125x1024xbf16>
    %cst = arith.constant dense<0.000000e+00> : vector<4x1024xf32>
    %2 = tpu.matmul %0, %1, %cst {dimension_numbers = #tpu.dot_dimension_numbers<[1], [0], [0], [1], [0, 0, 1, 1], [], []>} : vector<4x125xbf16>, vector<125x1024xbf16>, vector<4x1024xf32> -> vector<4x1024xf32>
    %3 = vector.extract_strided_slice %2 {offsets = [0, 0], sizes = [4, 128], strides = [1, 1]} : vector<4x1024xf32> to vector<4x128xf32>
    %4 = vector.extract_strided_slice %2 {offsets = [0, 128], sizes = [4, 128], strides = [1, 1]} : vector<4x1024xf32> to vector<4x128xf32>
    %5 = arith.addf %3, %4 : vector<4x128xf32>
    %cst_3 = arith.constant 5.000000e-01 : f32
    %6 = vector.broadcast %cst_3 : f32 to vector<4x128xf32>
    %7 = arith.mulf %5, %6 : vector<4x128xf32>
    %8 = vector.extract_strided_slice %2 {offsets = [0, 256], sizes = [4, 128], strides = [1, 1]} : vector<4x1024xf32> to vector<4x128xf32>
    %9 = vector.extract_strided_slice %2 {offsets = [0, 384], sizes = [4, 128], strides = [1, 1]} : vector<4x1024xf32> to vector<4x128xf32>
    %10 = arith.addf %8, %9 : vector<4x128xf32>
    %cst_4 = arith.constant 5.000000e-01 : f32
    %11 = vector.broadcast %cst_4 : f32 to vector<4x128xf32>
    %12 = arith.mulf %10, %11 : vector<4x128xf32>
    %13 = vector.extract_strided_slice %2 {offsets = [0, 512], sizes = [4, 128], strides = [1, 1]} : vector<4x1024xf32> to vector<4x128xf32>
    %14 = vector.extract_strided_slice %2 {offsets = [0, 640], sizes = [4, 128], strides = [1, 1]} : vector<4x1024xf32> to vector<4x128xf32>
    %15 = arith.addf %13, %14 : vector<4x128xf32>
    %cst_5 = arith.constant 5.000000e-01 : f32
    %16 = vector.broadcast %cst_5 : f32 to vector<4x128xf32>
    %17 = arith.mulf %15, %16 : vector<4x128xf32>
    %18 = vector.extract_strided_slice %2 {offsets = [0, 768], sizes = [4, 128], strides = [1, 1]} : vector<4x1024xf32> to vector<4x128xf32>
    %19 = vector.extract_strided_slice %2 {offsets = [0, 896], sizes = [4, 128], strides = [1, 1]} : vector<4x1024xf32> to vector<4x128xf32>
    %20 = arith.addf %18, %19 : vector<4x128xf32>
    %cst_6 = arith.constant 5.000000e-01 : f32
    %21 = vector.broadcast %cst_6 : f32 to vector<4x128xf32>
    %22 = arith.mulf %20, %21 : vector<4x128xf32>
    %23 = tpu.concatenate %7, %12, %17, %22 in 1 : vector<4x128xf32>, vector<4x128xf32>, vector<4x128xf32>, vector<4x128xf32> -> vector<4x512xf32>
    %24 = arith.truncf %23 : vector<4x512xf32> to vector<4x512xbf16>
    %c0_7 = arith.constant 0 : index
    %c0_8 = arith.constant 0 : index
    %25 = vector.load %arg4[%c0_7, %c0_8] : memref<4x512xbf16, #tpu.memory_space<vmem>>, vector<4x512xbf16>
    tpu.vector_store %arg4[%c0_7, %c0_8], %24 {strides = array<i32>} : memref<4x512xbf16, #tpu.memory_space<vmem>>, vector<4x512xbf16>,
    %c0_i32 = arith.constant 0 : i32
    %26 = arith.cmpi eq, %arg1, %c0_i32 : i32
    %27 = arith.extui %26 : i1 to i32
    %c0_i32_9 = arith.constant 0 : i32
    %28 = arith.cmpi ne, %27, %c0_i32_9 : i32
    scf.if %28 {
      %cst_24 = arith.constant 0.000000e+00 : f32
      %42 = vector.broadcast %cst_24 : f32 to vector<1x4x1xf32>
      %c0_25 = arith.constant 0 : index
      %c0_26 = arith.constant 0 : index
      %c0_27 = arith.constant 0 : index
      %43 = vector.load %arg5[%c0_25, %c0_26, %c0_27] : memref<1x4x1xf32, #tpu.memory_space<vmem>>, vector<1x4x1xf32>
      tpu.vector_store %arg5[%c0_25, %c0_26, %c0_27], %42 {strides = array<i32>} : memref<1x4x1xf32, #tpu.memory_space<vmem>>, vector<1x4x1xf32>,
      %cst_28 = arith.constant 0.000000e+00 : f32
      %44 = vector.broadcast %cst_28 : f32 to vector<1x4x1xf32>
      %c0_29 = arith.constant 0 : index
      %c0_30 = arith.constant 0 : index
      %c0_31 = arith.constant 0 : index
      %45 = vector.load %arg6[%c0_29, %c0_30, %c0_31] : memref<1x4x1xf32, #tpu.memory_space<vmem>>, vector<1x4x1xf32>
      tpu.vector_store %arg6[%c0_29, %c0_30, %c0_31], %44 {strides = array<i32>} : memref<1x4x1xf32, #tpu.memory_space<vmem>>, vector<1x4x1xf32>,
    } else {
    }
    %c0_10 = arith.constant 0 : index
    %c0_11 = arith.constant 0 : index
    %c0_12 = arith.constant 0 : index
    %29 = vector.load %arg5[%c0_10, %c0_11, %c0_12] : memref<1x4x1xf32, #tpu.memory_space<vmem>>, vector<1x4x1xf32>
    %cst_13 = arith.constant dense<0.000000e+00> : vector<4xf32>
    %30 = vector.multi_reduction <add>, %23, %cst_13 [1] : vector<4x512xf32> to vector<4xf32>
    %31 = vector.shape_cast %30 : vector<4xf32> to vector<4x1xf32>
    %32 = vector.shape_cast %31 : vector<4x1xf32> to vector<1x4x1xf32>
    %33 = arith.addf %29, %32 : vector<1x4x1xf32>
    %c0_14 = arith.constant 0 : index
    %c0_15 = arith.constant 0 : index
    %c0_16 = arith.constant 0 : index
    %34 = vector.load %arg5[%c0_14, %c0_15, %c0_16] : memref<1x4x1xf32, #tpu.memory_space<vmem>>, vector<1x4x1xf32>
    tpu.vector_store %arg5[%c0_14, %c0_15, %c0_16], %33 {strides = array<i32>} : memref<1x4x1xf32, #tpu.memory_space<vmem>>, vector<1x4x1xf32>,
    %c0_17 = arith.constant 0 : index
    %c0_18 = arith.constant 0 : index
    %c0_19 = arith.constant 0 : index
    %35 = vector.load %arg6[%c0_17, %c0_18, %c0_19] : memref<1x4x1xf32, #tpu.memory_space<vmem>>, vector<1x4x1xf32>
    %36 = arith.mulf %23, %23 : vector<4x512xf32>
    %cst_20 = arith.constant dense<0.000000e+00> : vector<4xf32>
    %37 = vector.multi_reduction <add>, %36, %cst_20 [1] : vector<4x512xf32> to vector<4xf32>
    %38 = vector.shape_cast %37 : vector<4xf32> to vector<4x1xf32>
    %39 = vector.shape_cast %38 : vector<4x1xf32> to vector<1x4x1xf32>
    %40 = arith.addf %35, %39 : vector<1x4x1xf32>
    %c0_21 = arith.constant 0 : index
    %c0_22 = arith.constant 0 : index
    %c0_23 = arith.constant 0 : index
    %41 = vector.load %arg6[%c0_21, %c0_22, %c0_23] : memref<1x4x1xf32, #tpu.memory_space<vmem>>, vector<1x4x1xf32>
    tpu.vector_store %arg6[%c0_21, %c0_22, %c0_23], %40 {strides = array<i32>} : memref<1x4x1xf32, #tpu.memory_space<vmem>>, vector<1x4x1xf32>,
    return
  }
  func.func @transform_0(%arg0: i32, %arg1: i32) -> (i32, i32) {
    %c0_i32 = arith.constant 0 : i32
    %c0_i32_0 = arith.constant 0 : i32
    %c0_i32_1 = arith.constant 0 : i32
    return %c0_i32, %c0_i32_0 : i32, i32
  }
  func.func @transform_1(%arg0: i32, %arg1: i32) -> (i32, i32) {
    %c1_i32 = arith.constant 1 : i32
    %0 = arith.muli %arg0, %c1_i32 : i32
    %1 = arith.addi %0, %arg1 : i32
    %c0_i32 = arith.constant 0 : i32
    %c0_i32_0 = arith.constant 0 : i32
    return %c0_i32, %1 : i32, i32
  }
  func.func @transform_2(%arg0: i32, %arg1: i32) -> (i32, i32) {
    %c1_i32 = arith.constant 1 : i32
    %0 = arith.muli %arg0, %c1_i32 : i32
    %1 = arith.addi %0, %arg1 : i32
    %c0_i32 = arith.constant 0 : i32
    %c0_i32_0 = arith.constant 0 : i32
    return %c0_i32, %1 : i32, i32
  }
  func.func @transform_3(%arg0: i32, %arg1: i32) -> (i32, i32, i32) {
    %c0_i32 = arith.constant 0 : i32
    %c0_i32_0 = arith.constant 0 : i32
    %c0_i32_1 = arith.constant 0 : i32
    return %arg0, %c0_i32, %c0_i32_0 : i32, i32, i32
  }
  func.func @transform_4(%arg0: i32, %arg1: i32) -> (i32, i32, i32) {
    %c0_i32 = arith.constant 0 : i32
    %c0_i32_0 = arith.constant 0 : i32
    %c0_i32_1 = arith.constant 0 : i32
    return %arg0, %c0_i32, %c0_i32_0 : i32, i32, i32
  }
}

module attributes {stable_mosaic.version = 11 : i64} {
  func.func @_conv_stage_kernel(%arg0: i32, %arg1: i32, %arg2: memref<8x108xbf16, #tpu.memory_space<vmem>>, %arg3: memref<108x512xbf16, #tpu.memory_space<vmem>>, %arg4: memref<8x256xbf16, #tpu.memory_space<vmem>>, %arg5: memref<1x8x1xf32, #tpu.memory_space<vmem>>, %arg6: memref<1x8x1xf32, #tpu.memory_space<vmem>>) attributes {dimension_semantics = [#tpu.dimension_semantics<parallel>, #tpu.dimension_semantics<arbitrary>], iteration_bounds = array<i64: 1, 1>, scalar_prefetch = 0 : i64, scratch_operands = 0 : i64, tpu.core_type = #tpu.core_type<tc>, window_params = [{pipeline_mode = #tpu.pipeline_mode<synchronous>, transform_indices = @transform_0, window_bounds = array<i64: 8, 108>}, {transform_indices = @transform_1, window_bounds = array<i64: 108, 512>}, {transform_indices = @transform_2, window_bounds = array<i64: 8, 256>}, {transform_indices = @transform_3, window_bounds = array<i64: 1, 8, 1>}, {transform_indices = @transform_4, window_bounds = array<i64: 1, 8, 1>}]} {
    %c0 = arith.constant 0 : index
    %c0_0 = arith.constant 0 : index
    %0 = vector.load %arg2[%c0, %c0_0] : memref<8x108xbf16, #tpu.memory_space<vmem>>, vector<8x108xbf16>
    %c0_1 = arith.constant 0 : index
    %c0_2 = arith.constant 0 : index
    %1 = vector.load %arg3[%c0_1, %c0_2] : memref<108x512xbf16, #tpu.memory_space<vmem>>, vector<108x512xbf16>
    %cst = arith.constant dense<0.000000e+00> : vector<8x512xf32>
    %2 = tpu.matmul %0, %1, %cst {dimension_numbers = #tpu.dot_dimension_numbers<[1], [0], [0], [1], [0, 0, 1, 1], [], []>} : vector<8x108xbf16>, vector<108x512xbf16>, vector<8x512xf32> -> vector<8x512xf32>
    %3 = vector.extract_strided_slice %2 {offsets = [0, 0], sizes = [8, 128], strides = [1, 1]} : vector<8x512xf32> to vector<8x128xf32>
    %4 = vector.extract_strided_slice %2 {offsets = [0, 128], sizes = [8, 128], strides = [1, 1]} : vector<8x512xf32> to vector<8x128xf32>
    %5 = arith.addf %3, %4 : vector<8x128xf32>
    %cst_3 = arith.constant 5.000000e-01 : f32
    %6 = vector.broadcast %cst_3 : f32 to vector<8x128xf32>
    %7 = arith.mulf %5, %6 : vector<8x128xf32>
    %8 = vector.extract_strided_slice %2 {offsets = [0, 256], sizes = [8, 128], strides = [1, 1]} : vector<8x512xf32> to vector<8x128xf32>
    %9 = vector.extract_strided_slice %2 {offsets = [0, 384], sizes = [8, 128], strides = [1, 1]} : vector<8x512xf32> to vector<8x128xf32>
    %10 = arith.addf %8, %9 : vector<8x128xf32>
    %cst_4 = arith.constant 5.000000e-01 : f32
    %11 = vector.broadcast %cst_4 : f32 to vector<8x128xf32>
    %12 = arith.mulf %10, %11 : vector<8x128xf32>
    %13 = tpu.concatenate %7, %12 in 1 : vector<8x128xf32>, vector<8x128xf32> -> vector<8x256xf32>
    %14 = arith.truncf %13 : vector<8x256xf32> to vector<8x256xbf16>
    %c0_5 = arith.constant 0 : index
    %c0_6 = arith.constant 0 : index
    %15 = vector.load %arg4[%c0_5, %c0_6] : memref<8x256xbf16, #tpu.memory_space<vmem>>, vector<8x256xbf16>
    tpu.vector_store %arg4[%c0_5, %c0_6], %14 {strides = array<i32>} : memref<8x256xbf16, #tpu.memory_space<vmem>>, vector<8x256xbf16>,
    %c0_i32 = arith.constant 0 : i32
    %16 = arith.cmpi eq, %arg1, %c0_i32 : i32
    %17 = arith.extui %16 : i1 to i32
    %c0_i32_7 = arith.constant 0 : i32
    %18 = arith.cmpi ne, %17, %c0_i32_7 : i32
    scf.if %18 {
      %cst_22 = arith.constant 0.000000e+00 : f32
      %32 = vector.broadcast %cst_22 : f32 to vector<1x8x1xf32>
      %c0_23 = arith.constant 0 : index
      %c0_24 = arith.constant 0 : index
      %c0_25 = arith.constant 0 : index
      %33 = vector.load %arg5[%c0_23, %c0_24, %c0_25] : memref<1x8x1xf32, #tpu.memory_space<vmem>>, vector<1x8x1xf32>
      tpu.vector_store %arg5[%c0_23, %c0_24, %c0_25], %32 {strides = array<i32>} : memref<1x8x1xf32, #tpu.memory_space<vmem>>, vector<1x8x1xf32>,
      %cst_26 = arith.constant 0.000000e+00 : f32
      %34 = vector.broadcast %cst_26 : f32 to vector<1x8x1xf32>
      %c0_27 = arith.constant 0 : index
      %c0_28 = arith.constant 0 : index
      %c0_29 = arith.constant 0 : index
      %35 = vector.load %arg6[%c0_27, %c0_28, %c0_29] : memref<1x8x1xf32, #tpu.memory_space<vmem>>, vector<1x8x1xf32>
      tpu.vector_store %arg6[%c0_27, %c0_28, %c0_29], %34 {strides = array<i32>} : memref<1x8x1xf32, #tpu.memory_space<vmem>>, vector<1x8x1xf32>,
    } else {
    }
    %c0_8 = arith.constant 0 : index
    %c0_9 = arith.constant 0 : index
    %c0_10 = arith.constant 0 : index
    %19 = vector.load %arg5[%c0_8, %c0_9, %c0_10] : memref<1x8x1xf32, #tpu.memory_space<vmem>>, vector<1x8x1xf32>
    %cst_11 = arith.constant dense<0.000000e+00> : vector<8xf32>
    %20 = vector.multi_reduction <add>, %13, %cst_11 [1] : vector<8x256xf32> to vector<8xf32>
    %21 = vector.shape_cast %20 : vector<8xf32> to vector<8x1xf32>
    %22 = vector.shape_cast %21 : vector<8x1xf32> to vector<1x8x1xf32>
    %23 = arith.addf %19, %22 : vector<1x8x1xf32>
    %c0_12 = arith.constant 0 : index
    %c0_13 = arith.constant 0 : index
    %c0_14 = arith.constant 0 : index
    %24 = vector.load %arg5[%c0_12, %c0_13, %c0_14] : memref<1x8x1xf32, #tpu.memory_space<vmem>>, vector<1x8x1xf32>
    tpu.vector_store %arg5[%c0_12, %c0_13, %c0_14], %23 {strides = array<i32>} : memref<1x8x1xf32, #tpu.memory_space<vmem>>, vector<1x8x1xf32>,
    %c0_15 = arith.constant 0 : index
    %c0_16 = arith.constant 0 : index
    %c0_17 = arith.constant 0 : index
    %25 = vector.load %arg6[%c0_15, %c0_16, %c0_17] : memref<1x8x1xf32, #tpu.memory_space<vmem>>, vector<1x8x1xf32>
    %26 = arith.mulf %13, %13 : vector<8x256xf32>
    %cst_18 = arith.constant dense<0.000000e+00> : vector<8xf32>
    %27 = vector.multi_reduction <add>, %26, %cst_18 [1] : vector<8x256xf32> to vector<8xf32>
    %28 = vector.shape_cast %27 : vector<8xf32> to vector<8x1xf32>
    %29 = vector.shape_cast %28 : vector<8x1xf32> to vector<1x8x1xf32>
    %30 = arith.addf %25, %29 : vector<1x8x1xf32>
    %c0_19 = arith.constant 0 : index
    %c0_20 = arith.constant 0 : index
    %c0_21 = arith.constant 0 : index
    %31 = vector.load %arg6[%c0_19, %c0_20, %c0_21] : memref<1x8x1xf32, #tpu.memory_space<vmem>>, vector<1x8x1xf32>
    tpu.vector_store %arg6[%c0_19, %c0_20, %c0_21], %30 {strides = array<i32>} : memref<1x8x1xf32, #tpu.memory_space<vmem>>, vector<1x8x1xf32>,
    return
  }
  func.func @transform_0(%arg0: i32, %arg1: i32) -> (i32, i32) {
    %c0_i32 = arith.constant 0 : i32
    %c0_i32_0 = arith.constant 0 : i32
    %c0_i32_1 = arith.constant 0 : i32
    return %c0_i32, %c0_i32_0 : i32, i32
  }
  func.func @transform_1(%arg0: i32, %arg1: i32) -> (i32, i32) {
    %c1_i32 = arith.constant 1 : i32
    %0 = arith.muli %arg0, %c1_i32 : i32
    %1 = arith.addi %0, %arg1 : i32
    %c0_i32 = arith.constant 0 : i32
    %c0_i32_0 = arith.constant 0 : i32
    return %c0_i32, %1 : i32, i32
  }
  func.func @transform_2(%arg0: i32, %arg1: i32) -> (i32, i32) {
    %c1_i32 = arith.constant 1 : i32
    %0 = arith.muli %arg0, %c1_i32 : i32
    %1 = arith.addi %0, %arg1 : i32
    %c0_i32 = arith.constant 0 : i32
    %c0_i32_0 = arith.constant 0 : i32
    return %c0_i32, %1 : i32, i32
  }
  func.func @transform_3(%arg0: i32, %arg1: i32) -> (i32, i32, i32) {
    %c0_i32 = arith.constant 0 : i32
    %c0_i32_0 = arith.constant 0 : i32
    %c0_i32_1 = arith.constant 0 : i32
    return %arg0, %c0_i32, %c0_i32_0 : i32, i32, i32
  }
  func.func @transform_4(%arg0: i32, %arg1: i32) -> (i32, i32, i32) {
    %c0_i32 = arith.constant 0 : i32
    %c0_i32_0 = arith.constant 0 : i32
    %c0_i32_1 = arith.constant 0 : i32
    return %arg0, %c0_i32, %c0_i32_0 : i32, i32, i32
  }
}

module attributes {stable_mosaic.version = 11 : i64} {
  func.func @_se_pool_bn2_kernel(%arg0: i32, %arg1: memref<8x256xbf16, #tpu.memory_space<vmem>>, %arg2: memref<8x1xf32, #tpu.memory_space<vmem>>, %arg3: memref<8x1xf32, #tpu.memory_space<vmem>>, %arg4: memref<2x2xf32, #tpu.memory_space<vmem>>, %arg5: memref<1x2xf32, #tpu.memory_space<vmem>>, %arg6: memref<2x2xf32, #tpu.memory_space<vmem>>, %arg7: memref<1x2xf32, #tpu.memory_space<vmem>>, %arg8: memref<8x1xf32, #tpu.memory_space<vmem>>, %arg9: memref<8x1xf32, #tpu.memory_space<vmem>>, %arg10: memref<8x128xf32, #tpu.memory_space<vmem>>) attributes {dimension_semantics = [#tpu.dimension_semantics<arbitrary>], iteration_bounds = array<i64: 1>, scalar_prefetch = 0 : i64, scratch_operands = 0 : i64, tpu.core_type = #tpu.core_type<tc>, window_params = [{pipeline_mode = #tpu.pipeline_mode<synchronous>, transform_indices = @transform_0, window_bounds = array<i64: 8, 256>}, {pipeline_mode = #tpu.pipeline_mode<synchronous>, transform_indices = @transform_1, window_bounds = array<i64: 8, 1>}, {pipeline_mode = #tpu.pipeline_mode<synchronous>, transform_indices = @transform_2, window_bounds = array<i64: 8, 1>}, {pipeline_mode = #tpu.pipeline_mode<synchronous>, transform_indices = @transform_3, window_bounds = array<i64: 2, 2>}, {pipeline_mode = #tpu.pipeline_mode<synchronous>, transform_indices = @transform_4, window_bounds = array<i64: 1, 2>}, {pipeline_mode = #tpu.pipeline_mode<synchronous>, transform_indices = @transform_5, window_bounds = array<i64: 2, 2>}, {pipeline_mode = #tpu.pipeline_mode<synchronous>, transform_indices = @transform_6, window_bounds = array<i64: 1, 2>}, {pipeline_mode = #tpu.pipeline_mode<synchronous>, transform_indices = @transform_7, window_bounds = array<i64: 8, 1>}, {pipeline_mode = #tpu.pipeline_mode<synchronous>, transform_indices = @transform_8, window_bounds = array<i64: 8, 1>}, {pipeline_mode = #tpu.pipeline_mode<synchronous>, transform_indices = @transform_9, window_bounds = array<i64: 8, 128>}]} {
    %c0 = arith.constant 0 : index
    %c0_0 = arith.constant 0 : index
    %0 = vector.load %arg1[%c0, %c0_0] : memref<8x256xbf16, #tpu.memory_space<vmem>>, vector<8x256xbf16>
    %1 = arith.extf %0 : vector<8x256xbf16> to vector<8x256xf32>
    %c0_1 = arith.constant 0 : index
    %c0_2 = arith.constant 0 : index
    %2 = vector.load %arg2[%c0_1, %c0_2] : memref<8x1xf32, #tpu.memory_space<vmem>>, vector<8x1xf32>
    %3 = vector.broadcast %2 : vector<8x1xf32> to vector<8x256xf32>
    %4 = arith.mulf %1, %3 : vector<8x256xf32>
    %c0_3 = arith.constant 0 : index
    %c0_4 = arith.constant 0 : index
    %5 = vector.load %arg3[%c0_3, %c0_4] : memref<8x1xf32, #tpu.memory_space<vmem>>, vector<8x1xf32>
    %6 = vector.broadcast %5 : vector<8x1xf32> to vector<8x256xf32>
    %7 = arith.addf %4, %6 : vector<8x256xf32>
    %8 = arith.negf %7 : vector<8x256xf32>
    %9 = math.exp %8 : vector<8x256xf32>
    %cst = arith.constant 1.000000e+00 : f32
    %10 = vector.broadcast %cst : f32 to vector<8x256xf32>
    %11 = arith.addf %10, %9 : vector<8x256xf32>
    %12 = arith.divf %10, %11 : vector<8x256xf32>
    %13 = arith.mulf %7, %12 : vector<8x256xf32>
    %14 = vector.extract_strided_slice %13 {offsets = [0, 0], sizes = [8, 64], strides = [1, 1]} : vector<8x256xf32> to vector<8x64xf32>
    %cst_5 = arith.constant dense<0.000000e+00> : vector<8xf32>
    %15 = vector.multi_reduction <add>, %14, %cst_5 [1] : vector<8x64xf32> to vector<8xf32>
    %16 = vector.shape_cast %15 : vector<8xf32> to vector<8x1xf32>
    %cst_6 = arith.constant 1.562500e-02 : f32
    %17 = vector.broadcast %cst_6 : f32 to vector<8x1xf32>
    %18 = arith.mulf %16, %17 : vector<8x1xf32>
    %19 = vector.extract_strided_slice %13 {offsets = [0, 128], sizes = [8, 64], strides = [1, 1]} : vector<8x256xf32> to vector<8x64xf32>
    %cst_7 = arith.constant dense<0.000000e+00> : vector<8xf32>
    %20 = vector.multi_reduction <add>, %19, %cst_7 [1] : vector<8x64xf32> to vector<8xf32>
    %21 = vector.shape_cast %20 : vector<8xf32> to vector<8x1xf32>
    %cst_8 = arith.constant 1.562500e-02 : f32
    %22 = vector.broadcast %cst_8 : f32 to vector<8x1xf32>
    %23 = arith.mulf %21, %22 : vector<8x1xf32>
    %c0_9 = arith.constant 0 : index
    %c0_10 = arith.constant 0 : index
    %24 = vector.load %arg5[%c0_9, %c0_10] : memref<1x2xf32, #tpu.memory_space<vmem>>, vector<1x2xf32>
    %c0_11 = arith.constant 0 : index
    %c0_12 = arith.constant 0 : index
    %25 = vector.load %arg4[%c0_11, %c0_12] : memref<2x2xf32, #tpu.memory_space<vmem>>, vector<1x2xf32>
    %26 = vector.broadcast %18 : vector<8x1xf32> to vector<8x2xf32>
    %27 = vector.broadcast %25 : vector<1x2xf32> to vector<8x2xf32>
    %28 = arith.mulf %26, %27 : vector<8x2xf32>
    %29 = vector.broadcast %24 : vector<1x2xf32> to vector<8x2xf32>
    %30 = arith.addf %29, %28 : vector<8x2xf32>
    %c1 = arith.constant 1 : index
    %c0_13 = arith.constant 0 : index
    %31 = vector.load %arg4[%c1, %c0_13] : memref<2x2xf32, #tpu.memory_space<vmem>>, vector<1x2xf32>
    %32 = vector.broadcast %23 : vector<8x1xf32> to vector<8x2xf32>
    %33 = vector.broadcast %31 : vector<1x2xf32> to vector<8x2xf32>
    %34 = arith.mulf %32, %33 : vector<8x2xf32>
    %35 = arith.addf %30, %34 : vector<8x2xf32>
    %36 = arith.negf %35 : vector<8x2xf32>
    %37 = math.exp %36 : vector<8x2xf32>
    %cst_14 = arith.constant 1.000000e+00 : f32
    %38 = vector.broadcast %cst_14 : f32 to vector<8x2xf32>
    %39 = arith.addf %38, %37 : vector<8x2xf32>
    %40 = arith.divf %38, %39 : vector<8x2xf32>
    %41 = arith.mulf %35, %40 : vector<8x2xf32>
    %c0_15 = arith.constant 0 : index
    %c0_16 = arith.constant 0 : index
    %42 = vector.load %arg7[%c0_15, %c0_16] : memref<1x2xf32, #tpu.memory_space<vmem>>, vector<1x2xf32>
    %43 = vector.extract_strided_slice %41 {offsets = [0, 0], sizes = [8, 1], strides = [1, 1]} : vector<8x2xf32> to vector<8x1xf32>
    %c0_17 = arith.constant 0 : index
    %c0_18 = arith.constant 0 : index
    %44 = vector.load %arg6[%c0_17, %c0_18] : memref<2x2xf32, #tpu.memory_space<vmem>>, vector<1x2xf32>
    %45 = vector.broadcast %43 : vector<8x1xf32> to vector<8x2xf32>
    %46 = vector.broadcast %44 : vector<1x2xf32> to vector<8x2xf32>
    %47 = arith.mulf %45, %46 : vector<8x2xf32>
    %48 = vector.broadcast %42 : vector<1x2xf32> to vector<8x2xf32>
    %49 = arith.addf %48, %47 : vector<8x2xf32>
    %50 = vector.extract_strided_slice %41 {offsets = [0, 1], sizes = [8, 1], strides = [1, 1]} : vector<8x2xf32> to vector<8x1xf32>
    %c1_19 = arith.constant 1 : index
    %c0_20 = arith.constant 0 : index
    %51 = vector.load %arg6[%c1_19, %c0_20] : memref<2x2xf32, #tpu.memory_space<vmem>>, vector<1x2xf32>
    %52 = vector.broadcast %50 : vector<8x1xf32> to vector<8x2xf32>
    %53 = vector.broadcast %51 : vector<1x2xf32> to vector<8x2xf32>
    %54 = arith.mulf %52, %53 : vector<8x2xf32>
    %55 = arith.addf %49, %54 : vector<8x2xf32>
    %56 = arith.negf %55 : vector<8x2xf32>
    %57 = math.exp %56 : vector<8x2xf32>
    %cst_21 = arith.constant 1.000000e+00 : f32
    %58 = vector.broadcast %cst_21 : f32 to vector<8x2xf32>
    %59 = arith.addf %58, %57 : vector<8x2xf32>
    %60 = arith.divf %58, %59 : vector<8x2xf32>
    %61 = vector.extract_strided_slice %13 {offsets = [0, 0], sizes = [8, 64], strides = [1, 1]} : vector<8x256xf32> to vector<8x64xf32>
    %62 = vector.extract_strided_slice %60 {offsets = [0, 0], sizes = [8, 1], strides = [1, 1]} : vector<8x2xf32> to vector<8x1xf32>
    %63 = vector.broadcast %62 : vector<8x1xf32> to vector<8x64xf32>
    %64 = arith.mulf %61, %63 : vector<8x64xf32>
    %65 = vector.extract_strided_slice %13 {offsets = [0, 128], sizes = [8, 64], strides = [1, 1]} : vector<8x256xf32> to vector<8x64xf32>
    %66 = vector.extract_strided_slice %60 {offsets = [0, 1], sizes = [8, 1], strides = [1, 1]} : vector<8x2xf32> to vector<8x1xf32>
    %67 = vector.broadcast %66 : vector<8x1xf32> to vector<8x64xf32>
    %68 = arith.mulf %65, %67 : vector<8x64xf32>
    %69 = arith.addf %64, %68 : vector<8x64xf32>
    %cst_22 = arith.constant 5.000000e-01 : f32
    %70 = vector.broadcast %cst_22 : f32 to vector<8x64xf32>
    %71 = arith.mulf %69, %70 : vector<8x64xf32>
    %72 = vector.extract_strided_slice %13 {offsets = [0, 64], sizes = [8, 64], strides = [1, 1]} : vector<8x256xf32> to vector<8x64xf32>
    %cst_23 = arith.constant dense<0.000000e+00> : vector<8xf32>
    %73 = vector.multi_reduction <add>, %72, %cst_23 [1] : vector<8x64xf32> to vector<8xf32>
    %74 = vector.shape_cast %73 : vector<8xf32> to vector<8x1xf32>
    %cst_24 = arith.constant 1.562500e-02 : f32
    %75 = vector.broadcast %cst_24 : f32 to vector<8x1xf32>
    %76 = arith.mulf %74, %75 : vector<8x1xf32>
    %77 = vector.extract_strided_slice %13 {offsets = [0, 192], sizes = [8, 64], strides = [1, 1]} : vector<8x256xf32> to vector<8x64xf32>
    %cst_25 = arith.constant dense<0.000000e+00> : vector<8xf32>
    %78 = vector.multi_reduction <add>, %77, %cst_25 [1] : vector<8x64xf32> to vector<8xf32>
    %79 = vector.shape_cast %78 : vector<8xf32> to vector<8x1xf32>
    %cst_26 = arith.constant 1.562500e-02 : f32
    %80 = vector.broadcast %cst_26 : f32 to vector<8x1xf32>
    %81 = arith.mulf %79, %80 : vector<8x1xf32>
    %c0_27 = arith.constant 0 : index
    %c0_28 = arith.constant 0 : index
    %82 = vector.load %arg5[%c0_27, %c0_28] : memref<1x2xf32, #tpu.memory_space<vmem>>, vector<1x2xf32>
    %c0_29 = arith.constant 0 : index
    %c0_30 = arith.constant 0 : index
    %83 = vector.load %arg4[%c0_29, %c0_30] : memref<2x2xf32, #tpu.memory_space<vmem>>, vector<1x2xf32>
    %84 = vector.broadcast %76 : vector<8x1xf32> to vector<8x2xf32>
    %85 = vector.broadcast %83 : vector<1x2xf32> to vector<8x2xf32>
    %86 = arith.mulf %84, %85 : vector<8x2xf32>
    %87 = vector.broadcast %82 : vector<1x2xf32> to vector<8x2xf32>
    %88 = arith.addf %87, %86 : vector<8x2xf32>
    %c1_31 = arith.constant 1 : index
    %c0_32 = arith.constant 0 : index
    %89 = vector.load %arg4[%c1_31, %c0_32] : memref<2x2xf32, #tpu.memory_space<vmem>>, vector<1x2xf32>
    %90 = vector.broadcast %81 : vector<8x1xf32> to vector<8x2xf32>
    %91 = vector.broadcast %89 : vector<1x2xf32> to vector<8x2xf32>
    %92 = arith.mulf %90, %91 : vector<8x2xf32>
    %93 = arith.addf %88, %92 : vector<8x2xf32>
    %94 = arith.negf %93 : vector<8x2xf32>
    %95 = math.exp %94 : vector<8x2xf32>
    %cst_33 = arith.constant 1.000000e+00 : f32
    %96 = vector.broadcast %cst_33 : f32 to vector<8x2xf32>
    %97 = arith.addf %96, %95 : vector<8x2xf32>
    %98 = arith.divf %96, %97 : vector<8x2xf32>
    %99 = arith.mulf %93, %98 : vector<8x2xf32>
    %c0_34 = arith.constant 0 : index
    %c0_35 = arith.constant 0 : index
    %100 = vector.load %arg7[%c0_34, %c0_35] : memref<1x2xf32, #tpu.memory_space<vmem>>, vector<1x2xf32>
    %101 = vector.extract_strided_slice %99 {offsets = [0, 0], sizes = [8, 1], strides = [1, 1]} : vector<8x2xf32> to vector<8x1xf32>
    %c0_36 = arith.constant 0 : index
    %c0_37 = arith.constant 0 : index
    %102 = vector.load %arg6[%c0_36, %c0_37] : memref<2x2xf32, #tpu.memory_space<vmem>>, vector<1x2xf32>
    %103 = vector.broadcast %101 : vector<8x1xf32> to vector<8x2xf32>
    %104 = vector.broadcast %102 : vector<1x2xf32> to vector<8x2xf32>
    %105 = arith.mulf %103, %104 : vector<8x2xf32>
    %106 = vector.broadcast %100 : vector<1x2xf32> to vector<8x2xf32>
    %107 = arith.addf %106, %105 : vector<8x2xf32>
    %108 = vector.extract_strided_slice %99 {offsets = [0, 1], sizes = [8, 1], strides = [1, 1]} : vector<8x2xf32> to vector<8x1xf32>
    %c1_38 = arith.constant 1 : index
    %c0_39 = arith.constant 0 : index
    %109 = vector.load %arg6[%c1_38, %c0_39] : memref<2x2xf32, #tpu.memory_space<vmem>>, vector<1x2xf32>
    %110 = vector.broadcast %108 : vector<8x1xf32> to vector<8x2xf32>
    %111 = vector.broadcast %109 : vector<1x2xf32> to vector<8x2xf32>
    %112 = arith.mulf %110, %111 : vector<8x2xf32>
    %113 = arith.addf %107, %112 : vector<8x2xf32>
    %114 = arith.negf %113 : vector<8x2xf32>
    %115 = math.exp %114 : vector<8x2xf32>
    %cst_40 = arith.constant 1.000000e+00 : f32
    %116 = vector.broadcast %cst_40 : f32 to vector<8x2xf32>
    %117 = arith.addf %116, %115 : vector<8x2xf32>
    %118 = arith.divf %116, %117 : vector<8x2xf32>
    %119 = vector.extract_strided_slice %13 {offsets = [0, 64], sizes = [8, 64], strides = [1, 1]} : vector<8x256xf32> to vector<8x64xf32>
    %120 = vector.extract_strided_slice %118 {offsets = [0, 0], sizes = [8, 1], strides = [1, 1]} : vector<8x2xf32> to vector<8x1xf32>
    %121 = vector.broadcast %120 : vector<8x1xf32> to vector<8x64xf32>
    %122 = arith.mulf %119, %121 : vector<8x64xf32>
    %123 = vector.extract_strided_slice %13 {offsets = [0, 192], sizes = [8, 64], strides = [1, 1]} : vector<8x256xf32> to vector<8x64xf32>
    %124 = vector.extract_strided_slice %118 {offsets = [0, 1], sizes = [8, 1], strides = [1, 1]} : vector<8x2xf32> to vector<8x1xf32>
    %125 = vector.broadcast %124 : vector<8x1xf32> to vector<8x64xf32>
    %126 = arith.mulf %123, %125 : vector<8x64xf32>
    %127 = arith.addf %122, %126 : vector<8x64xf32>
    %cst_41 = arith.constant 5.000000e-01 : f32
    %128 = vector.broadcast %cst_41 : f32 to vector<8x64xf32>
    %129 = arith.mulf %127, %128 : vector<8x64xf32>
    %130 = tpu.concatenate %71, %129 in 1 : vector<8x64xf32>, vector<8x64xf32> -> vector<8x128xf32>
    %cst_42 = arith.constant dense<0.000000e+00> : vector<8xf32>
    %131 = vector.multi_reduction <add>, %130, %cst_42 [1] : vector<8x128xf32> to vector<8xf32>
    %132 = vector.shape_cast %131 : vector<8xf32> to vector<8x1xf32>
    %cst_43 = arith.constant 7.812500e-03 : f32
    %133 = vector.broadcast %cst_43 : f32 to vector<8x1xf32>
    %134 = arith.mulf %132, %133 : vector<8x1xf32>
    %135 = arith.mulf %130, %130 : vector<8x128xf32>
    %cst_44 = arith.constant dense<0.000000e+00> : vector<8xf32>
    %136 = vector.multi_reduction <add>, %135, %cst_44 [1] : vector<8x128xf32> to vector<8xf32>
    %137 = vector.shape_cast %136 : vector<8xf32> to vector<8x1xf32>
    %cst_45 = arith.constant 7.812500e-03 : f32
    %138 = vector.broadcast %cst_45 : f32 to vector<8x1xf32>
    %139 = arith.mulf %137, %138 : vector<8x1xf32>
    %140 = arith.mulf %134, %134 : vector<8x1xf32>
    %141 = arith.subf %139, %140 : vector<8x1xf32>
    %cst_46 = arith.constant 0.000000e+00 : f32
    %142 = vector.broadcast %cst_46 : f32 to vector<8x1xf32>
    %143 = arith.maximumf %141, %142 : vector<8x1xf32>
    %c0_47 = arith.constant 0 : index
    %c0_48 = arith.constant 0 : index
    %144 = vector.load %arg8[%c0_47, %c0_48] : memref<8x1xf32, #tpu.memory_space<vmem>>, vector<8x1xf32>
    %cst_49 = arith.constant 9.99999974E-6 : f32
    %145 = vector.broadcast %cst_49 : f32 to vector<8x1xf32>
    %146 = arith.addf %143, %145 : vector<8x1xf32>
    %147 = math.rsqrt %146 : vector<8x1xf32>
    %148 = arith.mulf %144, %147 : vector<8x1xf32>
    %c0_50 = arith.constant 0 : index
    %c0_51 = arith.constant 0 : index
    %149 = vector.load %arg9[%c0_50, %c0_51] : memref<8x1xf32, #tpu.memory_space<vmem>>, vector<8x1xf32>
    %150 = arith.mulf %134, %148 : vector<8x1xf32>
    %151 = arith.subf %149, %150 : vector<8x1xf32>
    %152 = vector.broadcast %148 : vector<8x1xf32> to vector<8x128xf32>
    %153 = arith.mulf %130, %152 : vector<8x128xf32>
    %154 = vector.broadcast %151 : vector<8x1xf32> to vector<8x128xf32>
    %155 = arith.addf %153, %154 : vector<8x128xf32>
    %c0_52 = arith.constant 0 : index
    %c0_53 = arith.constant 0 : index
    %156 = vector.load %arg10[%c0_52, %c0_53] : memref<8x128xf32, #tpu.memory_space<vmem>>, vector<8x128xf32>
    tpu.vector_store %arg10[%c0_52, %c0_53], %155 {strides = array<i32>} : memref<8x128xf32, #tpu.memory_space<vmem>>, vector<8x128xf32>,
    return
  }
  func.func @transform_0(%arg0: i32) -> (i32, i32) {
    %c0_i32 = arith.constant 0 : i32
    %c0_i32_0 = arith.constant 0 : i32
    %c0_i32_1 = arith.constant 0 : i32
    return %c0_i32, %c0_i32_0 : i32, i32
  }
  func.func @transform_1(%arg0: i32) -> (i32, i32) {
    %c0_i32 = arith.constant 0 : i32
    %c0_i32_0 = arith.constant 0 : i32
    %c0_i32_1 = arith.constant 0 : i32
    return %c0_i32, %c0_i32_0 : i32, i32
  }
  func.func @transform_2(%arg0: i32) -> (i32, i32) {
    %c0_i32 = arith.constant 0 : i32
    %c0_i32_0 = arith.constant 0 : i32
    %c0_i32_1 = arith.constant 0 : i32
    return %c0_i32, %c0_i32_0 : i32, i32
  }
  func.func @transform_3(%arg0: i32) -> (i32, i32) {
    %c0_i32 = arith.constant 0 : i32
    %c0_i32_0 = arith.constant 0 : i32
    %c0_i32_1 = arith.constant 0 : i32
    return %c0_i32, %c0_i32_0 : i32, i32
  }
  func.func @transform_4(%arg0: i32) -> (i32, i32) {
    %c0_i32 = arith.constant 0 : i32
    %c0_i32_0 = arith.constant 0 : i32
    %c0_i32_1 = arith.constant 0 : i32
    return %c0_i32, %c0_i32_0 : i32, i32
  }
  func.func @transform_5(%arg0: i32) -> (i32, i32) {
    %c0_i32 = arith.constant 0 : i32
    %c0_i32_0 = arith.constant 0 : i32
    %c0_i32_1 = arith.constant 0 : i32
    return %c0_i32, %c0_i32_0 : i32, i32
  }
  func.func @transform_6(%arg0: i32) -> (i32, i32) {
    %c0_i32 = arith.constant 0 : i32
    %c0_i32_0 = arith.constant 0 : i32
    %c0_i32_1 = arith.constant 0 : i32
    return %c0_i32, %c0_i32_0 : i32, i32
  }
  func.func @transform_7(%arg0: i32) -> (i32, i32) {
    %c0_i32 = arith.constant 0 : i32
    %c0_i32_0 = arith.constant 0 : i32
    %c0_i32_1 = arith.constant 0 : i32
    return %c0_i32, %c0_i32_0 : i32, i32
  }
  func.func @transform_8(%arg0: i32) -> (i32, i32) {
    %c0_i32 = arith.constant 0 : i32
    %c0_i32_0 = arith.constant 0 : i32
    %c0_i32_1 = arith.constant 0 : i32
    return %c0_i32, %c0_i32_0 : i32, i32
  }
  func.func @transform_9(%arg0: i32) -> (i32, i32) {
    %c0_i32 = arith.constant 0 : i32
    %c0_i32_0 = arith.constant 0 : i32
    %c0_i32_1 = arith.constant 0 : i32
    return %c0_i32, %c0_i32_0 : i32, i32
  }
}

</mosaic_0001>

<llo_original>
// kernel: _lambda_.4
$region0: #{_lambda_.4}
  #allocation0 [shape = 'u32[]', space=smem, size = 0x4, offset = 0x4, fixed_abs, tag = 'smem constant byte address 0x4 - core index']
  #allocation1 [shape = 'u32[144,128]{1,0:T(1,128)}', space=vmem, size = 0x12000, scoped, tag = 'internal scratch']
  %s0 = inlined_call_operand.vmem [shape: bf16[1,27], index: 0, kind: input, shape index: {}]
  %s1 = inlined_call_operand.vmem [shape: bf16[27,8192], index: 1, kind: input, shape index: {}]
  %s2 = inlined_call_operand.vmem [shape: bf16[1,8192], index: 2, kind: output, shape index: {0}]
  %s3 = inlined_call_operand.hbm [shape: f32[1,1,1], index: 3, kind: output, shape index: {1}]
  %s4 = inlined_call_operand.hbm [shape: f32[1,1,1], index: 4, kind: output, shape index: {2}]
  %5 = xla_tuple %s2, %s3, %s4
  %s6 = sld [smem:[#allocation0]]
  $region38: #{_lambda_.4} parent=0
    _
  %s8 = ssub.s32 1, %s6
  %s9 = scalar_select 0, %s8, %s6
  $region1: #{_lambda_.4} parent=0
    #allocation2 [shape = 'u8[512]{0}', space=vmem, size = 0x400, scoped, tag = 'output window, operand 1, single buffered']
    #allocation3 [shape = 's32[1]{0}', space=sflag, size = 0x4, scoped, tag = 'scoped memory for _lambda_.4']
    #allocation4 [shape = 'u8[512]{0}', space=vmem, size = 0x400, scoped, tag = 'output window, operand 2, single buffered']
    #allocation5 [shape = 's32[1]{0}', space=sflag, size = 0x4, scoped, tag = 'scoped memory for _lambda_.4']
    %10 = vsyncpa [#allocation3], 0
    %11 = vsyncpa [#allocation5], 0
    // Predicated region
    $region2: #{_lambda_.4} parent=1 // pred_check
      _
    $region3: #{_lambda_.4} parent=1 // pred_check_branch
      %13 = sbr.rel (0) target = $region5
    $region4: #{_lambda_.4} parent=1 // pred_region
      _
    $region5: #{_lambda_.4} parent=1 // pred_fallthru
      _
    // Predicated region
    $region6: #{_lambda_.4} parent=1 // pred_check
      _
    $region7: #{_lambda_.4} parent=1 // pred_check_branch
      %15 = sbr.rel (0) target = $region9
    $region8: #{_lambda_.4} parent=1 // pred_region
      %s16 = sadd.s32 0, 0
      %s17 = smul.u32 64, %s16
      %p18 = scmp.lt.s32.totalorder %s17, 63
      %s19 = scalar_select %p18, %s17, 63
      %s20 = smul.addr %s19, 4
      %s21 = scalar_lea.vmem %s1, %s20
      %s22 = sadd.s32 0, 0
      %s23 = smul.u32 64, %s22
    $region9: #{_lambda_.4} parent=1 // pred_fallthru
      _
    %s24 = sadd.s32 0, 0
    %s25 = smul.u32 64, %s24
    %p26 = scmp.lt.s32.totalorder %s25, 63
    %s27 = scalar_select %p26, %s25, 63
    %s28 = smul.addr %s27, 4
    %s29 = scalar_lea.vmem %s1, %s28
    %s30 = sadd.s32 0, 0
    %s31 = smul.u32 64, %s30
    %p32 = scmp.lt.s32.totalorder %s31, 63
    %s33 = scalar_select %p32, %s31, 63
    %s34 = scalar_lea.vmem %s2, %s33
    %s35 = sadd.s32 0, 0
    %s36 = smul.u32 64, %s35
    %p37 = scmp.lt.s32.totalorder %s36, 63
    %s38 = scalar_select %p37, %s36, 63
    %s39 = smul.addr %s38, 4
    %s40 = scalar_lea.vmem %s1, %s39
    %s41 = sadd.s32 0, 0
    %s42 = smul.u32 64, %s41
    %s43 = sadd.s32 0, 0
    %s44 = smul.u32 64, %s43
    %p45 = scmp.lt.s32.totalorder %s44, 63
    %s46 = scalar_select %p45, %s44, 63
    %s47 = scalar_lea.vmem %s2, %s46
    %s48 = sadd.s32 0, 0
    %s49 = smul.u32 64, %s48
    %v51 = vld [vmem:[%s0] sm:$0x1]
    %v52 = vld [vmem:[%s40] sm:$0xff]
    %v53 = vld [vmem:[%s40 + $0x8] sm:$0xff]
    %v54 = vld [vmem:[%s40 + $0x10] sm:$0xff]
    %v55 = vld [vmem:[%s40 + $0x18] sm:$0xff]
    %v56 = vld [vmem:[%s40 + $0x20] sm:$0xff]
    %v57 = vld [vmem:[%s40 + $0x28] sm:$0xff]
    %v58 = vld [vmem:[%s40 + $0x30] sm:$0xff]
    %v59 = vld [vmem:[%s40 + $0x38] sm:$0xff]
    %v60 = vld [vmem:[%s40 + $0x40] sm:$0xff]
    %v61 = vld [vmem:[%s40 + $0x48] sm:$0xff]
    %v62 = vld [vmem:[%s40 + $0x50] sm:$0xff]
    %v63 = vld [vmem:[%s40 + $0x58] sm:$0xff]
    %v64 = vld [vmem:[%s40 + $0x60] sm:$0xff]
    %v65 = vld [vmem:[%s40 + $0x68] sm:$0xff]
    %v66 = vld [vmem:[%s40 + $0x70] sm:$0xff]
    %v67 = vld [vmem:[%s40 + $0x78] sm:$0xff]
    %v68 = vld [vmem:[%s40 + $0x80] sm:$0xff]
    %v69 = vld [vmem:[%s40 + $0x88] sm:$0xff]
    %v70 = vld [vmem:[%s40 + $0x90] sm:$0xff]
    %v71 = vld [vmem:[%s40 + $0x98] sm:$0xff]
    %v72 = vld [vmem:[%s40 + $0xa0] sm:$0xff]
    %v73 = vld [vmem:[%s40 + $0xa8] sm:$0xff]
    %v74 = vld [vmem:[%s40 + $0xb0] sm:$0xff]
    %v75 = vld [vmem:[%s40 + $0xb8] sm:$0xff]
    %v76 = vld [vmem:[%s40 + $0xc0] sm:$0xff]
    %v77 = vld [vmem:[%s40 + $0xc8] sm:$0xff]
    %v78 = vld [vmem:[%s40 + $0xd0] sm:$0xff]
    %v79 = vld [vmem:[%s40 + $0xd8] sm:$0xff]
    %v80 = vld [vmem:[%s40 + $0xe0] sm:$0xff]
    %v81 = vld [vmem:[%s40 + $0xe8] sm:$0xff]
    %v82 = vld [vmem:[%s40 + $0xf0] sm:$0xff]
    %v83 = vld [vmem:[%s40 + $0xf8] sm:$0xff]
    %v84 = vld [vmem:[%s40 + $0x100] sm:$0xff]
    %v85 = vld [vmem:[%s40 + $0x108] sm:$0xff]
    %v86 = vld [vmem:[%s40 + $0x110] sm:$0xff]
    %v87 = vld [vmem:[%s40 + $0x118] sm:$0xff]
    %v88 = vld [vmem:[%s40 + $0x120] sm:$0xff]
    %v89 = vld [vmem:[%s40 + $0x128] sm:$0xff]
    %v90 = vld [vmem:[%s40 + $0x130] sm:$0xff]
    %v91 = vld [vmem:[%s40 + $0x138] sm:$0xff]
    %v92 = vld [vmem:[%s40 + $0x140] sm:$0xff]
    %v93 = vld [vmem:[%s40 + $0x148] sm:$0xff]
    %v94 = vld [vmem:[%s40 + $0x150] sm:$0xff]
    %v95 = vld [vmem:[%s40 + $0x158] sm:$0xff]
    %v96 = vld [vmem:[%s40 + $0x160] sm:$0xff]
    %v97 = vld [vmem:[%s40 + $0x168] sm:$0xff]
    %v98 = vld [vmem:[%s40 + $0x170] sm:$0xff]
    %v99 = vld [vmem:[%s40 + $0x178] sm:$0xff]
    %v100 = vld [vmem:[%s40 + $0x180] sm:$0xff]
    %v101 = vld [vmem:[%s40 + $0x188] sm:$0xff]
    %v102 = vld [vmem:[%s40 + $0x190] sm:$0xff]
    %v103 = vld [vmem:[%s40 + $0x198] sm:$0xff]
    %v104 = vld [vmem:[%s40 + $0x1a0] sm:$0xff]
    %v105 = vld [vmem:[%s40 + $0x1a8] sm:$0xff]
    %v106 = vld [vmem:[%s40 + $0x1b0] sm:$0xff]
    %v107 = vld [vmem:[%s40 + $0x1b8] sm:$0xff]
    %v108 = vld [vmem:[%s40 + $0x1c0] sm:$0xff]
    %v109 = vld [vmem:[%s40 + $0x1c8] sm:$0xff]
    %v110 = vld [vmem:[%s40 + $0x1d0] sm:$0xff]
    %v111 = vld [vmem:[%s40 + $0x1d8] sm:$0xff]
    %v112 = vld [vmem:[%s40 + $0x1e0] sm:$0xff]
    %v113 = vld [vmem:[%s40 + $0x1e8] sm:$0xff]
    %v114 = vld [vmem:[%s40 + $0x1f0] sm:$0xff]
    %v115 = vld [vmem:[%s40 + $0x1f8] sm:$0xff]
    %v116 = vld [vmem:[%s40 + $0x200] sm:$0xff]
    %v117 = vld [vmem:[%s40 + $0x208] sm:$0xff]
    %v118 = vld [vmem:[%s40 + $0x210] sm:$0xff]
    %v119 = vld [vmem:[%s40 + $0x218] sm:$0xff]
    %v120 = vld [vmem:[%s40 + $0x220] sm:$0xff]
    %v121 = vld [vmem:[%s40 + $0x228] sm:$0xff]
    %v122 = vld [vmem:[%s40 + $0x230] sm:$0xff]
    %v123 = vld [vmem:[%s40 + $0x238] sm:$0xff]
    %v124 = vld [vmem:[%s40 + $0x240] sm:$0xff]
    %v125 = vld [vmem:[%s40 + $0x248] sm:$0xff]
    %v126 = vld [vmem:[%s40 + $0x250] sm:$0xff]
    %v127 = vld [vmem:[%s40 + $0x258] sm:$0xff]
    %v128 = vld [vmem:[%s40 + $0x260] sm:$0xff]
    %v129 = vld [vmem:[%s40 + $0x268] sm:$0xff]
    %v130 = vld [vmem:[%s40 + $0x270] sm:$0xff]
    %v131 = vld [vmem:[%s40 + $0x278] sm:$0xff]
    %v132 = vld [vmem:[%s40 + $0x280] sm:$0xff]
    %v133 = vld [vmem:[%s40 + $0x288] sm:$0xff]
    %v134 = vld [vmem:[%s40 + $0x290] sm:$0xff]
    %v135 = vld [vmem:[%s40 + $0x298] sm:$0xff]
    %v136 = vld [vmem:[%s40 + $0x2a0] sm:$0xff]
    %v137 = vld [vmem:[%s40 + $0x2a8] sm:$0xff]
    %v138 = vld [vmem:[%s40 + $0x2b0] sm:$0xff]
    %v139 = vld [vmem:[%s40 + $0x2b8] sm:$0xff]
    %v140 = vld [vmem:[%s40 + $0x2c0] sm:$0xff]
    %v141 = vld [vmem:[%s40 + $0x2c8] sm:$0xff]
    %v142 = vld [vmem:[%s40 + $0x2d0] sm:$0xff]
    %v143 = vld [vmem:[%s40 + $0x2d8] sm:$0xff]
    %v144 = vld [vmem:[%s40 + $0x2e0] sm:$0xff]
    %v145 = vld [vmem:[%s40 + $0x2e8] sm:$0xff]
    %v146 = vld [vmem:[%s40 + $0x2f0] sm:$0xff]
    %v147 = vld [vmem:[%s40 + $0x2f8] sm:$0xff]
    %v148 = vld [vmem:[%s40 + $0x300] sm:$0x33]
    %v149 = vld [vmem:[%s40 + $0x308] sm:$0x33]
    %v150 = vld [vmem:[%s40 + $0x310] sm:$0x33]
    %v151 = vld [vmem:[%s40 + $0x318] sm:$0x33]
    %v152 = vld [vmem:[%s40 + $0x320] sm:$0x33]
    %v153 = vld [vmem:[%s40 + $0x328] sm:$0x33]
    %v154 = vld [vmem:[%s40 + $0x330] sm:$0x33]
    %v155 = vld [vmem:[%s40 + $0x338] sm:$0x33]
    %v156 = vld [vmem:[%s40 + $0x340] sm:$0x33]
    %v157 = vld [vmem:[%s40 + $0x348] sm:$0x33]
    %v158 = vld [vmem:[%s40 + $0x350] sm:$0x33]
    %v159 = vld [vmem:[%s40 + $0x358] sm:$0x33]
    %v160 = vld [vmem:[%s40 + $0x360] sm:$0x33]
    %v161 = vld [vmem:[%s40 + $0x368] sm:$0x33]
    %v162 = vld [vmem:[%s40 + $0x370] sm:$0x33]
    %v163 = vld [vmem:[%s40 + $0x378] sm:$0x33]
    %v164 = vld [vmem:[%s40 + $0x380] sm:$0x33]
    %v165 = vld [vmem:[%s40 + $0x388] sm:$0x33]
    %v166 = vld [vmem:[%s40 + $0x390] sm:$0x33]
    %v167 = vld [vmem:[%s40 + $0x398] sm:$0x33]
    %v168 = vld [vmem:[%s40 + $0x3a0] sm:$0x33]
    %v169 = vld [vmem:[%s40 + $0x3a8] sm:$0x33]
    %v170 = vld [vmem:[%s40 + $0x3b0] sm:$0x33]
    %v171 = vld [vmem:[%s40 + $0x3b8] sm:$0x33]
    %v172 = vld [vmem:[%s40 + $0x3c0] sm:$0x33]
    %v173 = vld [vmem:[%s40 + $0x3c8] sm:$0x33]
    %v174 = vld [vmem:[%s40 + $0x3d0] sm:$0x33]
    %v175 = vld [vmem:[%s40 + $0x3d8] sm:$0x33]
    %v176 = vld [vmem:[%s40 + $0x3e0] sm:$0x33]
    %v177 = vld [vmem:[%s40 + $0x3e8] sm:$0x33]
    %v178 = vld [vmem:[%s40 + $0x3f0] sm:$0x33]
    %v179 = vld [vmem:[%s40 + $0x3f8] sm:$0x33]
    %v308 = vunpack.c.l.b16 %v52
    %v309 = vunpack.c.h.b16 %v52
    %v310 = vunpack.c.l.b16 %v53
    %v311 = vunpack.c.h.b16 %v53
    %v312 = vunpack.c.l.b16 %v54
    %v313 = vunpack.c.h.b16 %v54
    %v314 = vunpack.c.l.b16 %v55
    %v315 = vunpack.c.h.b16 %v55
    %v316 = vunpack.c.l.b16 %v56
    %v317 = vunpack.c.h.b16 %v56
    %v318 = vunpack.c.l.b16 %v57
    %v319 = vunpack.c.h.b16 %v57
    %v320 = vunpack.c.l.b16 %v58
    %v321 = vunpack.c.h.b16 %v58
    %v322 = vunpack.c.l.b16 %v59
    %v323 = vunpack.c.h.b16 %v59
    %v324 = vunpack.c.l.b16 %v60
    %v325 = vunpack.c.h.b16 %v60
    %v326 = vunpack.c.l.b16 %v61
    %v327 = vunpack.c.h.b16 %v61
    %v328 = vunpack.c.l.b16 %v62
    %v329 = vunpack.c.h.b16 %v62
    %v330 = vunpack.c.l.b16 %v63
    %v331 = vunpack.c.h.b16 %v63
    %v332 = vunpack.c.l.b16 %v64
    %v333 = vunpack.c.h.b16 %v64
    %v334 = vunpack.c.l.b16 %v65
    %v335 = vunpack.c.h.b16 %v65
    %v336 = vunpack.c.l.b16 %v66
    %v337 = vunpack.c.h.b16 %v66
    %v338 = vunpack.c.l.b16 %v67
    %v339 = vunpack.c.h.b16 %v67
    %v340 = vunpack.c.l.b16 %v68
    %v341 = vunpack.c.h.b16 %v68
    %v342 = vunpack.c.l.b16 %v69
    %v343 = vunpack.c.h.b16 %v69
    %v344 = vunpack.c.l.b16 %v70
    %v345 = vunpack.c.h.b16 %v70
    %v346 = vunpack.c.l.b16 %v71
    %v347 = vunpack.c.h.b16 %v71
    %v348 = vunpack.c.l.b16 %v72
    %v349 = vunpack.c.h.b16 %v72
    %v350 = vunpack.c.l.b16 %v73
    %v351 = vunpack.c.h.b16 %v73
    %v352 = vunpack.c.l.b16 %v74
    %v353 = vunpack.c.h.b16 %v74
    %v354 = vunpack.c.l.b16 %v75
    %v355 = vunpack.c.h.b16 %v75
    %v356 = vunpack.c.l.b16 %v76
    %v357 = vunpack.c.h.b16 %v76
    %v358 = vunpack.c.l.b16 %v77
    %v359 = vunpack.c.h.b16 %v77
    %v360 = vunpack.c.l.b16 %v78
    %v361 = vunpack.c.h.b16 %v78
    %v362 = vunpack.c.l.b16 %v79
    %v363 = vunpack.c.h.b16 %v79
    %v364 = vunpack.c.l.b16 %v80
    %v365 = vunpack.c.h.b16 %v80
    %v366 = vunpack.c.l.b16 %v81
    %v367 = vunpack.c.h.b16 %v81
    %v368 = vunpack.c.l.b16 %v82
    %v369 = vunpack.c.h.b16 %v82
    %v370 = vunpack.c.l.b16 %v83
    %v371 = vunpack.c.h.b16 %v83
    %v372 = vunpack.c.l.b16 %v84
    %v373 = vunpack.c.h.b16 %v84
    %v374 = vunpack.c.l.b16 %v85
    %v375 = vunpack.c.h.b16 %v85
    %v376 = vunpack.c.l.b16 %v86
    %v377 = vunpack.c.h.b16 %v86
    %v378 = vunpack.c.l.b16 %v87
    %v379 = vunpack.c.h.b16 %v87
    %v380 = vunpack.c.l.b16 %v88
    %v381 = vunpack.c.h.b16 %v88
    %v382 = vunpack.c.l.b16 %v89
    %v383 = vunpack.c.h.b16 %v89
    %v384 = vunpack.c.l.b16 %v90
    %v385 = vunpack.c.h.b16 %v90
    %v386 = vunpack.c.l.b16 %v91
    %v387 = vunpack.c.h.b16 %v91
    %v388 = vunpack.c.l.b16 %v92
    %v389 = vunpack.c.h.b16 %v92
    %v390 = vunpack.c.l.b16 %v93
    %v391 = vunpack.c.h.b16 %v93
    %v392 = vunpack.c.l.b16 %v94
    %v393 = vunpack.c.h.b16 %v94
    %v394 = vunpack.c.l.b16 %v95
    %v395 = vunpack.c.h.b16 %v95
    %v396 = vunpack.c.l.b16 %v96
    %v397 = vunpack.c.h.b16 %v96
    %v398 = vunpack.c.l.b16 %v97
    %v399 = vunpack.c.h.b16 %v97
    %v400 = vunpack.c.l.b16 %v98
    %v401 = vunpack.c.h.b16 %v98
    %v402 = vunpack.c.l.b16 %v99
    %v403 = vunpack.c.h.b16 %v99
    %v404 = vunpack.c.l.b16 %v100
    %v405 = vunpack.c.h.b16 %v100
    %v406 = vunpack.c.l.b16 %v101
    %v407 = vunpack.c.h.b16 %v101
    %v408 = vunpack.c.l.b16 %v102
    %v409 = vunpack.c.h.b16 %v102
    %v410 = vunpack.c.l.b16 %v103
    %v411 = vunpack.c.h.b16 %v103
    %v412 = vunpack.c.l.b16 %v104
    %v413 = vunpack.c.h.b16 %v104
    %v414 = vunpack.c.l.b16 %v105
    %v415 = vunpack.c.h.b16 %v105
    %v416 = vunpack.c.l.b16 %v106
    %v417 = vunpack.c.h.b16 %v106
    %v418 = vunpack.c.l.b16 %v107
    %v419 = vunpack.c.h.b16 %v107
    %v420 = vunpack.c.l.b16 %v108
    %v421 = vunpack.c.h.b16 %v108
    %v422 = vunpack.c.l.b16 %v109
    %v423 = vunpack.c.h.b16 %v109
    %v424 = vunpack.c.l.b16 %v110
    %v425 = vunpack.c.h.b16 %v110
    %v426 = vunpack.c.l.b16 %v111
    %v427 = vunpack.c.h.b16 %v111
    %v428 = vunpack.c.l.b16 %v112
    %v429 = vunpack.c.h.b16 %v112
    %v430 = vunpack.c.l.b16 %v113
    %v431 = vunpack.c.h.b16 %v113
    %v432 = vunpack.c.l.b16 %v114
    %v433 = vunpack.c.h.b16 %v114
    %v434 = vunpack.c.l.b16 %v115
    %v435 = vunpack.c.h.b16 %v115
    %v436 = vunpack.c.l.b16 %v116
    %v437 = vunpack.c.h.b16 %v116
    %v438 = vunpack.c.l.b16 %v117
    %v439 = vunpack.c.h.b16 %v117
    %v440 = vunpack.c.l.b16 %v118
    %v441 = vunpack.c.h.b16 %v118
    %v442 = vunpack.c.l.b16 %v119
    %v443 = vunpack.c.h.b16 %v119
    %v444 = vunpack.c.l.b16 %v120
    %v445 = vunpack.c.h.b16 %v120
    %v446 = vunpack.c.l.b16 %v121
    %v447 = vunpack.c.h.b16 %v121
    %v448 = vunpack.c.l.b16 %v122
    %v449 = vunpack.c.h.b16 %v122
    %v450 = vunpack.c.l.b16 %v123
    %v451 = vunpack.c.h.b16 %v123
    %v452 = vunpack.c.l.b16 %v124
    %v453 = vunpack.c.h.b16 %v124
    %v454 = vunpack.c.l.b16 %v125
    %v455 = vunpack.c.h.b16 %v125
    %v456 = vunpack.c.l.b16 %v126
    %v457 = vunpack.c.h.b16 %v126
    %v458 = vunpack.c.l.b16 %v127
    %v459 = vunpack.c.h.b16 %v127
    %v460 = vunpack.c.l.b16 %v128
    %v461 = vunpack.c.h.b16 %v128
    %v462 = vunpack.c.l.b16 %v129
    %v463 = vunpack.c.h.b16 %v129
    %v464 = vunpack.c.l.b16 %v130
    %v465 = vunpack.c.h.b16 %v130
    %v466 = vunpack.c.l.b16 %v131
    %v467 = vunpack.c.h.b16 %v131
    %v468 = vunpack.c.l.b16 %v132
    %v469 = vunpack.c.h.b16 %v132
    %v470 = vunpack.c.l.b16 %v133
    %v471 = vunpack.c.h.b16 %v133
    %v472 = vunpack.c.l.b16 %v134
    %v473 = vunpack.c.h.b16 %v134
    %v474 = vunpack.c.l.b16 %v135
    %v475 = vunpack.c.h.b16 %v135
    %v476 = vunpack.c.l.b16 %v136
    %v477 = vunpack.c.h.b16 %v136
    %v478 = vunpack.c.l.b16 %v137
    %v479 = vunpack.c.h.b16 %v137
    %v480 = vunpack.c.l.b16 %v138
    %v481 = vunpack.c.h.b16 %v138
    %v482 = vunpack.c.l.b16 %v139
    %v483 = vunpack.c.h.b16 %v139
    %v484 = vunpack.c.l.b16 %v140
    %v485 = vunpack.c.h.b16 %v140
    %v486 = vunpack.c.l.b16 %v141
    %v487 = vunpack.c.h.b16 %v141
    %v488 = vunpack.c.l.b16 %v142
    %v489 = vunpack.c.h.b16 %v142
    %v490 = vunpack.c.l.b16 %v143
    %v491 = vunpack.c.h.b16 %v143
    %v492 = vunpack.c.l.b16 %v144
    %v493 = vunpack.c.h.b16 %v144
    %v494 = vunpack.c.l.b16 %v145
    %v495 = vunpack.c.h.b16 %v145
    %v496 = vunpack.c.l.b16 %v146
    %v497 = vunpack.c.h.b16 %v146
    %v498 = vunpack.c.l.b16 %v147
    %v499 = vunpack.c.h.b16 %v147
    %v500 = vunpack.c.l.b16 %v148
    %v501 = vunpack.c.h.b16 %v148
    %v502 = vunpack.c.l.b16 %v149
    %v503 = vunpack.c.h.b16 %v149
    %v504 = vunpack.c.l.b16 %v150
    %v505 = vunpack.c.h.b16 %v150
    %v506 = vunpack.c.l.b16 %v151
    %v507 = vunpack.c.h.b16 %v151
    %v508 = vunpack.c.l.b16 %v152
    %v509 = vunpack.c.h.b16 %v152
    %v510 = vunpack.c.l.b16 %v153
    %v511 = vunpack.c.h.b16 %v153
    %v512 = vunpack.c.l.b16 %v154
    %v513 = vunpack.c.h.b16 %v154
    %v514 = vunpack.c.l.b16 %v155
    %v515 = vunpack.c.h.b16 %v155
    %v516 = vunpack.c.l.b16 %v156
    %v517 = vunpack.c.h.b16 %v156
    %v518 = vunpack.c.l.b16 %v157
    %v519 = vunpack.c.h.b16 %v157
    %v520 = vunpack.c.l.b16 %v158
    %v521 = vunpack.c.h.b16 %v158
    %v522 = vunpack.c.l.b16 %v159
    %v523 = vunpack.c.h.b16 %v159
    %v524 = vunpack.c.l.b16 %v160
    %v525 = vunpack.c.h.b16 %v160
    %v526 = vunpack.c.l.b16 %v161
    %v527 = vunpack.c.h.b16 %v161
    %v528 = vunpack.c.l.b16 %v162
    %v529 = vunpack.c.h.b16 %v162
    %v530 = vunpack.c.l.b16 %v163
    %v531 = vunpack.c.h.b16 %v163
    %v532 = vunpack.c.l.b16 %v164
    %v533 = vunpack.c.h.b16 %v164
    %v534 = vunpack.c.l.b16 %v165
    %v535 = vunpack.c.h.b16 %v165
    %v536 = vunpack.c.l.b16 %v166
    %v537 = vunpack.c.h.b16 %v166
    %v538 = vunpack.c.l.b16 %v167
    %v539 = vunpack.c.h.b16 %v167
    %v540 = vunpack.c.l.b16 %v168
    %v541 = vunpack.c.h.b16 %v168
    %v542 = vunpack.c.l.b16 %v169
    %v543 = vunpack.c.h.b16 %v169
    %v544 = vunpack.c.l.b16 %v170
    %v545 = vunpack.c.h.b16 %v170
    %v546 = vunpack.c.l.b16 %v171
    %v547 = vunpack.c.h.b16 %v171
    %v548 = vunpack.c.l.b16 %v172
    %v549 = vunpack.c.h.b16 %v172
    %v550 = vunpack.c.l.b16 %v173
    %v551 = vunpack.c.h.b16 %v173
    %v552 = vunpack.c.l.b16 %v174
    %v553 = vunpack.c.h.b16 %v174
    %v554 = vunpack.c.l.b16 %v175
    %v555 = vunpack.c.h.b16 %v175
    %v556 = vunpack.c.l.b16 %v176
    %v557 = vunpack.c.h.b16 %v176
    %v558 = vunpack.c.l.b16 %v177
    %v559 = vunpack.c.h.b16 %v177
    %v560 = vunpack.c.l.b16 %v178
    %v561 = vunpack.c.h.b16 %v178
    %v562 = vunpack.c.l.b16 %v179
    %v563 = vunpack.c.h.b16 %v179
    %v564 = vpack.c.b16 %v372, %v308
    %v565 = vpack.c.b16 %v373, %v309
    %v566 = vpack.c.b16 %v374, %v310
    %v567 = vpack.c.b16 %v375, %v311
    %v568 = vpack.c.b16 %v376, %v312
    %v569 = vpack.c.b16 %v377, %v313
    %v570 = vpack.c.b16 %v378, %v314
    %v571 = vpack.c.b16 %v379, %v315
    %v572 = vpack.c.b16 %v380, %v316
    %v573 = vpack.c.b16 %v381, %v317
    %v574 = vpack.c.b16 %v382, %v318
    %v575 = vpack.c.b16 %v383, %v319
    %v576 = vpack.c.b16 %v384, %v320
    %v577 = vpack.c.b16 %v385, %v321
    %v578 = vpack.c.b16 %v386, %v322
    %v579 = vpack.c.b16 %v387, %v323
    %v580 = vpack.c.b16 %v388, %v324
    %v581 = vpack.c.b16 %v389, %v325
    %v582 = vpack.c.b16 %v390, %v326
    %v583 = vpack.c.b16 %v391, %v327
    %v584 = vpack.c.b16 %v392, %v328
    %v585 = vpack.c.b16 %v393, %v329
    %v586 = vpack.c.b16 %v394, %v330
    %v587 = vpack.c.b16 %v395, %v331
    %v588 = vpack.c.b16 %v396, %v332
    %v589 = vpack.c.b16 %v397, %v333
    %v590 = vpack.c.b16 %v398, %v334
    %v591 = vpack.c.b16 %v399, %v335
    %v592 = vpack.c.b16 %v400, %v336
    %v593 = vpack.c.b16 %v401, %v337
    %v594 = vpack.c.b16 %v402, %v338
    %v595 = vpack.c.b16 %v403, %v339
    %v596 = vpack.c.b16 %v404, %v340
    %v597 = vpack.c.b16 %v405, %v341
    %v598 = vpack.c.b16 %v406, %v342
    %v599 = vpack.c.b16 %v407, %v343
    %v600 = vpack.c.b16 %v408, %v344
    %v601 = vpack.c.b16 %v409, %v345
    %v602 = vpack.c.b16 %v410, %v346
    %v603 = vpack.c.b16 %v411, %v347
    %v604 = vpack.c.b16 %v412, %v348
    %v605 = vpack.c.b16 %v413, %v349
    %v606 = vpack.c.b16 %v414, %v350
    %v607 = vpack.c.b16 %v415, %v351
    %v608 = vpack.c.b16 %v416, %v352
    %v609 = vpack.c.b16 %v417, %v353
    %v610 = vpack.c.b16 %v418, %v354
    %v611 = vpack.c.b16 %v419, %v355
    %v612 = vpack.c.b16 %v420, %v356
    %v613 = vpack.c.b16 %v421, %v357
    %v614 = vpack.c.b16 %v422, %v358
    %v615 = vpack.c.b16 %v423, %v359
    %v616 = vpack.c.b16 %v424, %v360
    %v617 = vpack.c.b16 %v425, %v361
    %v618 = vpack.c.b16 %v426, %v362
    %v619 = vpack.c.b16 %v427, %v363
    %v620 = vpack.c.b16 %v428, %v364
    %v621 = vpack.c.b16 %v429, %v365
    %v622 = vpack.c.b16 %v430, %v366
    %v623 = vpack.c.b16 %v431, %v367
    %v624 = vpack.c.b16 %v432, %v368
    %v625 = vpack.c.b16 %v433, %v369
    %v626 = vpack.c.b16 %v434, %v370
    %v627 = vpack.c.b16 %v435, %v371
    %v628 = vpack.c.b16 %v500, %v436
    %v629 = vpack.c.b16 %v501, %v437
    %v630 = vpack.c.b16 %v502, %v438
    %v631 = vpack.c.b16 %v503, %v439
    %v632 = vpack.c.b16 %v504, %v440
    %v633 = vpack.c.b16 %v505, %v441
    %v634 = vpack.c.b16 %v506, %v442
    %v635 = vpack.c.b16 %v507, %v443
    %v636 = vpack.c.b16 %v508, %v444
    %v637 = vpack.c.b16 %v509, %v445
    %v638 = vpack.c.b16 %v510, %v446
    %v639 = vpack.c.b16 %v511, %v447
    %v640 = vpack.c.b16 %v512, %v448
    %v641 = vpack.c.b16 %v513, %v449
    %v642 = vpack.c.b16 %v514, %v450
    %v643 = vpack.c.b16 %v515, %v451
    %v644 = vpack.c.b16 %v516, %v452
    %v645 = vpack.c.b16 %v517, %v453
    %v646 = vpack.c.b16 %v518, %v454
    %v647 = vpack.c.b16 %v519, %v455
    %v648 = vpack.c.b16 %v520, %v456
    %v649 = vpack.c.b16 %v521, %v457
    %v650 = vpack.c.b16 %v522, %v458
    %v651 = vpack.c.b16 %v523, %v459
    %v652 = vpack.c.b16 %v524, %v460
    %v653 = vpack.c.b16 %v525, %v461
    %v654 = vpack.c.b16 %v526, %v462
    %v655 = vpack.c.b16 %v527, %v463
    %v656 = vpack.c.b16 %v528, %v464
    %v657 = vpack.c.b16 %v529, %v465
    %v658 = vpack.c.b16 %v530, %v466
    %v659 = vpack.c.b16 %v531, %v467
    %v660 = vpack.c.b16 %v532, %v468
    %v661 = vpack.c.b16 %v533, %v469
    %v662 = vpack.c.b16 %v534, %v470
    %v663 = vpack.c.b16 %v535, %v471
    %v664 = vpack.c.b16 %v536, %v472
    %v665 = vpack.c.b16 %v537, %v473
    %v666 = vpack.c.b16 %v538, %v474
    %v667 = vpack.c.b16 %v539, %v475
    %v668 = vpack.c.b16 %v540, %v476
    %v669 = vpack.c.b16 %v541, %v477
    %v670 = vpack.c.b16 %v542, %v478
    %v671 = vpack.c.b16 %v543, %v479
    %v672 = vpack.c.b16 %v544, %v480
    %v673 = vpack.c.b16 %v545, %v481
    %v674 = vpack.c.b16 %v546, %v482
    %v675 = vpack.c.b16 %v547, %v483
    %v676 = vpack.c.b16 %v548, %v484
    %v677 = vpack.c.b16 %v549, %v485
    %v678 = vpack.c.b16 %v550, %v486
    %v679 = vpack.c.b16 %v551, %v487
    %v680 = vpack.c.b16 %v552, %v488
    %v681 = vpack.c.b16 %v553, %v489
    %v682 = vpack.c.b16 %v554, %v490
    %v683 = vpack.c.b16 %v555, %v491
    %v684 = vpack.c.b16 %v556, %v492
    %v685 = vpack.c.b16 %v557, %v493
    %v686 = vpack.c.b16 %v558, %v494
    %v687 = vpack.c.b16 %v559, %v495
    %v688 = vpack.c.b16 %v560, %v496
    %v689 = vpack.c.b16 %v561, %v497
    %v690 = vpack.c.b16 %v562, %v498
    %v691 = vpack.c.b16 %v563, %v499
    %vm756 = vcmask 220160
    %v758 = vsel %vm756, %v51, 0
    %vm760 = vcmask 1044480
    %vm761 = vcmask 1045504
    %v762 = vsel %vm760, 4294967295, 65535
    %v763 = vsel %vm761, %v762, 0
    %v765 = vand.u32 %v628, %v763
    %v768 = vand.u32 %v629, %v763
    %v771 = vand.u32 %v630, %v763
    %v774 = vand.u32 %v631, %v763
    %v777 = vand.u32 %v632, %v763
    %v780 = vand.u32 %v633, %v763
    %v783 = vand.u32 %v634, %v763
    %v786 = vand.u32 %v635, %v763
    %v789 = vand.u32 %v636, %v763
    %v792 = vand.u32 %v637, %v763
    %v795 = vand.u32 %v638, %v763
    %v798 = vand.u32 %v639, %v763
    %v801 = vand.u32 %v640, %v763
    %v804 = vand.u32 %v641, %v763
    %v807 = vand.u32 %v642, %v763
    %v810 = vand.u32 %v643, %v763
    %v813 = vand.u32 %v644, %v763
    %v816 = vand.u32 %v645, %v763
    %v819 = vand.u32 %v646, %v763
    %v822 = vand.u32 %v647, %v763
    %v825 = vand.u32 %v648, %v763
    %v828 = vand.u32 %v649, %v763
    %v831 = vand.u32 %v650, %v763
    %v834 = vand.u32 %v651, %v763
    %v837 = vand.u32 %v652, %v763
    %v840 = vand.u32 %v653, %v763
    %v843 = vand.u32 %v654, %v763
    %v846 = vand.u32 %v655, %v763
    %v849 = vand.u32 %v656, %v763
    %v852 = vand.u32 %v657, %v763
    %v855 = vand.u32 %v658, %v763
    %v858 = vand.u32 %v659, %v763
    %v861 = vand.u32 %v660, %v763
    %v864 = vand.u32 %v661, %v763
    %v867 = vand.u32 %v662, %v763
    %v870 = vand.u32 %v663, %v763
    %v873 = vand.u32 %v664, %v763
    %v876 = vand.u32 %v665, %v763
    %v879 = vand.u32 %v666, %v763
    %v882 = vand.u32 %v667, %v763
    %v885 = vand.u32 %v668, %v763
    %v888 = vand.u32 %v669, %v763
    %v891 = vand.u32 %v670, %v763
    %v894 = vand.u32 %v671, %v763
    %v897 = vand.u32 %v672, %v763
    %v900 = vand.u32 %v673, %v763
    %v903 = vand.u32 %v674, %v763
    %v906 = vand.u32 %v675, %v763
    %v909 = vand.u32 %v676, %v763
    %v912 = vand.u32 %v677, %v763
    %v915 = vand.u32 %v678, %v763
    %v918 = vand.u32 %v679, %v763
    %v921 = vand.u32 %v680, %v763
    %v924 = vand.u32 %v681, %v763
    %v927 = vand.u32 %v682, %v763
    %v930 = vand.u32 %v683, %v763
    %v933 = vand.u32 %v684, %v763
    %v936 = vand.u32 %v685, %v763
    %v939 = vand.u32 %v686, %v763
    %v942 = vand.u32 %v687, %v763
    %v945 = vand.u32 %v688, %v763
    %v948 = vand.u32 %v689, %v763
    %v951 = vand.u32 %v690, %v763
    %v954 = vand.u32 %v691, %v763
    %956 = vmatprep.subr.bf16.mxu0 %v565
    %957 = vmatpush1.bf16.msra.mxu0 %v564
    %958 = vmatprep.subr.bf16.mxu0 %v768
    %959 = vmatpush1.bf16.msra.mxu0 %v765
    %960 = vmatprep.subr.bf16.mxu0 0
    %961 = vmatpush1.bf16.msra.mxu0 0
    %962 = vmatprep.subr.bf16.mxu0 0
    %963 = vmatpush1.bf16.msra.mxu0 0
    %964 = vmatprep.subr.bf16.mxu0 0
    %965 = vmatpush1.bf16.msra.mxu0 0
    %966 = vmatprep.subr.bf16.mxu0 0
    %967 = vmatpush1.bf16.msra.mxu0 0
    %968 = vmatprep.subr.bf16.mxu0 0
    %969 = vmatpush1.bf16.msra.mxu0 0
    %970 = vmatprep.subr.bf16.mxu0 0
    %971 = vmatpush1.bf16.msra.mxu0 0
    %972 = vmatprep.subr.bf16.mxu0 0
    %973 = vmatpush1.bf16.msra.mxu0 0
    %974 = vmatprep.subr.bf16.mxu0 0
    %975 = vmatpush1.bf16.msra.mxu0 0
    %976 = vmatprep.subr.bf16.mxu0 0
    %977 = vmatpush1.bf16.msra.mxu0 0
    %978 = vmatprep.subr.bf16.mxu0 0
    %979 = vmatpush1.bf16.msra.mxu0 0
    %980 = vmatprep.subr.bf16.mxu0 0
    %981 = vmatpush1.bf16.msra.mxu0 0
    %982 = vmatprep.subr.bf16.mxu0 0
    %983 = vmatpush1.bf16.msra.mxu0 0
    %984 = vmatprep.subr.bf16.mxu0 0
    %985 = vmatpush1.bf16.msra.mxu0 0
    %986 = vmatprep.subr.bf16.mxu0 0
    %987 = vmatpush1.bf16.msra.mxu0 0
    %988 = vmatprep.mubr.bf16.mxu0 0
    %989 = vmatmul.mubr.bf16.gmra.mrb[0].mxu0 %v758
    %v990 = vpop.f32.mrb[0].mxu0
    %v991 = vadd.f32 0.0, %v990
    %v992 = vpop.f32.mrb[0].mxu0
    %v993 = vadd.f32 0.0, %v992
    %v994 = vpop.f32.mrb[0].mxu0
    %v995 = vpop.f32.mrb[0].mxu0
    %996 = vdwg.mxu0
    %997 = vmatprep.subr.bf16.mxu0 %v567
    %998 = vmatpush1.bf16.msra.mxu0 %v566
    %999 = vmatprep.subr.bf16.mxu0 %v774
    %1000 = vmatpush1.bf16.msra.mxu0 %v771
    %1001 = vmatprep.subr.bf16.mxu0 0
    %1002 = vmatpush1.bf16.msra.mxu0 0
    %1003 = vmatprep.subr.bf16.mxu0 0
    %1004 = vmatpush1.bf16.msra.mxu0 0
    %1005 = vmatprep.subr.bf16.mxu0 0
    %1006 = vmatpush1.bf16.msra.mxu0 0
    %1007 = vmatprep.subr.bf16.mxu0 0
    %1008 = vmatpush1.bf16.msra.mxu0 0
    %1009 = vmatprep.subr.bf16.mxu0 0
    %1010 = vmatpush1.bf16.msra.mxu0 0
    %1011 = vmatprep.subr.bf16.mxu0 0
    %1012 = vmatpush1.bf16.msra.mxu0 0
    %1013 = vmatprep.subr.bf16.mxu0 0
    %1014 = vmatpush1.bf16.msra.mxu0 0
    %1015 = vmatprep.subr.bf16.mxu0 0
    %1016 = vmatpush1.bf16.msra.mxu0 0
    %1017 = vmatprep.subr.bf16.mxu0 0
    %1018 = vmatpush1.bf16.msra.mxu0 0
    %1019 = vmatprep.subr.bf16.mxu0 0
    %1020 = vmatpush1.bf16.msra.mxu0 0
    %1021 = vmatprep.subr.bf16.mxu0 0
    %1022 = vmatpush1.bf16.msra.mxu0 0
    %1023 = vmatprep.subr.bf16.mxu0 0
    %1024 = vmatpush1.bf16.msra.mxu0 0
    %1025 = vmatprep.subr.bf16.mxu0 0
    %1026 = vmatpush1.bf16.msra.mxu0 0
    %1027 = vmatprep.subr.bf16.mxu0 0
    %1028 = vmatpush1.bf16.msra.mxu0 0
    %1029 = vmatprep.mubr.bf16.mxu0 0
    %1030 = vmatmul.mubr.bf16.gmra.mrb[0].mxu0 %v758
    %v1031 = vpop.f32.mrb[0].mxu0
    %v1032 = vadd.f32 0.0, %v1031
    %v1033 = vpop.f32.mrb[0].mxu0
    %v1034 = vadd.f32 0.0, %v1033
    %v1035 = vpop.f32.mrb[0].mxu0
    %v1036 = vpop.f32.mrb[0].mxu0
    %1037 = vdwg.mxu0
    %1038 = vmatprep.subr.bf16.mxu0 %v569
    %1039 = vmatpush1.bf16.msra.mxu0 %v568
    %1040 = vmatprep.subr.bf16.mxu0 %v780
    %1041 = vmatpush1.bf16.msra.mxu0 %v777
    %1042 = vmatprep.subr.bf16.mxu0 0
    %1043 = vmatpush1.bf16.msra.mxu0 0
    %1044 = vmatprep.subr.bf16.mxu0 0
    %1045 = vmatpush1.bf16.msra.mxu0 0
    %1046 = vmatprep.subr.bf16.mxu0 0
    %1047 = vmatpush1.bf16.msra.mxu0 0
    %1048 = vmatprep.subr.bf16.mxu0 0
    %1049 = vmatpush1.bf16.msra.mxu0 0
    %1050 = vmatprep.subr.bf16.mxu0 0
    %1051 = vmatpush1.bf16.msra.mxu0 0
    %1052 = vmatprep.subr.bf16.mxu0 0
    %1053 = vmatpush1.bf16.msra.mxu0 0
    %1054 = vmatprep.subr.bf16.mxu0 0
    %1055 = vmatpush1.bf16.msra.mxu0 0
    %1056 = vmatprep.subr.bf16.mxu0 0
    %1057 = vmatpush1.bf16.msra.mxu0 0
    %1058 = vmatprep.subr.bf16.mxu0 0
    %1059 = vmatpush1.bf16.msra.mxu0 0
    %1060 = vmatprep.subr.bf16.mxu0 0
    %1061 = vmatpush1.bf16.msra.mxu0 0
    %1062 = vmatprep.subr.bf16.mxu0 0
    %1063 = vmatpush1.bf16.msra.mxu0 0
    %1064 = vmatprep.subr.bf16.mxu0 0
    %1065 = vmatpush1.bf16.msra.mxu0 0
    %1066 = vmatprep.subr.bf16.mxu0 0
    %1067 = vmatpush1.bf16.msra.mxu0 0
    %1068 = vmatprep.subr.bf16.mxu0 0
    %1069 = vmatpush1.bf16.msra.mxu0 0
    %1070 = vmatprep.mubr.bf16.mxu0 0
    %1071 = vmatmul.mubr.bf16.gmra.mrb[0].mxu0 %v758
    %v1072 = vpop.f32.mrb[0].mxu0
    %v1073 = vadd.f32 0.0, %v1072
    %v1074 = vpop.f32.mrb[0].mxu0
    %v1075 = vadd.f32 0.0, %v1074
    %v1076 = vpop.f32.mrb[0].mxu0
    %v1077 = vpop.f32.mrb[0].mxu0
    %1078 = vdwg.mxu0
    %1079 = vmatprep.subr.bf16.mxu0 %v571
    %1080 = vmatpush1.bf16.msra.mxu0 %v570
    %1081 = vmatprep.subr.bf16.mxu0 %v786
    %1082 = vmatpush1.bf16.msra.mxu0 %v783
    %1083 = vmatprep.subr.bf16.mxu0 0
    %1084 = vmatpush1.bf16.msra.mxu0 0
    %1085 = vmatprep.subr.bf16.mxu0 0
    %1086 = vmatpush1.bf16.msra.mxu0 0
    %1087 = vmatprep.subr.bf16.mxu0 0
    %1088 = vmatpush1.bf16.msra.mxu0 0
    %1089 = vmatprep.subr.bf16.mxu0 0
    %1090 = vmatpush1.bf16.msra.mxu0 0
    %1091 = vmatprep.subr.bf16.mxu0 0
    %1092 = vmatpush1.bf16.msra.mxu0 0
    %1093 = vmatprep.subr.bf16.mxu0 0
    %1094 = vmatpush1.bf16.msra.mxu0 0
    %1095 = vmatprep.subr.bf16.mxu0 0
    %1096 = vmatpush1.bf16.msra.mxu0 0
    %1097 = vmatprep.subr.bf16.mxu0 0
    %1098 = vmatpush1.bf16.msra.mxu0 0
    %1099 = vmatprep.subr.bf16.mxu0 0
    %1100 = vmatpush1.bf16.msra.mxu0 0
    %1101 = vmatprep.subr.bf16.mxu0 0
    %1102 = vmatpush1.bf16.msra.mxu0 0
    %1103 = vmatprep.subr.bf16.mxu0 0
    %1104 = vmatpush1.bf16.msra.mxu0 0
    %1105 = vmatprep.subr.bf16.mxu0 0
    %1106 = vmatpush1.bf16.msra.mxu0 0
    %1107 = vmatprep.subr.bf16.mxu0 0
    %1108 = vmatpush1.bf16.msra.mxu0 0
    %1109 = vmatprep.subr.bf16.mxu0 0
    %1110 = vmatpush1.bf16.msra.mxu0 0
    %1111 = vmatprep.mubr.bf16.mxu0 0
    %1112 = vmatmul.mubr.bf16.gmra.mrb[0].mxu0 %v758
    %v1113 = vpop.f32.mrb[0].mxu0
    %v1114 = vadd.f32 0.0, %v1113
    %v1115 = vpop.f32.mrb[0].mxu0
    %v1116 = vadd.f32 0.0, %v1115
    %v1117 = vpop.f32.mrb[0].mxu0
    %v1118 = vpop.f32.mrb[0].mxu0
    %1119 = vdwg.mxu0
    %1120 = vmatprep.subr.bf16.mxu0 %v573
    %1121 = vmatpush1.bf16.msra.mxu0 %v572
    %1122 = vmatprep.subr.bf16.mxu0 %v792
    %1123 = vmatpush1.bf16.msra.mxu0 %v789
    %1124 = vmatprep.subr.bf16.mxu0 0
    %1125 = vmatpush1.bf16.msra.mxu0 0
    %1126 = vmatprep.subr.bf16.mxu0 0
    %1127 = vmatpush1.bf16.msra.mxu0 0
    %1128 = vmatprep.subr.bf16.mxu0 0
    %1129 = vmatpush1.bf16.msra.mxu0 0
    %1130 = vmatprep.subr.bf16.mxu0 0
    %1131 = vmatpush1.bf16.msra.mxu0 0
    %1132 = vmatprep.subr.bf16.mxu0 0
    %1133 = vmatpush1.bf16.msra.mxu0 0
    %1134 = vmatprep.subr.bf16.mxu0 0
    %1135 = vmatpush1.bf16.msra.mxu0 0
    %1136 = vmatprep.subr.bf16.mxu0 0
    %1137 = vmatpush1.bf16.msra.mxu0 0
    %1138 = vmatprep.subr.bf16.mxu0 0
    %1139 = vmatpush1.bf16.msra.mxu0 0
    %1140 = vmatprep.subr.bf16.mxu0 0
    %1141 = vmatpush1.bf16.msra.mxu0 0
    %1142 = vmatprep.subr.bf16.mxu0 0
    %1143 = vmatpush1.bf16.msra.mxu0 0
    %1144 = vmatprep.subr.bf16.mxu0 0
    %1145 = vmatpush1.bf16.msra.mxu0 0
    %1146 = vmatprep.subr.bf16.mxu0 0
    %1147 = vmatpush1.bf16.msra.mxu0 0
    %1148 = vmatprep.subr.bf16.mxu0 0
    %1149 = vmatpush1.bf16.msra.mxu0 0
    %1150 = vmatprep.subr.bf16.mxu0 0
    %1151 = vmatpush1.bf16.msra.mxu0 0
    %1152 = vmatprep.mubr.bf16.mxu0 0
    %1153 = vmatmul.mubr.bf16.gmra.mrb[0].mxu0 %v758
    %v1154 = vpop.f32.mrb[0].mxu0
    %v1155 = vadd.f32 0.0, %v1154
    %v1156 = vpop.f32.mrb[0].mxu0
    %v1157 = vadd.f32 0.0, %v1156
    %v1158 = vpop.f32.mrb[0].mxu0
    %v1159 = vpop.f32.mrb[0].mxu0
    %1160 = vdwg.mxu0
    %1161 = vmatprep.subr.bf16.mxu0 %v575
    %1162 = vmatpush1.bf16.msra.mxu0 %v574
    %1163 = vmatprep.subr.bf16.mxu0 %v798
    %1164 = vmatpush1.bf16.msra.mxu0 %v795
    %1165 = vmatprep.subr.bf16.mxu0 0
    %1166 = vmatpush1.bf16.msra.mxu0 0
    %1167 = vmatprep.subr.bf16.mxu0 0
    %1168 = vmatpush1.bf16.msra.mxu0 0
    %1169 = vmatprep.subr.bf16.mxu0 0
    %1170 = vmatpush1.bf16.msra.mxu0 0
    %1171 = vmatprep.subr.bf16.mxu0 0
    %1172 = vmatpush1.bf16.msra.mxu0 0
    %1173 = vmatprep.subr.bf16.mxu0 0
    %1174 = vmatpush1.bf16.msra.mxu0 0
    %1175 = vmatprep.subr.bf16.mxu0 0
    %1176 = vmatpush1.bf16.msra.mxu0 0
    %1177 = vmatprep.subr.bf16.mxu0 0
    %1178 = vmatpush1.bf16.msra.mxu0 0
    %1179 = vmatprep.subr.bf16.mxu0 0
    %1180 = vmatpush1.bf16.msra.mxu0 0
    %1181 = vmatprep.subr.bf16.mxu0 0
    %1182 = vmatpush1.bf16.msra.mxu0 0
    %1183 = vmatprep.subr.bf16.mxu0 0
    %1184 = vmatpush1.bf16.msra.mxu0 0
    %1185 = vmatprep.subr.bf16.mxu0 0
    %1186 = vmatpush1.bf16.msra.mxu0 0
    %1187 = vmatprep.subr.bf16.mxu0 0
    %1188 = vmatpush1.bf16.msra.mxu0 0
    %1189 = vmatprep.subr.bf16.mxu0 0
    %1190 = vmatpush1.bf16.msra.mxu0 0
    %1191 = vmatprep.subr.bf16.mxu0 0
    %1192 = vmatpush1.bf16.msra.mxu0 0
    %1193 = vmatprep.mubr.bf16.mxu0 0
    %1194 = vmatmul.mubr.bf16.gmra.mrb[0].mxu0 %v758
    %v1195 = vpop.f32.mrb[0].mxu0
    %v1196 = vadd.f32 0.0, %v1195
    %v1197 = vpop.f32.mrb[0].mxu0
    %v1198 = vadd.f32 0.0, %v1197
    %v1199 = vpop.f32.mrb[0].mxu0
    %v1200 = vpop.f32.mrb[0].mxu0
    %1201 = vdwg.mxu0
    %1202 = vmatprep.subr.bf16.mxu0 %v577
    %1203 = vmatpush1.bf16.msra.mxu0 %v576
    %1204 = vmatprep.subr.bf16.mxu0 %v804
    %1205 = vmatpush1.bf16.msra.mxu0 %v801
    %1206 = vmatprep.subr.bf16.mxu0 0
    %1207 = vmatpush1.bf16.msra.mxu0 0
    %1208 = vmatprep.subr.bf16.mxu0 0
    %1209 = vmatpush1.bf16.msra.mxu0 0
    %1210 = vmatprep.subr.bf16.mxu0 0
    %1211 = vmatpush1.bf16.msra.mxu0 0
    %1212 = vmatprep.subr.bf16.mxu0 0
    %1213 = vmatpush1.bf16.msra.mxu0 0
    %1214 = vmatprep.subr.bf16.mxu0 0
    %1215 = vmatpush1.bf16.msra.mxu0 0
    %1216 = vmatprep.subr.bf16.mxu0 0
    %1217 = vmatpush1.bf16.msra.mxu0 0
    %1218 = vmatprep.subr.bf16.mxu0 0
    %1219 = vmatpush1.bf16.msra.mxu0 0
    %1220 = vmatprep.subr.bf16.mxu0 0
    %1221 = vmatpush1.bf16.msra.mxu0 0
    %1222 = vmatprep.subr.bf16.mxu0 0
    %1223 = vmatpush1.bf16.msra.mxu0 0
    %1224 = vmatprep.subr.bf16.mxu0 0
    %1225 = vmatpush1.bf16.msra.mxu0 0
    %1226 = vmatprep.subr.bf16.mxu0 0
    %1227 = vmatpush1.bf16.msra.mxu0 0
    %1228 = vmatprep.subr.bf16.mxu0 0
    %1229 = vmatpush1.bf16.msra.mxu0 0
    %1230 = vmatprep.subr.bf16.mxu0 0
    %1231 = vmatpush1.bf16.msra.mxu0 0
    %1232 = vmatprep.subr.bf16.mxu0 0
    %1233 = vmatpush1.bf16.msra.mxu0 0
    %1234 = vmatprep.mubr.bf16.mxu0 0
    %1235 = vmatmul.mubr.bf16.gmra.mrb[0].mxu0 %v758
    %v1236 = vpop.f32.mrb[0].mxu0
    %v1237 = vadd.f32 0.0, %v1236
    %v1238 = vpop.f32.mrb[0].mxu0
    %v1239 = vadd.f32 0.0, %v1238
    %v1240 = vpop.f32.mrb[0].mxu0
    %v1241 = vpop.f32.mrb[0].mxu0
    %1242 = vdwg.mxu0
    %1243 = vmatprep.subr.bf16.mxu0 %v579
    %1244 = vmatpush1.bf16.msra.mxu0 %v578
    %1245 = vmatprep.subr.bf16.mxu0 %v810
    %1246 = vmatpush1.bf16.msra.mxu0 %v807
    %1247 = vmatprep.subr.bf16.mxu0 0
    %1248 = vmatpush1.bf16.msra.mxu0 0
    %1249 = vmatprep.subr.bf16.mxu0 0
    %1250 = vmatpush1.bf16.msra.mxu0 0
    %1251 = vmatprep.subr.bf16.mxu0 0
    %1252 = vmatpush1.bf16.msra.mxu0 0
    %1253 = vmatprep.subr.bf16.mxu0 0
    %1254 = vmatpush1.bf16.msra.mxu0 0
    %1255 = vmatprep.subr.bf16.mxu0 0
    %1256 = vmatpush1.bf16.msra.mxu0 0
    %1257 = vmatprep.subr.bf16.mxu0 0
    %1258 = vmatpush1.bf16.msra.mxu0 0
    %1259 = vmatprep.subr.bf16.mxu0 0
    %1260 = vmatpush1.bf16.msra.mxu0 0
    %1261 = vmatprep.subr.bf16.mxu0 0
    %1262 = vmatpush1.bf16.msra.mxu0 0
    %1263 = vmatprep.subr.bf16.mxu0 0
    %1264 = vmatpush1.bf16.msra.mxu0 0
    %1265 = vmatprep.subr.bf16.mxu0 0
    %1266 = vmatpush1.bf16.msra.mxu0 0
    %1267 = vmatprep.subr.bf16.mxu0 0
    %1268 = vmatpush1.bf16.msra.mxu0 0
    %1269 = vmatprep.subr.bf16.mxu0 0
    %1270 = vmatpush1.bf16.msra.mxu0 0
    %1271 = vmatprep.subr.bf16.mxu0 0
    %1272 = vmatpush1.bf16.msra.mxu0 0
    %1273 = vmatprep.subr.bf16.mxu0 0
    %1274 = vmatpush1.bf16.msra.mxu0 0
    %1275 = vmatprep.mubr.bf16.mxu0 0
    %1276 = vmatmul.mubr.bf16.gmra.mrb[0].mxu0 %v758
    %v1277 = vpop.f32.mrb[0].mxu0
    %v1278 = vadd.f32 0.0, %v1277
    %v1279 = vpop.f32.mrb[0].mxu0
    %v1280 = vadd.f32 0.0, %v1279
    %v1281 = vpop.f32.mrb[0].mxu0
    %v1282 = vpop.f32.mrb[0].mxu0
    %1283 = vdwg.mxu0
    %1284 = vmatprep.subr.bf16.mxu0 %v581
    %1285 = vmatpush1.bf16.msra.mxu0 %v580
    %1286 = vmatprep.subr.bf16.mxu0 %v816
    %1287 = vmatpush1.bf16.msra.mxu0 %v813
    %1288 = vmatprep.subr.bf16.mxu0 0
    %1289 = vmatpush1.bf16.msra.mxu0 0
    %1290 = vmatprep.subr.bf16.mxu0 0
    %1291 = vmatpush1.bf16.msra.mxu0 0
    %1292 = vmatprep.subr.bf16.mxu0 0
    %1293 = vmatpush1.bf16.msra.mxu0 0
    %1294 = vmatprep.subr.bf16.mxu0 0
    %1295 = vmatpush1.bf16.msra.mxu0 0
    %1296 = vmatprep.subr.bf16.mxu0 0
    %1297 = vmatpush1.bf16.msra.mxu0 0
    %1298 = vmatprep.subr.bf16.mxu0 0
    %1299 = vmatpush1.bf16.msra.mxu0 0
    %1300 = vmatprep.subr.bf16.mxu0 0
    %1301 = vmatpush1.bf16.msra.mxu0 0
    %1302 = vmatprep.subr.bf16.mxu0 0
    %1303 = vmatpush1.bf16.msra.mxu0 0
    %1304 = vmatprep.subr.bf16.mxu0 0
    %1305 = vmatpush1.bf16.msra.mxu0 0
    %1306 = vmatprep.subr.bf16.mxu0 0
    %1307 = vmatpush1.bf16.msra.mxu0 0
    %1308 = vmatprep.subr.bf16.mxu0 0
    %1309 = vmatpush1.bf16.msra.mxu0 0
    %1310 = vmatprep.subr.bf16.mxu0 0
    %1311 = vmatpush1.bf16.msra.mxu0 0
    %1312 = vmatprep.subr.bf16.mxu0 0
    %1313 = vmatpush1.bf16.msra.mxu0 0
    %1314 = vmatprep.subr.bf16.mxu0 0
    %1315 = vmatpush1.bf16.msra.mxu0 0
    %1316 = vmatprep.mubr.bf16.mxu0 0
    %1317 = vmatmul.mubr.bf16.gmra.mrb[0].mxu0 %v758
    %v1318 = vpop.f32.mrb[0].mxu0
    %v1319 = vadd.f32 0.0, %v1318
    %v1320 = vpop.f32.mrb[0].mxu0
    %v1321 = vadd.f32 0.0, %v1320
    %v1322 = vpop.f32.mrb[0].mxu0
    %v1323 = vpop.f32.mrb[0].mxu0
    %1324 = vdwg.mxu0
    %1325 = vmatprep.subr.bf16.mxu0 %v583
    %1326 = vmatpush1.bf16.msra.mxu0 %v582
    %1327 = vmatprep.subr.bf16.mxu0 %v822
    %1328 = vmatpush1.bf16.msra.mxu0 %v819
    %1329 = vmatprep.subr.bf16.mxu0 0
    %1330 = vmatpush1.bf16.msra.mxu0 0
    %1331 = vmatprep.subr.bf16.mxu0 0
    %1332 = vmatpush1.bf16.msra.mxu0 0
    %1333 = vmatprep.subr.bf16.mxu0 0
    %1334 = vmatpush1.bf16.msra.mxu0 0
    %1335 = vmatprep.subr.bf16.mxu0 0
    %1336 = vmatpush1.bf16.msra.mxu0 0
    %1337 = vmatprep.subr.bf16.mxu0 0
    %1338 = vmatpush1.bf16.msra.mxu0 0
    %1339 = vmatprep.subr.bf16.mxu0 0
    %1340 = vmatpush1.bf16.msra.mxu0 0
    %1341 = vmatprep.subr.bf16.mxu0 0
    %1342 = vmatpush1.bf16.msra.mxu0 0
    %1343 = vmatprep.subr.bf16.mxu0 0
    %1344 = vmatpush1.bf16.msra.mxu0 0
    %1345 = vmatprep.subr.bf16.mxu0 0
    %1346 = vmatpush1.bf16.msra.mxu0 0
    %1347 = vmatprep.subr.bf16.mxu0 0
    %1348 = vmatpush1.bf16.msra.mxu0 0
    %1349 = vmatprep.subr.bf16.mxu0 0
    %1350 = vmatpush1.bf16.msra.mxu0 0
    %1351 = vmatprep.subr.bf16.mxu0 0
    %1352 = vmatpush1.bf16.msra.mxu0 0
    %1353 = vmatprep.subr.bf16.mxu0 0
    %1354 = vmatpush1.bf16.msra.mxu0 0
    %1355 = vmatprep.subr.bf16.mxu0 0
    %1356 = vmatpush1.bf16.msra.mxu0 0
    %1357 = vmatprep.mubr.bf16.mxu0 0
    %1358 = vmatmul.mubr.bf16.gmra.mrb[0].mxu0 %v758
    %v1359 = vpop.f32.mrb[0].mxu0
    %v1360 = vadd.f32 0.0, %v1359
    %v1361 = vpop.f32.mrb[0].mxu0
    %v1362 = vadd.f32 0.0, %v1361
    %v1363 = vpop.f32.mrb[0].mxu0
    %v1364 = vpop.f32.mrb[0].mxu0
    %1365 = vdwg.mxu0
    %1366 = vmatprep.subr.bf16.mxu0 %v585
    %1367 = vmatpush1.bf16.msra.mxu0 %v584
    %1368 = vmatprep.subr.bf16.mxu0 %v828
    %1369 = vmatpush1.bf16.msra.mxu0 %v825
    %1370 = vmatprep.subr.bf16.mxu0 0
    %1371 = vmatpush1.bf16.msra.mxu0 0
    %1372 = vmatprep.subr.bf16.mxu0 0
    %1373 = vmatpush1.bf16.msra.mxu0 0
    %1374 = vmatprep.subr.bf16.mxu0 0
    %1375 = vmatpush1.bf16.msra.mxu0 0
    %1376 = vmatprep.subr.bf16.mxu0 0
    %1377 = vmatpush1.bf16.msra.mxu0 0
    %1378 = vmatprep.subr.bf16.mxu0 0
    %1379 = vmatpush1.bf16.msra.mxu0 0
    %1380 = vmatprep.subr.bf16.mxu0 0
    %1381 = vmatpush1.bf16.msra.mxu0 0
    %1382 = vmatprep.subr.bf16.mxu0 0
    %1383 = vmatpush1.bf16.msra.mxu0 0
    %1384 = vmatprep.subr.bf16.mxu0 0
    %1385 = vmatpush1.bf16.msra.mxu0 0
    %1386 = vmatprep.subr.bf16.mxu0 0
    %1387 = vmatpush1.bf16.msra.mxu0 0
    %1388 = vmatprep.subr.bf16.mxu0 0
    %1389 = vmatpush1.bf16.msra.mxu0 0
    %1390 = vmatprep.subr.bf16.mxu0 0
    %1391 = vmatpush1.bf16.msra.mxu0 0
    %1392 = vmatprep.subr.bf16.mxu0 0
    %1393 = vmatpush1.bf16.msra.mxu0 0
    %1394 = vmatprep.subr.bf16.mxu0 0
    %1395 = vmatpush1.bf16.msra.mxu0 0
    %1396 = vmatprep.subr.bf16.mxu0 0
    %1397 = vmatpush1.bf16.msra.mxu0 0
    %1398 = vmatprep.mubr.bf16.mxu0 0
    %1399 = vmatmul.mubr.bf16.gmra.mrb[0].mxu0 %v758
    %v1400 = vpop.f32.mrb[0].mxu0
    %v1401 = vadd.f32 0.0, %v1400
    %v1402 = vpop.f32.mrb[0].mxu0
    %v1403 = vadd.f32 0.0, %v1402
    %v1404 = vpop.f32.mrb[0].mxu0
    %v1405 = vpop.f32.mrb[0].mxu0
    %1406 = vdwg.mxu0
    %1407 = vmatprep.subr.bf16.mxu0 %v587
    %1408 = vmatpush1.bf16.msra.mxu0 %v586
    %1409 = vmatprep.subr.bf16.mxu0 %v834
    %1410 = vmatpush1.bf16.msra.mxu0 %v831
    %1411 = vmatprep.subr.bf16.mxu0 0
    %1412 = vmatpush1.bf16.msra.mxu0 0
    %1413 = vmatprep.subr.bf16.mxu0 0
    %1414 = vmatpush1.bf16.msra.mxu0 0
    %1415 = vmatprep.subr.bf16.mxu0 0
    %1416 = vmatpush1.bf16.msra.mxu0 0
    %1417 = vmatprep.subr.bf16.mxu0 0
    %1418 = vmatpush1.bf16.msra.mxu0 0
    %1419 = vmatprep.subr.bf16.mxu0 0
    %1420 = vmatpush1.bf16.msra.mxu0 0
    %1421 = vmatprep.subr.bf16.mxu0 0
    %1422 = vmatpush1.bf16.msra.mxu0 0
    %1423 = vmatprep.subr.bf16.mxu0 0
    %1424 = vmatpush1.bf16.msra.mxu0 0
    %1425 = vmatprep.subr.bf16.mxu0 0
    %1426 = vmatpush1.bf16.msra.mxu0 0
    %1427 = vmatprep.subr.bf16.mxu0 0
    %1428 = vmatpush1.bf16.msra.mxu0 0
    %1429 = vmatprep.subr.bf16.mxu0 0
    %1430 = vmatpush1.bf16.msra.mxu0 0
    %1431 = vmatprep.subr.bf16.mxu0 0
    %1432 = vmatpush1.bf16.msra.mxu0 0
    %1433 = vmatprep.subr.bf16.mxu0 0
    %1434 = vmatpush1.bf16.msra.mxu0 0
    %1435 = vmatprep.subr.bf16.mxu0 0
    %1436 = vmatpush1.bf16.msra.mxu0 0
    %1437 = vmatprep.subr.bf16.mxu0 0
    %1438 = vmatpush1.bf16.msra.mxu0 0
    %1439 = vmatprep.mubr.bf16.mxu0 0
    %1440 = vmatmul.mubr.bf16.gmra.mrb[0].mxu0 %v758
    %v1441 = vpop.f32.mrb[0].mxu0
    %v1442 = vadd.f32 0.0, %v1441
    %v1443 = vpop.f32.mrb[0].mxu0
    %v1444 = vadd.f32 0.0, %v1443
    %v1445 = vpop.f32.mrb[0].mxu0
    %v1446 = vpop.f32.mrb[0].mxu0
    %1447 = vdwg.mxu0
    %1448 = vmatprep.subr.bf16.mxu0 %v589
    %1449 = vmatpush1.bf16.msra.mxu0 %v588
    %1450 = vmatprep.subr.bf16.mxu0 %v840
    %1451 = vmatpush1.bf16.msra.mxu0 %v837
    %1452 = vmatprep.subr.bf16.mxu0 0
    %1453 = vmatpush1.bf16.msra.mxu0 0
    %1454 = vmatprep.subr.bf16.mxu0 0
    %1455 = vmatpush1.bf16.msra.mxu0 0
    %1456 = vmatprep.subr.bf16.mxu0 0
    %1457 = vmatpush1.bf16.msra.mxu0 0
    %1458 = vmatprep.subr.bf16.mxu0 0
    %1459 = vmatpush1.bf16.msra.mxu0 0
    %1460 = vmatprep.subr.bf16.mxu0 0
    %1461 = vmatpush1.bf16.msra.mxu0 0
    %1462 = vmatprep.subr.bf16.mxu0 0
    %1463 = vmatpush1.bf16.msra.mxu0 0
    %1464 = vmatprep.subr.bf16.mxu0 0
    %1465 = vmatpush1.bf16.msra.mxu0 0
    %1466 = vmatprep.subr.bf16.mxu0 0
    %1467 = vmatpush1.bf16.msra.mxu0 0
    %1468 = vmatprep.subr.bf16.mxu0 0
    %1469 = vmatpush1.bf16.msra.mxu0 0
    %1470 = vmatprep.subr.bf16.mxu0 0
    %1471 = vmatpush1.bf16.msra.mxu0 0
    %1472 = vmatprep.subr.bf16.mxu0 0
    %1473 = vmatpush1.bf16.msra.mxu0 0
    %1474 = vmatprep.subr.bf16.mxu0 0
    %1475 = vmatpush1.bf16.msra.mxu0 0
    %1476 = vmatprep.subr.bf16.mxu0 0
    %1477 = vmatpush1.bf16.msra.mxu0 0
    %1478 = vmatprep.subr.bf16.mxu0 0
    %1479 = vmatpush1.bf16.msra.mxu0 0
    %1480 = vmatprep.mubr.bf16.mxu0 0
    %1481 = vmatmul.mubr.bf16.gmra.mrb[0].mxu0 %v758
    %v1482 = vpop.f32.mrb[0].mxu0
    %v1483 = vadd.f32 0.0, %v1482
    %v1484 = vpop.f32.mrb[0].mxu0
    %v1485 = vadd.f32 0.0, %v1484
    %v1486 = vpop.f32.mrb[0].mxu0
    %v1487 = vpop.f32.mrb[0].mxu0
    %1488 = vdwg.mxu0
    %1489 = vmatprep.subr.bf16.mxu0 %v591
    %1490 = vmatpush1.bf16.msra.mxu0 %v590
    %1491 = vmatprep.subr.bf16.mxu0 %v846
    %1492 = vmatpush1.bf16.msra.mxu0 %v843
    %1493 = vmatprep.subr.bf16.mxu0 0
    %1494 = vmatpush1.bf16.msra.mxu0 0
    %1495 = vmatprep.subr.bf16.mxu0 0
    %1496 = vmatpush1.bf16.msra.mxu0 0
    %1497 = vmatprep.subr.bf16.mxu0 0
    %1498 = vmatpush1.bf16.msra.mxu0 0
    %1499 = vmatprep.subr.bf16.mxu0 0
    %1500 = vmatpush1.bf16.msra.mxu0 0
    %1501 = vmatprep.subr.bf16.mxu0 0
    %1502 = vmatpush1.bf16.msra.mxu0 0
    %1503 = vmatprep.subr.bf16.mxu0 0
    %1504 = vmatpush1.bf16.msra.mxu0 0
    %1505 = vmatprep.subr.bf16.mxu0 0
    %1506 = vmatpush1.bf16.msra.mxu0 0
    %1507 = vmatprep.subr.bf16.mxu0 0
    %1508 = vmatpush1.bf16.msra.mxu0 0
    %1509 = vmatprep.subr.bf16.mxu0 0
    %1510 = vmatpush1.bf16.msra.mxu0 0
    %1511 = vmatprep.subr.bf16.mxu0 0
    %1512 = vmatpush1.bf16.msra.mxu0 0
    %1513 = vmatprep.subr.bf16.mxu0 0
    %1514 = vmatpush1.bf16.msra.mxu0 0
    %1515 = vmatprep.subr.bf16.mxu0 0
    %1516 = vmatpush1.bf16.msra.mxu0 0
    %1517 = vmatprep.subr.bf16.mxu0 0
    %1518 = vmatpush1.bf16.msra.mxu0 0
    %1519 = vmatprep.subr.bf16.mxu0 0
    %1520 = vmatpush1.bf16.msra.mxu0 0
    %1521 = vmatprep.mubr.bf16.mxu0 0
    %1522 = vmatmul.mubr.bf16.gmra.mrb[0].mxu0 %v758
    %v1523 = vpop.f32.mrb[0].mxu0
    %v1524 = vadd.f32 0.0, %v1523
    %v1525 = vpop.f32.mrb[0].mxu0
    %v1526 = vadd.f32 0.0, %v1525
    %v1527 = vpop.f32.mrb[0].mxu0
    %v1528 = vpop.f32.mrb[0].mxu0
    %1529 = vdwg.mxu0
    %1530 = vmatprep.subr.bf16.mxu0 %v593
    %1531 = vmatpush1.bf16.msra.mxu0 %v592
    %1532 = vmatprep.subr.bf16.mxu0 %v852
    %1533 = vmatpush1.bf16.msra.mxu0 %v849
    %1534 = vmatprep.subr.bf16.mxu0 0
    %1535 = vmatpush1.bf16.msra.mxu0 0
    %1536 = vmatprep.subr.bf16.mxu0 0
    %1537 = vmatpush1.bf16.msra.mxu0 0
    %1538 = vmatprep.subr.bf16.mxu0 0
    %1539 = vmatpush1.bf16.msra.mxu0 0
    %1540 = vmatprep.subr.bf16.mxu0 0
    %1541 = vmatpush1.bf16.msra.mxu0 0
    %1542 = vmatprep.subr.bf16.mxu0 0
    %1543 = vmatpush1.bf16.msra.mxu0 0
    %1544 = vmatprep.subr.bf16.mxu0 0
    %1545 = vmatpush1.bf16.msra.mxu0 0
    %1546 = vmatprep.subr.bf16.mxu0 0
    %1547 = vmatpush1.bf16.msra.mxu0 0
    %1548 = vmatprep.subr.bf16.mxu0 0
    %1549 = vmatpush1.bf16.msra.mxu0 0
    %1550 = vmatprep.subr.bf16.mxu0 0
    %1551 = vmatpush1.bf16.msra.mxu0 0
    %1552 = vmatprep.subr.bf16.mxu0 0
    %1553 = vmatpush1.bf16.msra.mxu0 0
    %1554 = vmatprep.subr.bf16.mxu0 0
    %1555 = vmatpush1.bf16.msra.mxu0 0
    %1556 = vmatprep.subr.bf16.mxu0 0
    %1557 = vmatpush1.bf16.msra.mxu0 0
    %1558 = vmatprep.subr.bf16.mxu0 0
    %1559 = vmatpush1.bf16.msra.mxu0 0
    %1560 = vmatprep.subr.bf16.mxu0 0
    %1561 = vmatpush1.bf16.msra.mxu0 0
    %1562 = vmatprep.mubr.bf16.mxu0 0
    %1563 = vmatmul.mubr.bf16.gmra.mrb[0].mxu0 %v758
    %v1564 = vpop.f32.mrb[0].mxu0
    %v1565 = vadd.f32 0.0, %v1564
    %v1566 = vpop.f32.mrb[0].mxu0
    %v1567 = vadd.f32 0.0, %v1566
    %v1568 = vpop.f32.mrb[0].mxu0
    %v1569 = vpop.f32.mrb[0].mxu0
    %1570 = vdwg.mxu0
    %1571 = vmatprep.subr.bf16.mxu0 %v595
    %1572 = vmatpush1.bf16.msra.mxu0 %v594
    %1573 = vmatprep.subr.bf16.mxu0 %v858
    %1574 = vmatpush1.bf16.msra.mxu0 %v855
    %1575 = vmatprep.subr.bf16.mxu0 0
    %1576 = vmatpush1.bf16.msra.mxu0 0
    %1577 = vmatprep.subr.bf16.mxu0 0
    %1578 = vmatpush1.bf16.msra.mxu0 0
    %1579 = vmatprep.subr.bf16.mxu0 0
    %1580 = vmatpush1.bf16.msra.mxu0 0
    %1581 = vmatprep.subr.bf16.mxu0 0
    %1582 = vmatpush1.bf16.msra.mxu0 0
    %1583 = vmatprep.subr.bf16.mxu0 0
    %1584 = vmatpush1.bf16.msra.mxu0 0
    %1585 = vmatprep.subr.bf16.mxu0 0
    %1586 = vmatpush1.bf16.msra.mxu0 0
    %1587 = vmatprep.subr.bf16.mxu0 0
    %1588 = vmatpush1.bf16.msra.mxu0 0
    %1589 = vmatprep.subr.bf16.mxu0 0
    %1590 = vmatpush1.bf16.msra.mxu0 0
    %1591 = vmatprep.subr.bf16.mxu0 0
    %1592 = vmatpush1.bf16.msra.mxu0 0
    %1593 = vmatprep.subr.bf16.mxu0 0
    %1594 = vmatpush1.bf16.msra.mxu0 0
    %1595 = vmatprep.subr.bf16.mxu0 0
    %1596 = vmatpush1.bf16.msra.mxu0 0
    %1597 = vmatprep.subr.bf16.mxu0 0
    %1598 = vmatpush1.bf16.msra.mxu0 0
    %1599 = vmatprep.subr.bf16.mxu0 0
    %1600 = vmatpush1.bf16.msra.mxu0 0
    %1601 = vmatprep.subr.bf16.mxu0 0
    %1602 = vmatpush1.bf16.msra.mxu0 0
    %1603 = vmatprep.mubr.bf16.mxu0 0
    %1604 = vmatmul.mubr.bf16.gmra.mrb[0].mxu0 %v758
    %v1605 = vpop.f32.mrb[0].mxu0
    %v1606 = vadd.f32 0.0, %v1605
    %v1607 = vpop.f32.mrb[0].mxu0
    %v1608 = vadd.f32 0.0, %v1607
    %v1609 = vpop.f32.mrb[0].mxu0
    %v1610 = vpop.f32.mrb[0].mxu0
    %1611 = vdwg.mxu0
    %1612 = vmatprep.subr.bf16.mxu0 %v597
    %1613 = vmatpush1.bf16.msra.mxu0 %v596
    %1614 = vmatprep.subr.bf16.mxu0 %v864
    %1615 = vmatpush1.bf16.msra.mxu0 %v861
    %1616 = vmatprep.subr.bf16.mxu0 0
    %1617 = vmatpush1.bf16.msra.mxu0 0
    %1618 = vmatprep.subr.bf16.mxu0 0
    %1619 = vmatpush1.bf16.msra.mxu0 0
    %1620 = vmatprep.subr.bf16.mxu0 0
    %1621 = vmatpush1.bf16.msra.mxu0 0
    %1622 = vmatprep.subr.bf16.mxu0 0
    %1623 = vmatpush1.bf16.msra.mxu0 0
    %1624 = vmatprep.subr.bf16.mxu0 0
    %1625 = vmatpush1.bf16.msra.mxu0 0
    %1626 = vmatprep.subr.bf16.mxu0 0
    %1627 = vmatpush1.bf16.msra.mxu0 0
    %1628 = vmatprep.subr.bf16.mxu0 0
    %1629 = vmatpush1.bf16.msra.mxu0 0
    %1630 = vmatprep.subr.bf16.mxu0 0
    %1631 = vmatpush1.bf16.msra.mxu0 0
    %1632 = vmatprep.subr.bf16.mxu0 0
    %1633 = vmatpush1.bf16.msra.mxu0 0
    %1634 = vmatprep.subr.bf16.mxu0 0
    %1635 = vmatpush1.bf16.msra.mxu0 0
    %1636 = vmatprep.subr.bf16.mxu0 0
    %1637 = vmatpush1.bf16.msra.mxu0 0
    %1638 = vmatprep.subr.bf16.mxu0 0
    %1639 = vmatpush1.bf16.msra.mxu0 0
    %1640 = vmatprep.subr.bf16.mxu0 0
    %1641 = vmatpush1.bf16.msra.mxu0 0
    %1642 = vmatprep.subr.bf16.mxu0 0
    %1643 = vmatpush1.bf16.msra.mxu0 0
    %1644 = vmatprep.mubr.bf16.mxu0 0
    %1645 = vmatmul.mubr.bf16.gmra.mrb[0].mxu0 %v758
    %v1646 = vpop.f32.mrb[0].mxu0
    %v1647 = vadd.f32 0.0, %v1646
    %v1648 = vpop.f32.mrb[0].mxu0
    %v1649 = vadd.f32 0.0, %v1648
    %v1650 = vpop.f32.mrb[0].mxu0
    %v1651 = vpop.f32.mrb[0].mxu0
    %1652 = vdwg.mxu0
    %1653 = vmatprep.subr.bf16.mxu0 %v599
    %1654 = vmatpush1.bf16.msra.mxu0 %v598
    %1655 = vmatprep.subr.bf16.mxu0 %v870
    %1656 = vmatpush1.bf16.msra.mxu0 %v867
    %1657 = vmatprep.subr.bf16.mxu0 0
    %1658 = vmatpush1.bf16.msra.mxu0 0
    %1659 = vmatprep.subr.bf16.mxu0 0
    %1660 = vmatpush1.bf16.msra.mxu0 0
    %1661 = vmatprep.subr.bf16.mxu0 0
    %1662 = vmatpush1.bf16.msra.mxu0 0
    %1663 = vmatprep.subr.bf16.mxu0 0
    %1664 = vmatpush1.bf16.msra.mxu0 0
    %1665 = vmatprep.subr.bf16.mxu0 0
    %1666 = vmatpush1.bf16.msra.mxu0 0
    %1667 = vmatprep.subr.bf16.mxu0 0
    %1668 = vmatpush1.bf16.msra.mxu0 0
    %1669 = vmatprep.subr.bf16.mxu0 0
    %1670 = vmatpush1.bf16.msra.mxu0 0
    %1671 = vmatprep.subr.bf16.mxu0 0
    %1672 = vmatpush1.bf16.msra.mxu0 0
    %1673 = vmatprep.subr.bf16.mxu0 0
    %1674 = vmatpush1.bf16.msra.mxu0 0
    %1675 = vmatprep.subr.bf16.mxu0 0
    %1676 = vmatpush1.bf16.msra.mxu0 0
    %1677 = vmatprep.subr.bf16.mxu0 0
    %1678 = vmatpush1.bf16.msra.mxu0 0
    %1679 = vmatprep.subr.bf16.mxu0 0
    %1680 = vmatpush1.bf16.msra.mxu0 0
    %1681 = vmatprep.subr.bf16.mxu0 0
    %1682 = vmatpush1.bf16.msra.mxu0 0
    %1683 = vmatprep.subr.bf16.mxu0 0
    %1684 = vmatpush1.bf16.msra.mxu0 0
    %1685 = vmatprep.mubr.bf16.mxu0 0
    %1686 = vmatmul.mubr.bf16.gmra.mrb[0].mxu0 %v758
    %v1687 = vpop.f32.mrb[0].mxu0
    %v1688 = vadd.f32 0.0, %v1687
    %v1689 = vpop.f32.mrb[0].mxu0
    %v1690 = vadd.f32 0.0, %v1689
    %v1691 = vpop.f32.mrb[0].mxu0
    %v1692 = vpop.f32.mrb[0].mxu0
    %1693 = vdwg.mxu0
    %1694 = vmatprep.subr.bf16.mxu0 %v601
    %1695 = vmatpush1.bf16.msra.mxu0 %v600
    %1696 = vmatprep.subr.bf16.mxu0 %v876
    %1697 = vmatpush1.bf16.msra.mxu0 %v873
    %1698 = vmatprep.subr.bf16.mxu0 0
    %1699 = vmatpush1.bf16.msra.mxu0 0
    %1700 = vmatprep.subr.bf16.mxu0 0
    %1701 = vmatpush1.bf16.msra.mxu0 0
    %1702 = vmatprep.subr.bf16.mxu0 0
    %1703 = vmatpush1.bf16.msra.mxu0 0
    %1704 = vmatprep.subr.bf16.mxu0 0
    %1705 = vmatpush1.bf16.msra.mxu0 0
    %1706 = vmatprep.subr.bf16.mxu0 0
    %1707 = vmatpush1.bf16.msra.mxu0 0
    %1708 = vmatprep.subr.bf16.mxu0 0
    %1709 = vmatpush1.bf16.msra.mxu0 0
    %1710 = vmatprep.subr.bf16.mxu0 0
    %1711 = vmatpush1.bf16.msra.mxu0 0
    %1712 = vmatprep.subr.bf16.mxu0 0
    %1713 = vmatpush1.bf16.msra.mxu0 0
    %1714 = vmatprep.subr.bf16.mxu0 0
    %1715 = vmatpush1.bf16.msra.mxu0 0
    %1716 = vmatprep.subr.bf16.mxu0 0
    %1717 = vmatpush1.bf16.msra.mxu0 0
    %1718 = vmatprep.subr.bf16.mxu0 0
    %1719 = vmatpush1.bf16.msra.mxu0 0
    %1720 = vmatprep.subr.bf16.mxu0 0
    %1721 = vmatpush1.bf16.msra.mxu0 0
    %1722 = vmatprep.subr.bf16.mxu0 0
    %1723 = vmatpush1.bf16.msra.mxu0 0
    %1724 = vmatprep.subr.bf16.mxu0 0
    %1725 = vmatpush1.bf16.msra.mxu0 0
    %1726 = vmatprep.mubr.bf16.mxu0 0
    %1727 = vmatmul.mubr.bf16.gmra.mrb[0].mxu0 %v758
    %v1728 = vpop.f32.mrb[0].mxu0
    %v1729 = vadd.f32 0.0, %v1728
    %v1730 = vpop.f32.mrb[0].mxu0
    %v1731 = vadd.f32 0.0, %v1730
    %v1732 = vpop.f32.mrb[0].mxu0
    %v1733 = vpop.f32.mrb[0].mxu0
    %1734 = vdwg.mxu0
    %1735 = vmatprep.subr.bf16.mxu0 %v603
    %1736 = vmatpush1.bf16.msra.mxu0 %v602
    %1737 = vmatprep.subr.bf16.mxu0 %v882
    %1738 = vmatpush1.bf16.msra.mxu0 %v879
    %1739 = vmatprep.subr.bf16.mxu0 0
    %1740 = vmatpush1.bf16.msra.mxu0 0
    %1741 = vmatprep.subr.bf16.mxu0 0
    %1742 = vmatpush1.bf16.msra.mxu0 0
    %1743 = vmatprep.subr.bf16.mxu0 0
    %1744 = vmatpush1.bf16.msra.mxu0 0
    %1745 = vmatprep.subr.bf16.mxu0 0
    %1746 = vmatpush1.bf16.msra.mxu0 0
    %1747 = vmatprep.subr.bf16.mxu0 0
    %1748 = vmatpush1.bf16.msra.mxu0 0
    %1749 = vmatprep.subr.bf16.mxu0 0
    %1750 = vmatpush1.bf16.msra.mxu0 0
    %1751 = vmatprep.subr.bf16.mxu0 0
    %1752 = vmatpush1.bf16.msra.mxu0 0
    %1753 = vmatprep.subr.bf16.mxu0 0
    %1754 = vmatpush1.bf16.msra.mxu0 0
    %1755 = vmatprep.subr.bf16.mxu0 0
    %1756 = vmatpush1.bf16.msra.mxu0 0
    %1757 = vmatprep.subr.bf16.mxu0 0
    %1758 = vmatpush1.bf16.msra.mxu0 0
    %1759 = vmatprep.subr.bf16.mxu0 0
    %1760 = vmatpush1.bf16.msra.mxu0 0
    %1761 = vmatprep.subr.bf16.mxu0 0
    %1762 = vmatpush1.bf16.msra.mxu0 0
    %1763 = vmatprep.subr.bf16.mxu0 0
    %1764 = vmatpush1.bf16.msra.mxu0 0
    %1765 = vmatprep.subr.bf16.mxu0 0
    %1766 = vmatpush1.bf16.msra.mxu0 0
    %1767 = vmatprep.mubr.bf16.mxu0 0
    %1768 = vmatmul.mubr.bf16.gmra.mrb[0].mxu0 %v758
    %v1769 = vpop.f32.mrb[0].mxu0
    %v1770 = vadd.f32 0.0, %v1769
    %v1771 = vpop.f32.mrb[0].mxu0
    %v1772 = vadd.f32 0.0, %v1771
    %v1773 = vpop.f32.mrb[0].mxu0
    %v1774 = vpop.f32.mrb[0].mxu0
    %1775 = vdwg.mxu0
    %1776 = vmatprep.subr.bf16.mxu0 %v605
    %1777 = vmatpush1.bf16.msra.mxu0 %v604
    %1778 = vmatprep.subr.bf16.mxu0 %v888
    %1779 = vmatpush1.bf16.msra.mxu0 %v885
    %1780 = vmatprep.subr.bf16.mxu0 0
    %1781 = vmatpush1.bf16.msra.mxu0 0
    %1782 = vmatprep.subr.bf16.mxu0 0
    %1783 = vmatpush1.bf16.msra.mxu0 0
    %1784 = vmatprep.subr.bf16.mxu0 0
    %1785 = vmatpush1.bf16.msra.mxu0 0
    %1786 = vmatprep.subr.bf16.mxu0 0
    %1787 = vmatpush1.bf16.msra.mxu0 0
    %1788 = vmatprep.subr.bf16.mxu0 0
    %1789 = vmatpush1.bf16.msra.mxu0 0
    %1790 = vmatprep.subr.bf16.mxu0 0
    %1791 = vmatpush1.bf16.msra.mxu0 0
    %1792 = vmatprep.subr.bf16.mxu0 0
    %1793 = vmatpush1.bf16.msra.mxu0 0
    %1794 = vmatprep.subr.bf16.mxu0 0
    %1795 = vmatpush1.bf16.msra.mxu0 0
    %1796 = vmatprep.subr.bf16.mxu0 0
    %1797 = vmatpush1.bf16.msra.mxu0 0
    %1798 = vmatprep.subr.bf16.mxu0 0
    %1799 = vmatpush1.bf16.msra.mxu0 0
    %1800 = vmatprep.subr.bf16.mxu0 0
    %1801 = vmatpush1.bf16.msra.mxu0 0
    %1802 = vmatprep.subr.bf16.mxu0 0
    %1803 = vmatpush1.bf16.msra.mxu0 0
    %1804 = vmatprep.subr.bf16.mxu0 0
    %1805 = vmatpush1.bf16.msra.mxu0 0
    %1806 = vmatprep.subr.bf16.mxu0 0
    %1807 = vmatpush1.bf16.msra.mxu0 0
    %1808 = vmatprep.mubr.bf16.mxu0 0
    %1809 = vmatmul.mubr.bf16.gmra.mrb[0].mxu0 %v758
    %v1810 = vpop.f32.mrb[0].mxu0
    %v1811 = vadd.f32 0.0, %v1810
    %v1812 = vpop.f32.mrb[0].mxu0
    %v1813 = vadd.f32 0.0, %v1812
    %v1814 = vpop.f32.mrb[0].mxu0
    %v1815 = vpop.f32.mrb[0].mxu0
    %1816 = vdwg.mxu0
    %1817 = vmatprep.subr.bf16.mxu0 %v607
    %1818 = vmatpush1.bf16.msra.mxu0 %v606
    %1819 = vmatprep.subr.bf16.mxu0 %v894
    %1820 = vmatpush1.bf16.msra.mxu0 %v891
    %1821 = vmatprep.subr.bf16.mxu0 0
    %1822 = vmatpush1.bf16.msra.mxu0 0
    %1823 = vmatprep.subr.bf16.mxu0 0
    %1824 = vmatpush1.bf16.msra.mxu0 0
    %1825 = vmatprep.subr.bf16.mxu0 0
    %1826 = vmatpush1.bf16.msra.mxu0 0
    %1827 = vmatprep.subr.bf16.mxu0 0
    %1828 = vmatpush1.bf16.msra.mxu0 0
    %1829 = vmatprep.subr.bf16.mxu0 0
    %1830 = vmatpush1.bf16.msra.mxu0 0
    %1831 = vmatprep.subr.bf16.mxu0 0
    %1832 = vmatpush1.bf16.msra.mxu0 0
    %1833 = vmatprep.subr.bf16.mxu0 0
    %1834 = vmatpush1.bf16.msra.mxu0 0
    %1835 = vmatprep.subr.bf16.mxu0 0
    %1836 = vmatpush1.bf16.msra.mxu0 0
    %1837 = vmatprep.subr.bf16.mxu0 0
    %1838 = vmatpush1.bf16.msra.mxu0 0
    %1839 = vmatprep.subr.bf16.mxu0 0
    %1840 = vmatpush1.bf16.msra.mxu0 0
    %1841 = vmatprep.subr.bf16.mxu0 0
    %1842 = vmatpush1.bf16.msra.mxu0 0
    %1843 = vmatprep.subr.bf16.mxu0 0
    %1844 = vmatpush1.bf16.msra.mxu0 0
    %1845 = vmatprep.subr.bf16.mxu0 0
    %1846 = vmatpush1.bf16.msra.mxu0 0
    %1847 = vmatprep.subr.bf16.mxu0 0
    %1848 = vmatpush1.bf16.msra.mxu0 0
    %1849 = vmatprep.mubr.bf16.mxu0 0
    %1850 = vmatmul.mubr.bf16.gmra.mrb[0].mxu0 %v758
    %v1851 = vpop.f32.mrb[0].mxu0
    %v1852 = vadd.f32 0.0, %v1851
    %v1853 = vpop.f32.mrb[0].mxu0
    %v1854 = vadd.f32 0.0, %v1853
    %v1855 = vpop.f32.mrb[0].mxu0
    %v1856 = vpop.f32.mrb[0].mxu0
    %1857 = vdwg.mxu0
    %1858 = vmatprep.subr.bf16.mxu0 %v609
    %1859 = vmatpush1.bf16.msra.mxu0 %v608
    %1860 = vmatprep.subr.bf16.mxu0 %v900
    %1861 = vmatpush1.bf16.msra.mxu0 %v897
    %1862 = vmatprep.subr.bf16.mxu0 0
    %1863 = vmatpush1.bf16.msra.mxu0 0
    %1864 = vmatprep.subr.bf16.mxu0 0
    %1865 = vmatpush1.bf16.msra.mxu0 0
    %1866 = vmatprep.subr.bf16.mxu0 0
    %1867 = vmatpush1.bf16.msra.mxu0 0
    %1868 = vmatprep.subr.bf16.mxu0 0
    %1869 = vmatpush1.bf16.msra.mxu0 0
    %1870 = vmatprep.subr.bf16.mxu0 0
    %1871 = vmatpush1.bf16.msra.mxu0 0
    %1872 = vmatprep.subr.bf16.mxu0 0
    %1873 = vmatpush1.bf16.msra.mxu0 0
    %1874 = vmatprep.subr.bf16.mxu0 0
    %1875 = vmatpush1.bf16.msra.mxu0 0
    %1876 = vmatprep.subr.bf16.mxu0 0
    %1877 = vmatpush1.bf16.msra.mxu0 0
    %1878 = vmatprep.subr.bf16.mxu0 0
    %1879 = vmatpush1.bf16.msra.mxu0 0
    %1880 = vmatprep.subr.bf16.mxu0 0
    %1881 = vmatpush1.bf16.msra.mxu0 0
    %1882 = vmatprep.subr.bf16.mxu0 0
    %1883 = vmatpush1.bf16.msra.mxu0 0
    %1884 = vmatprep.subr.bf16.mxu0 0
    %1885 = vmatpush1.bf16.msra.mxu0 0
    %1886 = vmatprep.subr.bf16.mxu0 0
    %1887 = vmatpush1.bf16.msra.mxu0 0
    %1888 = vmatprep.subr.bf16.mxu0 0
    %1889 = vmatpush1.bf16.msra.mxu0 0
    %1890 = vmatprep.mubr.bf16.mxu0 0
    %1891 = vmatmul.mubr.bf16.gmra.mrb[0].mxu0 %v758
    %v1892 = vpop.f32.mrb[0].mxu0
    %v1893 = vadd.f32 0.0, %v1892
    %v1894 = vpop.f32.mrb[0].mxu0
    %v1895 = vadd.f32 0.0, %v1894
    %v1896 = vpop.f32.mrb[0].mxu0
    %v1897 = vpop.f32.mrb[0].mxu0
    %1898 = vdwg.mxu0
    %1899 = vmatprep.subr.bf16.mxu0 %v611
    %1900 = vmatpush1.bf16.msra.mxu0 %v610
    %1901 = vmatprep.subr.bf16.mxu0 %v906
    %1902 = vmatpush1.bf16.msra.mxu0 %v903
    %1903 = vmatprep.subr.bf16.mxu0 0
    %1904 = vmatpush1.bf16.msra.mxu0 0
    %1905 = vmatprep.subr.bf16.mxu0 0
    %1906 = vmatpush1.bf16.msra.mxu0 0
    %1907 = vmatprep.subr.bf16.mxu0 0
    %1908 = vmatpush1.bf16.msra.mxu0 0
    %1909 = vmatprep.subr.bf16.mxu0 0
    %1910 = vmatpush1.bf16.msra.mxu0 0
    %1911 = vmatprep.subr.bf16.mxu0 0
    %1912 = vmatpush1.bf16.msra.mxu0 0
    %1913 = vmatprep.subr.bf16.mxu0 0
    %1914 = vmatpush1.bf16.msra.mxu0 0
    %1915 = vmatprep.subr.bf16.mxu0 0
    %1916 = vmatpush1.bf16.msra.mxu0 0
    %1917 = vmatprep.subr.bf16.mxu0 0
    %1918 = vmatpush1.bf16.msra.mxu0 0
    %1919 = vmatprep.subr.bf16.mxu0 0
    %1920 = vmatpush1.bf16.msra.mxu0 0
    %1921 = vmatprep.subr.bf16.mxu0 0
    %1922 = vmatpush1.bf16.msra.mxu0 0
    %1923 = vmatprep.subr.bf16.mxu0 0
    %1924 = vmatpush1.bf16.msra.mxu0 0
    %1925 = vmatprep.subr.bf16.mxu0 0
    %1926 = vmatpush1.bf16.msra.mxu0 0
    %1927 = vmatprep.subr.bf16.mxu0 0
    %1928 = vmatpush1.bf16.msra.mxu0 0
    %1929 = vmatprep.subr.bf16.mxu0 0
    %1930 = vmatpush1.bf16.msra.mxu0 0
    %1931 = vmatprep.mubr.bf16.mxu0 0
    %1932 = vmatmul.mubr.bf16.gmra.mrb[0].mxu0 %v758
    %v1933 = vpop.f32.mrb[0].mxu0
    %v1934 = vadd.f32 0.0, %v1933
    %v1935 = vpop.f32.mrb[0].mxu0
    %v1936 = vadd.f32 0.0, %v1935
    %v1937 = vpop.f32.mrb[0].mxu0
    %v1938 = vpop.f32.mrb[0].mxu0
    %1939 = vdwg.mxu0
    %1940 = vmatprep.subr.bf16.mxu0 %v613
    %1941 = vmatpush1.bf16.msra.mxu0 %v612
    %1942 = vmatprep.subr.bf16.mxu0 %v912
    %1943 = vmatpush1.bf16.msra.mxu0 %v909
    %1944 = vmatprep.subr.bf16.mxu0 0
    %1945 = vmatpush1.bf16.msra.mxu0 0
    %1946 = vmatprep.subr.bf16.mxu0 0
    %1947 = vmatpush1.bf16.msra.mxu0 0
    %1948 = vmatprep.subr.bf16.mxu0 0
    %1949 = vmatpush1.bf16.msra.mxu0 0
    %1950 = vmatprep.subr.bf16.mxu0 0
    %1951 = vmatpush1.bf16.msra.mxu0 0
    %1952 = vmatprep.subr.bf16.mxu0 0
    %1953 = vmatpush1.bf16.msra.mxu0 0
    %1954 = vmatprep.subr.bf16.mxu0 0
    %1955 = vmatpush1.bf16.msra.mxu0 0
    %1956 = vmatprep.subr.bf16.mxu0 0
    %1957 = vmatpush1.bf16.msra.mxu0 0
    %1958 = vmatprep.subr.bf16.mxu0 0
    %1959 = vmatpush1.bf16.msra.mxu0 0
    %1960 = vmatprep.subr.bf16.mxu0 0
    %1961 = vmatpush1.bf16.msra.mxu0 0
    %1962 = vmatprep.subr.bf16.mxu0 0
    %1963 = vmatpush1.bf16.msra.mxu0 0
    %1964 = vmatprep.subr.bf16.mxu0 0
    %1965 = vmatpush1.bf16.msra.mxu0 0
    %1966 = vmatprep.subr.bf16.mxu0 0
    %1967 = vmatpush1.bf16.msra.mxu0 0
    %1968 = vmatprep.subr.bf16.mxu0 0
    %1969 = vmatpush1.bf16.msra.mxu0 0
    %1970 = vmatprep.subr.bf16.mxu0 0
    %1971 = vmatpush1.bf16.msra.mxu0 0
    %1972 = vmatprep.mubr.bf16.mxu0 0
    %1973 = vmatmul.mubr.bf16.gmra.mrb[0].mxu0 %v758
    %v1974 = vpop.f32.mrb[0].mxu0
    %v1975 = vadd.f32 0.0, %v1974
    %v1976 = vpop.f32.mrb[0].mxu0
    %v1977 = vadd.f32 0.0, %v1976
    %v1978 = vpop.f32.mrb[0].mxu0
    %v1979 = vpop.f32.mrb[0].mxu0
    %1980 = vdwg.mxu0
    %1981 = vmatprep.subr.bf16.mxu0 %v615
    %1982 = vmatpush1.bf16.msra.mxu0 %v614
    %1983 = vmatprep.subr.bf16.mxu0 %v918
    %1984 = vmatpush1.bf16.msra.mxu0 %v915
    %1985 = vmatprep.subr.bf16.mxu0 0
    %1986 = vmatpush1.bf16.msra.mxu0 0
    %1987 = vmatprep.subr.bf16.mxu0 0
    %1988 = vmatpush1.bf16.msra.mxu0 0
    %1989 = vmatprep.subr.bf16.mxu0 0
    %1990 = vmatpush1.bf16.msra.mxu0 0
    %1991 = vmatprep.subr.bf16.mxu0 0
    %1992 = vmatpush1.bf16.msra.mxu0 0
    %1993 = vmatprep.subr.bf16.mxu0 0
    %1994 = vmatpush1.bf16.msra.mxu0 0
    %1995 = vmatprep.subr.bf16.mxu0 0
    %1996 = vmatpush1.bf16.msra.mxu0 0
    %1997 = vmatprep.subr.bf16.mxu0 0
    %1998 = vmatpush1.bf16.msra.mxu0 0
    %1999 = vmatprep.subr.bf16.mxu0 0
    %2000 = vmatpush1.bf16.msra.mxu0 0
    %2001 = vmatprep.subr.bf16.mxu0 0
    %2002 = vmatpush1.bf16.msra.mxu0 0
    %2003 = vmatprep.subr.bf16.mxu0 0
    %2004 = vmatpush1.bf16.msra.mxu0 0
    %2005 = vmatprep.subr.bf16.mxu0 0
    %2006 = vmatpush1.bf16.msra.mxu0 0
    %2007 = vmatprep.subr.bf16.mxu0 0
    %2008 = vmatpush1.bf16.msra.mxu0 0
    %2009 = vmatprep.subr.bf16.mxu0 0
    %2010 = vmatpush1.bf16.msra.mxu0 0
    %2011 = vmatprep.subr.bf16.mxu0 0
    %2012 = vmatpush1.bf16.msra.mxu0 0
    %2013 = vmatprep.mubr.bf16.mxu0 0
    %2014 = vmatmul.mubr.bf16.gmra.mrb[0].mxu0 %v758
    %v2015 = vpop.f32.mrb[0].mxu0
    %v2016 = vadd.f32 0.0, %v2015
    %v2017 = vpop.f32.mrb[0].mxu0
    %v2018 = vadd.f32 0.0, %v2017
    %v2019 = vpop.f32.mrb[0].mxu0
    %v2020 = vpop.f32.mrb[0].mxu0
    %2021 = vdwg.mxu0
    %2022 = vmatprep.subr.bf16.mxu0 %v617
    %2023 = vmatpush1.bf16.msra.mxu0 %v616
    %2024 = vmatprep.subr.bf16.mxu0 %v924
    %2025 = vmatpush1.bf16.msra.mxu0 %v921
    %2026 = vmatprep.subr.bf16.mxu0 0
    %2027 = vmatpush1.bf16.msra.mxu0 0
    %2028 = vmatprep.subr.bf16.mxu0 0
    %2029 = vmatpush1.bf16.msra.mxu0 0
    %2030 = vmatprep.subr.bf16.mxu0 0
    %2031 = vmatpush1.bf16.msra.mxu0 0
    %2032 = vmatprep.subr.bf16.mxu0 0
    %2033 = vmatpush1.bf16.msra.mxu0 0
    %2034 = vmatprep.subr.bf16.mxu0 0
    %2035 = vmatpush1.bf16.msra.mxu0 0
    %2036 = vmatprep.subr.bf16.mxu0 0
    %2037 = vmatpush1.bf16.msra.mxu0 0
    %2038 = vmatprep.subr.bf16.mxu0 0
    %2039 = vmatpush1.bf16.msra.mxu0 0
    %2040 = vmatprep.subr.bf16.mxu0 0
    %2041 = vmatpush1.bf16.msra.mxu0 0
    %2042 = vmatprep.subr.bf16.mxu0 0
    %2043 = vmatpush1.bf16.msra.mxu0 0
    %2044 = vmatprep.subr.bf16.mxu0 0
    %2045 = vmatpush1.bf16.msra.mxu0 0
    %2046 = vmatprep.subr.bf16.mxu0 0
    %2047 = vmatpush1.bf16.msra.mxu0 0
    %2048 = vmatprep.subr.bf16.mxu0 0
    %2049 = vmatpush1.bf16.msra.mxu0 0
    %2050 = vmatprep.subr.bf16.mxu0 0
    %2051 = vmatpush1.bf16.msra.mxu0 0
    %2052 = vmatprep.subr.bf16.mxu0 0
    %2053 = vmatpush1.bf16.msra.mxu0 0
    %2054 = vmatprep.mubr.bf16.mxu0 0
    %2055 = vmatmul.mubr.bf16.gmra.mrb[0].mxu0 %v758
    %v2056 = vpop.f32.mrb[0].mxu0
    %v2057 = vadd.f32 0.0, %v2056
    %v2058 = vpop.f32.mrb[0].mxu0
    %v2059 = vadd.f32 0.0, %v2058
    %v2060 = vpop.f32.mrb[0].mxu0
    %v2061 = vpop.f32.mrb[0].mxu0
    %2062 = vdwg.mxu0
    %2063 = vmatprep.subr.bf16.mxu0 %v619
    %2064 = vmatpush1.bf16.msra.mxu0 %v618
    %2065 = vmatprep.subr.bf16.mxu0 %v930
    %2066 = vmatpush1.bf16.msra.mxu0 %v927
    %2067 = vmatprep.subr.bf16.mxu0 0
    %2068 = vmatpush1.bf16.msra.mxu0 0
    %2069 = vmatprep.subr.bf16.mxu0 0
    %2070 = vmatpush1.bf16.msra.mxu0 0
    %2071 = vmatprep.subr.bf16.mxu0 0
    %2072 = vmatpush1.bf16.msra.mxu0 0
    %2073 = vmatprep.subr.bf16.mxu0 0
    %2074 = vmatpush1.bf16.msra.mxu0 0
    %2075 = vmatprep.subr.bf16.mxu0 0
    %2076 = vmatpush1.bf16.msra.mxu0 0
    %2077 = vmatprep.subr.bf16.mxu0 0
    %2078 = vmatpush1.bf16.msra.mxu0 0
    %2079 = vmatprep.subr.bf16.mxu0 0
    %2080 = vmatpush1.bf16.msra.mxu0 0
    %2081 = vmatprep.subr.bf16.mxu0 0
    %2082 = vmatpush1.bf16.msra.mxu0 0
    %2083 = vmatprep.subr.bf16.mxu0 0
    %2084 = vmatpush1.bf16.msra.mxu0 0
    %2085 = vmatprep.subr.bf16.mxu0 0
    %2086 = vmatpush1.bf16.msra.mxu0 0
    %2087 = vmatprep.subr.bf16.mxu0 0
    %2088 = vmatpush1.bf16.msra.mxu0 0
    %2089 = vmatprep.subr.bf16.mxu0 0
    %2090 = vmatpush1.bf16.msra.mxu0 0
    %2091 = vmatprep.subr.bf16.mxu0 0
    %2092 = vmatpush1.bf16.msra.mxu0 0
    %2093 = vmatprep.subr.bf16.mxu0 0
    %2094 = vmatpush1.bf16.msra.mxu0 0
    %2095 = vmatprep.mubr.bf16.mxu0 0
    %2096 = vmatmul.mubr.bf16.gmra.mrb[0].mxu0 %v758
    %v2097 = vpop.f32.mrb[0].mxu0
    %v2098 = vadd.f32 0.0, %v2097
    %v2099 = vpop.f32.mrb[0].mxu0
    %v2100 = vadd.f32 0.0, %v2099
    %v2101 = vpop.f32.mrb[0].mxu0
    %v2102 = vpop.f32.mrb[0].mxu0
    %2103 = vdwg.mxu0
    %2104 = vmatprep.subr.bf16.mxu0 %v621
    %2105 = vmatpush1.bf16.msra.mxu0 %v620
    %2106 = vmatprep.subr.bf16.mxu0 %v936
    %2107 = vmatpush1.bf16.msra.mxu0 %v933
    %2108 = vmatprep.subr.bf16.mxu0 0
    %2109 = vmatpush1.bf16.msra.mxu0 0
    %2110 = vmatprep.subr.bf16.mxu0 0
    %2111 = vmatpush1.bf16.msra.mxu0 0
    %2112 = vmatprep.subr.bf16.mxu0 0
    %2113 = vmatpush1.bf16.msra.mxu0 0
    %2114 = vmatprep.subr.bf16.mxu0 0
    %2115 = vmatpush1.bf16.msra.mxu0 0
    %2116 = vmatprep.subr.bf16.mxu0 0
    %2117 = vmatpush1.bf16.msra.mxu0 0
    %2118 = vmatprep.subr.bf16.mxu0 0
    %2119 = vmatpush1.bf16.msra.mxu0 0
    %2120 = vmatprep.subr.bf16.mxu0 0
    %2121 = vmatpush1.bf16.msra.mxu0 0
    %2122 = vmatprep.subr.bf16.mxu0 0
    %2123 = vmatpush1.bf16.msra.mxu0 0
    %2124 = vmatprep.subr.bf16.mxu0 0
    %2125 = vmatpush1.bf16.msra.mxu0 0
    %2126 = vmatprep.subr.bf16.mxu0 0
    %2127 = vmatpush1.bf16.msra.mxu0 0
    %2128 = vmatprep.subr.bf16.mxu0 0
    %2129 = vmatpush1.bf16.msra.mxu0 0
    %2130 = vmatprep.subr.bf16.mxu0 0
    %2131 = vmatpush1.bf16.msra.mxu0 0
    %2132 = vmatprep.subr.bf16.mxu0 0
    %2133 = vmatpush1.bf16.msra.mxu0 0
    %2134 = vmatprep.subr.bf16.mxu0 0
    %2135 = vmatpush1.bf16.msra.mxu0 0
    %2136 = vmatprep.mubr.bf16.mxu0 0
    %2137 = vmatmul.mubr.bf16.gmra.mrb[0].mxu0 %v758
    %v2138 = vpop.f32.mrb[0].mxu0
    %v2139 = vadd.f32 0.0, %v2138
    %v2140 = vpop.f32.mrb[0].mxu0
    %v2141 = vadd.f32 0.0, %v2140
    %v2142 = vpop.f32.mrb[0].mxu0
    %v2143 = vpop.f32.mrb[0].mxu0
    %2144 = vdwg.mxu0
    %2145 = vmatprep.subr.bf16.mxu0 %v623
    %2146 = vmatpush1.bf16.msra.mxu0 %v622
    %2147 = vmatprep.subr.bf16.mxu0 %v942
    %2148 = vmatpush1.bf16.msra.mxu0 %v939
    %2149 = vmatprep.subr.bf16.mxu0 0
    %2150 = vmatpush1.bf16.msra.mxu0 0
    %2151 = vmatprep.subr.bf16.mxu0 0
    %2152 = vmatpush1.bf16.msra.mxu0 0
    %2153 = vmatprep.subr.bf16.mxu0 0
    %2154 = vmatpush1.bf16.msra.mxu0 0
    %2155 = vmatprep.subr.bf16.mxu0 0
    %2156 = vmatpush1.bf16.msra.mxu0 0
    %2157 = vmatprep.subr.bf16.mxu0 0
    %2158 = vmatpush1.bf16.msra.mxu0 0
    %2159 = vmatprep.subr.bf16.mxu0 0
    %2160 = vmatpush1.bf16.msra.mxu0 0
    %2161 = vmatprep.subr.bf16.mxu0 0
    %2162 = vmatpush1.bf16.msra.mxu0 0
    %2163 = vmatprep.subr.bf16.mxu0 0
    %2164 = vmatpush1.bf16.msra.mxu0 0
    %2165 = vmatprep.subr.bf16.mxu0 0
    %2166 = vmatpush1.bf16.msra.mxu0 0
    %2167 = vmatprep.subr.bf16.mxu0 0
    %2168 = vmatpush1.bf16.msra.mxu0 0
    %2169 = vmatprep.subr.bf16.mxu0 0
    %2170 = vmatpush1.bf16.msra.mxu0 0
    %2171 = vmatprep.subr.bf16.mxu0 0
    %2172 = vmatpush1.bf16.msra.mxu0 0
    %2173 = vmatprep.subr.bf16.mxu0 0
    %2174 = vmatpush1.bf16.msra.mxu0 0
    %2175 = vmatprep.subr.bf16.mxu0 0
    %2176 = vmatpush1.bf16.msra.mxu0 0
    %2177 = vmatprep.mubr.bf16.mxu0 0
    %2178 = vmatmul.mubr.bf16.gmra.mrb[0].mxu0 %v758
    %v2179 = vpop.f32.mrb[0].mxu0
    %v2180 = vadd.f32 0.0, %v2179
    %v2181 = vpop.f32.mrb[0].mxu0
    %v2182 = vadd.f32 0.0, %v2181
    %v2183 = vpop.f32.mrb[0].mxu0
    %v2184 = vpop.f32.mrb[0].mxu0
    %2185 = vdwg.mxu0
    %2186 = vmatprep.subr.bf16.mxu0 %v625
    %2187 = vmatpush1.bf16.msra.mxu0 %v624
    %2188 = vmatprep.subr.bf16.mxu0 %v948
    %2189 = vmatpush1.bf16.msra.mxu0 %v945
    %2190 = vmatprep.subr.bf16.mxu0 0
    %2191 = vmatpush1.bf16.msra.mxu0 0
    %2192 = vmatprep.subr.bf16.mxu0 0
    %2193 = vmatpush1.bf16.msra.mxu0 0
    %2194 = vmatprep.subr.bf16.mxu0 0
    %2195 = vmatpush1.bf16.msra.mxu0 0
    %2196 = vmatprep.subr.bf16.mxu0 0
    %2197 = vmatpush1.bf16.msra.mxu0 0
    %2198 = vmatprep.subr.bf16.mxu0 0
    %2199 = vmatpush1.bf16.msra.mxu0 0
    %2200 = vmatprep.subr.bf16.mxu0 0
    %2201 = vmatpush1.bf16.msra.mxu0 0
    %2202 = vmatprep.subr.bf16.mxu0 0
    %2203 = vmatpush1.bf16.msra.mxu0 0
    %2204 = vmatprep.subr.bf16.mxu0 0
    %2205 = vmatpush1.bf16.msra.mxu0 0
    %2206 = vmatprep.subr.bf16.mxu0 0
    %2207 = vmatpush1.bf16.msra.mxu0 0
    %2208 = vmatprep.subr.bf16.mxu0 0
    %2209 = vmatpush1.bf16.msra.mxu0 0
    %2210 = vmatprep.subr.bf16.mxu0 0
    %2211 = vmatpush1.bf16.msra.mxu0 0
    %2212 = vmatprep.subr.bf16.mxu0 0
    %2213 = vmatpush1.bf16.msra.mxu0 0
    %2214 = vmatprep.subr.bf16.mxu0 0
    %2215 = vmatpush1.bf16.msra.mxu0 0
    %2216 = vmatprep.subr.bf16.mxu0 0
    %2217 = vmatpush1.bf16.msra.mxu0 0
    %2218 = vmatprep.mubr.bf16.mxu0 0
    %2219 = vmatmul.mubr.bf16.gmra.mrb[0].mxu0 %v758
    %v2220 = vpop.f32.mrb[0].mxu0
    %v2221 = vadd.f32 0.0, %v2220
    %v2222 = vpop.f32.mrb[0].mxu0
    %v2223 = vadd.f32 0.0, %v2222
    %v2224 = vpop.f32.mrb[0].mxu0
    %v2225 = vpop.f32.mrb[0].mxu0
    %2226 = vdwg.mxu0
    %2227 = vmatprep.subr.bf16.mxu0 %v627
    %2228 = vmatpush1.bf16.msra.mxu0 %v626
    %2229 = vmatprep.subr.bf16.mxu0 %v954
    %2230 = vmatpush1.bf16.msra.mxu0 %v951
    %2231 = vmatprep.subr.bf16.mxu0 0
    %2232 = vmatpush1.bf16.msra.mxu0 0
    %2233 = vmatprep.subr.bf16.mxu0 0
    %2234 = vmatpush1.bf16.msra.mxu0 0
    %2235 = vmatprep.subr.bf16.mxu0 0
    %2236 = vmatpush1.bf16.msra.mxu0 0
    %2237 = vmatprep.subr.bf16.mxu0 0
    %2238 = vmatpush1.bf16.msra.mxu0 0
    %2239 = vmatprep.subr.bf16.mxu0 0
    %2240 = vmatpush1.bf16.msra.mxu0 0
    %2241 = vmatprep.subr.bf16.mxu0 0
    %2242 = vmatpush1.bf16.msra.mxu0 0
    %2243 = vmatprep.subr.bf16.mxu0 0
    %2244 = vmatpush1.bf16.msra.mxu0 0
    %2245 = vmatprep.subr.bf16.mxu0 0
    %2246 = vmatpush1.bf16.msra.mxu0 0
    %2247 = vmatprep.subr.bf16.mxu0 0
    %2248 = vmatpush1.bf16.msra.mxu0 0
    %2249 = vmatprep.subr.bf16.mxu0 0
    %2250 = vmatpush1.bf16.msra.mxu0 0
    %2251 = vmatprep.subr.bf16.mxu0 0
    %2252 = vmatpush1.bf16.msra.mxu0 0
    %2253 = vmatprep.subr.bf16.mxu0 0
    %2254 = vmatpush1.bf16.msra.mxu0 0
    %2255 = vmatprep.subr.bf16.mxu0 0
    %2256 = vmatpush1.bf16.msra.mxu0 0
    %2257 = vmatprep.subr.bf16.mxu0 0
    %2258 = vmatpush1.bf16.msra.mxu0 0
    %2259 = vmatprep.mubr.bf16.mxu0 0
    %2260 = vmatmul.mubr.bf16.gmra.mrb[0].mxu0 %v758
    %v2261 = vpop.f32.mrb[0].mxu0
    %v2262 = vadd.f32 0.0, %v2261
    %v2263 = vpop.f32.mrb[0].mxu0
    %v2264 = vadd.f32 0.0, %v2263
    %v2265 = vpop.f32.mrb[0].mxu0
    %v2266 = vpop.f32.mrb[0].mxu0
    %2267 = vdwg.mxu0
    %v2268 = vpack.c.bf16 %v991, %v991
    %v2269 = vpack.c.bf16 %v993, %v993
    %v2270 = vpack.c.bf16 %v1032, %v1032
    %v2271 = vpack.c.bf16 %v1034, %v1034
    %v2272 = vpack.c.bf16 %v1073, %v1073
    %v2273 = vpack.c.bf16 %v1075, %v1075
    %v2274 = vpack.c.bf16 %v1114, %v1114
    %v2275 = vpack.c.bf16 %v1116, %v1116
    %v2276 = vpack.c.bf16 %v1155, %v1155
    %v2277 = vpack.c.bf16 %v1157, %v1157
    %v2278 = vpack.c.bf16 %v1196, %v1196
    %v2279 = vpack.c.bf16 %v1198, %v1198
    %v2280 = vpack.c.bf16 %v1237, %v1237
    %v2281 = vpack.c.bf16 %v1239, %v1239
    %v2282 = vpack.c.bf16 %v1278, %v1278
    %v2283 = vpack.c.bf16 %v1280, %v1280
    %v2284 = vpack.c.bf16 %v1319, %v1319
    %v2285 = vpack.c.bf16 %v1321, %v1321
    %v2286 = vpack.c.bf16 %v1360, %v1360
    %v2287 = vpack.c.bf16 %v1362, %v1362
    %v2288 = vpack.c.bf16 %v1401, %v1401
    %v2289 = vpack.c.bf16 %v1403, %v1403
    %v2290 = vpack.c.bf16 %v1442, %v1442
    %v2291 = vpack.c.bf16 %v1444, %v1444
    %v2292 = vpack.c.bf16 %v1483, %v1483
    %v2293 = vpack.c.bf16 %v1485, %v1485
    %v2294 = vpack.c.bf16 %v1524, %v1524
    %v2295 = vpack.c.bf16 %v1526, %v1526
    %v2296 = vpack.c.bf16 %v1565, %v1565
    %v2297 = vpack.c.bf16 %v1567, %v1567
    %v2298 = vpack.c.bf16 %v1606, %v1606
    %v2299 = vpack.c.bf16 %v1608, %v1608
    %v2300 = vpack.c.bf16 %v1647, %v1647
    %v2301 = vpack.c.bf16 %v1649, %v1649
    %v2302 = vpack.c.bf16 %v1688, %v1688
    %v2303 = vpack.c.bf16 %v1690, %v1690
    %v2304 = vpack.c.bf16 %v1729, %v1729
    %v2305 = vpack.c.bf16 %v1731, %v1731
    %v2306 = vpack.c.bf16 %v1770, %v1770
    %v2307 = vpack.c.bf16 %v1772, %v1772
    %v2308 = vpack.c.bf16 %v1811, %v1811
    %v2309 = vpack.c.bf16 %v1813, %v1813
    %v2310 = vpack.c.bf16 %v1852, %v1852
    %v2311 = vpack.c.bf16 %v1854, %v1854
    %v2312 = vpack.c.bf16 %v1893, %v1893
    %v2313 = vpack.c.bf16 %v1895, %v1895
    %v2314 = vpack.c.bf16 %v1934, %v1934
    %v2315 = vpack.c.bf16 %v1936, %v1936
    %v2316 = vpack.c.bf16 %v1975, %v1975
    %v2317 = vpack.c.bf16 %v1977, %v1977
    %v2318 = vpack.c.bf16 %v2016, %v2016
    %v2319 = vpack.c.bf16 %v2018, %v2018
    %v2320 = vpack.c.bf16 %v2057, %v2057
    %v2321 = vpack.c.bf16 %v2059, %v2059
    %v2322 = vpack.c.bf16 %v2098, %v2098
    %v2323 = vpack.c.bf16 %v2100, %v2100
    %v2324 = vpack.c.bf16 %v2139, %v2139
    %v2325 = vpack.c.bf16 %v2141, %v2141
    %v2326 = vpack.c.bf16 %v2180, %v2180
    %v2327 = vpack.c.bf16 %v2182, %v2182
    %v2328 = vpack.c.bf16 %v2221, %v2221
    %v2329 = vpack.c.bf16 %v2223, %v2223
    %v2330 = vpack.c.bf16 %v2262, %v2262
    %v2331 = vpack.c.bf16 %v2264, %v2264
    %v2396 = vcombine.low %v2268, %v2269
    %v2397 = vcombine.low %v2270, %v2271
    %v2398 = vcombine.low %v2272, %v2273
    %v2399 = vcombine.low %v2274, %v2275
    %v2401 = vunpack.c.l.s4 1966171168
    %v2402 = vunpack.c.0.s8 %v2401
    %v2403 = vlaneseq
    %v2404 = vshrl.u32 %v2403, 7
    %v2405 = vsub.s32 %v2402, %v2404
    %v2406 = vrot.slane %v2396, %v2405
    %v2408 = vunpack.c.l.s4 1966171168
    %v2409 = vunpack.c.0.s8 %v2408
    %v2410 = vlaneseq
    %v2411 = vshrl.u32 %v2410, 7
    %v2412 = vsub.s32 %v2409, %v2411
    %v2413 = vrot.slane %v2397, %v2412
    %v2415 = vunpack.c.l.s4 1966171168
    %v2416 = vunpack.c.0.s8 %v2415
    %v2417 = vlaneseq
    %v2418 = vshrl.u32 %v2417, 7
    %v2419 = vsub.s32 %v2416, %v2418
    %v2420 = vrot.slane %v2398, %v2419
    %v2422 = vunpack.c.l.s4 1966171168
    %v2423 = vunpack.c.0.s8 %v2422
    %v2424 = vlaneseq
    %v2425 = vshrl.u32 %v2424, 7
    %v2426 = vsub.s32 %v2423, %v2425
    %v2427 = vrot.slane %v2399, %v2426
    %v2428 = vcombine.low %v2406, %v2413
    %v2429 = vcombine.low %v2420, %v2427
    %v2431 = vunpack.c.l.s4 1966171168
    %v2432 = vunpack.c.0.s8 %v2431
    %v2433 = vlaneseq
    %v2434 = vshrl.u32 %v2433, 7
    %v2435 = vsub.s32 %v2432, %v2434
    %v2436 = vrot.slane %v2428, %v2435
    %v2438 = vunpack.c.l.s4 1966171168
    %v2439 = vunpack.c.0.s8 %v2438
    %v2440 = vlaneseq
    %v2441 = vshrl.u32 %v2440, 7
    %v2442 = vsub.s32 %v2439, %v2441
    %v2443 = vrot.slane %v2429, %v2442
    %v2444 = vcombine.low %v2436, %v2443
    %v2445 = vcombine.low %v2276, %v2277
    %v2446 = vcombine.low %v2278, %v2279
    %v2447 = vcombine.low %v2280, %v2281
    %v2448 = vcombine.low %v2282, %v2283
    %v2450 = vunpack.c.l.s4 1966171168
    %v2451 = vunpack.c.0.s8 %v2450
    %v2452 = vlaneseq
    %v2453 = vshrl.u32 %v2452, 7
    %v2454 = vsub.s32 %v2451, %v2453
    %v2455 = vrot.slane %v2445, %v2454
    %v2457 = vunpack.c.l.s4 1966171168
    %v2458 = vunpack.c.0.s8 %v2457
    %v2459 = vlaneseq
    %v2460 = vshrl.u32 %v2459, 7
    %v2461 = vsub.s32 %v2458, %v2460
    %v2462 = vrot.slane %v2446, %v2461
    %v2464 = vunpack.c.l.s4 1966171168
    %v2465 = vunpack.c.0.s8 %v2464
    %v2466 = vlaneseq
    %v2467 = vshrl.u32 %v2466, 7
    %v2468 = vsub.s32 %v2465, %v2467
    %v2469 = vrot.slane %v2447, %v2468
    %v2471 = vunpack.c.l.s4 1966171168
    %v2472 = vunpack.c.0.s8 %v2471
    %v2473 = vlaneseq
    %v2474 = vshrl.u32 %v2473, 7
    %v2475 = vsub.s32 %v2472, %v2474
    %v2476 = vrot.slane %v2448, %v2475
    %v2477 = vcombine.low %v2455, %v2462
    %v2478 = vcombine.low %v2469, %v2476
    %v2480 = vunpack.c.l.s4 1966171168
    %v2481 = vunpack.c.0.s8 %v2480
    %v2482 = vlaneseq
    %v2483 = vshrl.u32 %v2482, 7
    %v2484 = vsub.s32 %v2481, %v2483
    %v2485 = vrot.slane %v2477, %v2484
    %v2487 = vunpack.c.l.s4 1966171168
    %v2488 = vunpack.c.0.s8 %v2487
    %v2489 = vlaneseq
    %v2490 = vshrl.u32 %v2489, 7
    %v2491 = vsub.s32 %v2488, %v2490
    %v2492 = vrot.slane %v2478, %v2491
    %v2493 = vcombine.low %v2485, %v2492
    %v2494 = vcombine.low %v2284, %v2285
    %v2495 = vcombine.low %v2286, %v2287
    %v2496 = vcombine.low %v2288, %v2289
    %v2497 = vcombine.low %v2290, %v2291
    %v2499 = vunpack.c.l.s4 1966171168
    %v2500 = vunpack.c.0.s8 %v2499
    %v2501 = vlaneseq
    %v2502 = vshrl.u32 %v2501, 7
    %v2503 = vsub.s32 %v2500, %v2502
    %v2504 = vrot.slane %v2494, %v2503
    %v2506 = vunpack.c.l.s4 1966171168
    %v2507 = vunpack.c.0.s8 %v2506
    %v2508 = vlaneseq
    %v2509 = vshrl.u32 %v2508, 7
    %v2510 = vsub.s32 %v2507, %v2509
    %v2511 = vrot.slane %v2495, %v2510
    %v2513 = vunpack.c.l.s4 1966171168
    %v2514 = vunpack.c.0.s8 %v2513
    %v2515 = vlaneseq
    %v2516 = vshrl.u32 %v2515, 7
    %v2517 = vsub.s32 %v2514, %v2516
    %v2518 = vrot.slane %v2496, %v2517
    %v2520 = vunpack.c.l.s4 1966171168
    %v2521 = vunpack.c.0.s8 %v2520
    %v2522 = vlaneseq
    %v2523 = vshrl.u32 %v2522, 7
    %v2524 = vsub.s32 %v2521, %v2523
    %v2525 = vrot.slane %v2497, %v2524
    %v2526 = vcombine.low %v2504, %v2511
    %v2527 = vcombine.low %v2518, %v2525
    %v2529 = vunpack.c.l.s4 1966171168
    %v2530 = vunpack.c.0.s8 %v2529
    %v2531 = vlaneseq
    %v2532 = vshrl.u32 %v2531, 7
    %v2533 = vsub.s32 %v2530, %v2532
    %v2534 = vrot.slane %v2526, %v2533
    %v2536 = vunpack.c.l.s4 1966171168
    %v2537 = vunpack.c.0.s8 %v2536
    %v2538 = vlaneseq
    %v2539 = vshrl.u32 %v2538, 7
    %v2540 = vsub.s32 %v2537, %v2539
    %v2541 = vrot.slane %v2527, %v2540
    %v2542 = vcombine.low %v2534, %v2541
    %v2543 = vcombine.low %v2292, %v2293
    %v2544 = vcombine.low %v2294, %v2295
    %v2545 = vcombine.low %v2296, %v2297
    %v2546 = vcombine.low %v2298, %v2299
    %v2548 = vunpack.c.l.s4 1966171168
    %v2549 = vunpack.c.0.s8 %v2548
    %v2550 = vlaneseq
    %v2551 = vshrl.u32 %v2550, 7
    %v2552 = vsub.s32 %v2549, %v2551
    %v2553 = vrot.slane %v2543, %v2552
    %v2555 = vunpack.c.l.s4 1966171168
    %v2556 = vunpack.c.0.s8 %v2555
    %v2557 = vlaneseq
    %v2558 = vshrl.u32 %v2557, 7
    %v2559 = vsub.s32 %v2556, %v2558
    %v2560 = vrot.slane %v2544, %v2559
    %v2562 = vunpack.c.l.s4 1966171168
    %v2563 = vunpack.c.0.s8 %v2562
    %v2564 = vlaneseq
    %v2565 = vshrl.u32 %v2564, 7
    %v2566 = vsub.s32 %v2563, %v2565
    %v2567 = vrot.slane %v2545, %v2566
    %v2569 = vunpack.c.l.s4 1966171168
    %v2570 = vunpack.c.0.s8 %v2569
    %v2571 = vlaneseq
    %v2572 = vshrl.u32 %v2571, 7
    %v2573 = vsub.s32 %v2570, %v2572
    %v2574 = vrot.slane %v2546, %v2573
    %v2575 = vcombine.low %v2553, %v2560
    %v2576 = vcombine.low %v2567, %v2574
    %v2578 = vunpack.c.l.s4 1966171168
    %v2579 = vunpack.c.0.s8 %v2578
    %v2580 = vlaneseq
    %v2581 = vshrl.u32 %v2580, 7
    %v2582 = vsub.s32 %v2579, %v2581
    %v2583 = vrot.slane %v2575, %v2582
    %v2585 = vunpack.c.l.s4 1966171168
    %v2586 = vunpack.c.0.s8 %v2585
    %v2587 = vlaneseq
    %v2588 = vshrl.u32 %v2587, 7
    %v2589 = vsub.s32 %v2586, %v2588
    %v2590 = vrot.slane %v2576, %v2589
    %v2591 = vcombine.low %v2583, %v2590
    %v2592 = vcombine.low %v2300, %v2301
    %v2593 = vcombine.low %v2302, %v2303
    %v2594 = vcombine.low %v2304, %v2305
    %v2595 = vcombine.low %v2306, %v2307
    %v2597 = vunpack.c.l.s4 1966171168
    %v2598 = vunpack.c.0.s8 %v2597
    %v2599 = vlaneseq
    %v2600 = vshrl.u32 %v2599, 7
    %v2601 = vsub.s32 %v2598, %v2600
    %v2602 = vrot.slane %v2592, %v2601
    %v2604 = vunpack.c.l.s4 1966171168
    %v2605 = vunpack.c.0.s8 %v2604
    %v2606 = vlaneseq
    %v2607 = vshrl.u32 %v2606, 7
    %v2608 = vsub.s32 %v2605, %v2607
    %v2609 = vrot.slane %v2593, %v2608
    %v2611 = vunpack.c.l.s4 1966171168
    %v2612 = vunpack.c.0.s8 %v2611
    %v2613 = vlaneseq
    %v2614 = vshrl.u32 %v2613, 7
    %v2615 = vsub.s32 %v2612, %v2614
    %v2616 = vrot.slane %v2594, %v2615
    %v2618 = vunpack.c.l.s4 1966171168
    %v2619 = vunpack.c.0.s8 %v2618
    %v2620 = vlaneseq
    %v2621 = vshrl.u32 %v2620, 7
    %v2622 = vsub.s32 %v2619, %v2621
    %v2623 = vrot.slane %v2595, %v2622
    %v2624 = vcombine.low %v2602, %v2609
    %v2625 = vcombine.low %v2616, %v2623
    %v2627 = vunpack.c.l.s4 1966171168
    %v2628 = vunpack.c.0.s8 %v2627
    %v2629 = vlaneseq
    %v2630 = vshrl.u32 %v2629, 7
    %v2631 = vsub.s32 %v2628, %v2630
    %v2632 = vrot.slane %v2624, %v2631
    %v2634 = vunpack.c.l.s4 1966171168
    %v2635 = vunpack.c.0.s8 %v2634
    %v2636 = vlaneseq
    %v2637 = vshrl.u32 %v2636, 7
    %v2638 = vsub.s32 %v2635, %v2637
    %v2639 = vrot.slane %v2625, %v2638
    %v2640 = vcombine.low %v2632, %v2639
    %v2641 = vcombine.low %v2308, %v2309
    %v2642 = vcombine.low %v2310, %v2311
    %v2643 = vcombine.low %v2312, %v2313
    %v2644 = vcombine.low %v2314, %v2315
    %v2646 = vunpack.c.l.s4 1966171168
    %v2647 = vunpack.c.0.s8 %v2646
    %v2648 = vlaneseq
    %v2649 = vshrl.u32 %v2648, 7
    %v2650 = vsub.s32 %v2647, %v2649
    %v2651 = vrot.slane %v2641, %v2650
    %v2653 = vunpack.c.l.s4 1966171168
    %v2654 = vunpack.c.0.s8 %v2653
    %v2655 = vlaneseq
    %v2656 = vshrl.u32 %v2655, 7
    %v2657 = vsub.s32 %v2654, %v2656
    %v2658 = vrot.slane %v2642, %v2657
    %v2660 = vunpack.c.l.s4 1966171168
    %v2661 = vunpack.c.0.s8 %v2660
    %v2662 = vlaneseq
    %v2663 = vshrl.u32 %v2662, 7
    %v2664 = vsub.s32 %v2661, %v2663
    %v2665 = vrot.slane %v2643, %v2664
    %v2667 = vunpack.c.l.s4 1966171168
    %v2668 = vunpack.c.0.s8 %v2667
    %v2669 = vlaneseq
    %v2670 = vshrl.u32 %v2669, 7
    %v2671 = vsub.s32 %v2668, %v2670
    %v2672 = vrot.slane %v2644, %v2671
    %v2673 = vcombine.low %v2651, %v2658
    %v2674 = vcombine.low %v2665, %v2672
    %v2676 = vunpack.c.l.s4 1966171168
    %v2677 = vunpack.c.0.s8 %v2676
    %v2678 = vlaneseq
    %v2679 = vshrl.u32 %v2678, 7
    %v2680 = vsub.s32 %v2677, %v2679
    %v2681 = vrot.slane %v2673, %v2680
    %v2683 = vunpack.c.l.s4 1966171168
    %v2684 = vunpack.c.0.s8 %v2683
    %v2685 = vlaneseq
    %v2686 = vshrl.u32 %v2685, 7
    %v2687 = vsub.s32 %v2684, %v2686
    %v2688 = vrot.slane %v2674, %v2687
    %v2689 = vcombine.low %v2681, %v2688
    %v2690 = vcombine.low %v2316, %v2317
    %v2691 = vcombine.low %v2318, %v2319
    %v2692 = vcombine.low %v2320, %v2321
    %v2693 = vcombine.low %v2322, %v2323
    %v2695 = vunpack.c.l.s4 1966171168
    %v2696 = vunpack.c.0.s8 %v2695
    %v2697 = vlaneseq
    %v2698 = vshrl.u32 %v2697, 7
    %v2699 = vsub.s32 %v2696, %v2698
    %v2700 = vrot.slane %v2690, %v2699
    %v2702 = vunpack.c.l.s4 1966171168
    %v2703 = vunpack.c.0.s8 %v2702
    %v2704 = vlaneseq
    %v2705 = vshrl.u32 %v2704, 7
    %v2706 = vsub.s32 %v2703, %v2705
    %v2707 = vrot.slane %v2691, %v2706
    %v2709 = vunpack.c.l.s4 1966171168
    %v2710 = vunpack.c.0.s8 %v2709
    %v2711 = vlaneseq
    %v2712 = vshrl.u32 %v2711, 7
    %v2713 = vsub.s32 %v2710, %v2712
    %v2714 = vrot.slane %v2692, %v2713
    %v2716 = vunpack.c.l.s4 1966171168
    %v2717 = vunpack.c.0.s8 %v2716
    %v2718 = vlaneseq
    %v2719 = vshrl.u32 %v2718, 7
    %v2720 = vsub.s32 %v2717, %v2719
    %v2721 = vrot.slane %v2693, %v2720
    %v2722 = vcombine.low %v2700, %v2707
    %v2723 = vcombine.low %v2714, %v2721
    %v2725 = vunpack.c.l.s4 1966171168
    %v2726 = vunpack.c.0.s8 %v2725
    %v2727 = vlaneseq
    %v2728 = vshrl.u32 %v2727, 7
    %v2729 = vsub.s32 %v2726, %v2728
    %v2730 = vrot.slane %v2722, %v2729
    %v2732 = vunpack.c.l.s4 1966171168
    %v2733 = vunpack.c.0.s8 %v2732
    %v2734 = vlaneseq
    %v2735 = vshrl.u32 %v2734, 7
    %v2736 = vsub.s32 %v2733, %v2735
    %v2737 = vrot.slane %v2723, %v2736
    %v2738 = vcombine.low %v2730, %v2737
    %v2739 = vcombine.low %v2324, %v2325
    %v2740 = vcombine.low %v2326, %v2327
    %v2741 = vcombine.low %v2328, %v2329
    %v2742 = vcombine.low %v2330, %v2331
    %v2744 = vunpack.c.l.s4 1966171168
    %v2745 = vunpack.c.0.s8 %v2744
    %v2746 = vlaneseq
    %v2747 = vshrl.u32 %v2746, 7
    %v2748 = vsub.s32 %v2745, %v2747
    %v2749 = vrot.slane %v2739, %v2748
    %v2751 = vunpack.c.l.s4 1966171168
    %v2752 = vunpack.c.0.s8 %v2751
    %v2753 = vlaneseq
    %v2754 = vshrl.u32 %v2753, 7
    %v2755 = vsub.s32 %v2752, %v2754
    %v2756 = vrot.slane %v2740, %v2755
    %v2758 = vunpack.c.l.s4 1966171168
    %v2759 = vunpack.c.0.s8 %v2758
    %v2760 = vlaneseq
    %v2761 = vshrl.u32 %v2760, 7
    %v2762 = vsub.s32 %v2759, %v2761
    %v2763 = vrot.slane %v2741, %v2762
    %v2765 = vunpack.c.l.s4 1966171168
    %v2766 = vunpack.c.0.s8 %v2765
    %v2767 = vlaneseq
    %v2768 = vshrl.u32 %v2767, 7
    %v2769 = vsub.s32 %v2766, %v2768
    %v2770 = vrot.slane %v2742, %v2769
    %v2771 = vcombine.low %v2749, %v2756
    %v2772 = vcombine.low %v2763, %v2770
    %v2774 = vunpack.c.l.s4 1966171168
    %v2775 = vunpack.c.0.s8 %v2774
    %v2776 = vlaneseq
    %v2777 = vshrl.u32 %v2776, 7
    %v2778 = vsub.s32 %v2775, %v2777
    %v2779 = vrot.slane %v2771, %v2778
    %v2781 = vunpack.c.l.s4 1966171168
    %v2782 = vunpack.c.0.s8 %v2781
    %v2783 = vlaneseq
    %v2784 = vshrl.u32 %v2783, 7
    %v2785 = vsub.s32 %v2782, %v2784
    %v2786 = vrot.slane %v2772, %v2785
    %v2787 = vcombine.low %v2779, %v2786
    %vm2796 = vcmask 1040384
    %vm2797 = vsmask.f32 256
    %vm2798 = vmand %vm2796, %vm2797
    %vm2799 = vcmask 1041409
    %vm2800 = vsmask.f32 1280
    %vm2801 = vmand %vm2799, %vm2800
    %vm2802 = vmor %vm2801, %vm2798
    %vm2803 = vcmask 1042434
    %vm2804 = vsmask.f32 2304
    %vm2805 = vmand %vm2803, %vm2804
    %vm2806 = vmor %vm2805, %vm2802
    %vm2807 = vcmask 1043459
    %vm2808 = vsmask.f32 3328
    %vm2809 = vmand %vm2807, %vm2808
    %vm2810 = vmor %vm2809, %vm2806
    %vm2811 = vcmask 1044484
    %vm2812 = vsmask.f32 4352
    %vm2813 = vmand %vm2811, %vm2812
    %vm2814 = vmor %vm2813, %vm2810
    %vm2815 = vcmask 1045509
    %vm2816 = vsmask.f32 5376
    %vm2817 = vmand %vm2815, %vm2816
    %vm2818 = vmor %vm2817, %vm2814
    %vm2819 = vcmask 1046534
    %vm2820 = vsmask.f32 6400
    %vm2821 = vmand %vm2819, %vm2820
    %vm2822 = vmor %vm2821, %vm2818
    %vm2823 = vcmask 1047559
    %vm2824 = vsmask.f32 7424
    %vm2825 = vmand %vm2823, %vm2824
    %vm2826 = vmor %vm2825, %vm2822
    %v2827 = vld [vmem:[%s47] sm:$0xff]
    %v2828 = vsel %vm2826, %v2444, %v2827
    %2829 = vst [vmem:[%s47] sm:$0xff] %v2828
    %v2830 = vld [vmem:[%s47 + $0x8] sm:$0xff]
    %v2831 = vsel %vm2826, %v2493, %v2830
    %2832 = vst [vmem:[%s47 + $0x8] sm:$0xff] %v2831
    %v2833 = vld [vmem:[%s47 + $0x10] sm:$0xff]
    %v2834 = vsel %vm2826, %v2542, %v2833
    %2835 = vst [vmem:[%s47 + $0x10] sm:$0xff] %v2834
    %v2836 = vld [vmem:[%s47 + $0x18] sm:$0xff]
    %v2837 = vsel %vm2826, %v2591, %v2836
    %2838 = vst [vmem:[%s47 + $0x18] sm:$0xff] %v2837
    %v2839 = vld [vmem:[%s47 + $0x20] sm:$0xff]
    %v2840 = vsel %vm2826, %v2640, %v2839
    %2841 = vst [vmem:[%s47 + $0x20] sm:$0xff] %v2840
    %v2842 = vld [vmem:[%s47 + $0x28] sm:$0xff]
    %v2843 = vsel %vm2826, %v2689, %v2842
    %2844 = vst [vmem:[%s47 + $0x28] sm:$0xff] %v2843
    %v2845 = vld [vmem:[%s47 + $0x30] sm:$0xff]
    %v2846 = vsel %vm2826, %v2738, %v2845
    %2847 = vst [vmem:[%s47 + $0x30] sm:$0xff] %v2846
    %v2848 = vld [vmem:[%s47 + $0x38] sm:$0xff]
    %v2849 = vsel %vm2826, %v2787, %v2848
    %2850 = vst [vmem:[%s47 + $0x38] sm:$0xff] %v2849
    %p2851 = scmp.eq.s32.totalorder 0, 0
    // Predicated region
    $region10: #{_lambda_.4} parent=1 // pred_check
      %p2852 = pneg %p2851
    $region11: #{_lambda_.4} parent=1 // pred_check_branch
      %2854 = sbr.rel (%p2852) target = $region13
    $region12: #{_lambda_.4} parent=1 // pred_region
      %vm2855 = vcmask 0
      %2856 = vst.msk [vmem:[#allocation2] sm:$0x1] %vm2855, 0.0
      %2857 = vst.msk [vmem:[#allocation4] sm:$0x1] %vm2855, 0.0
    $region13: #{_lambda_.4} parent=1 // pred_fallthru
      _
    %v2858 = vld [vmem:[#allocation2] sm:$0x1]
    %vm2859 = vcmask 1040384
    %v2860 = vsel %vm2859, %v991, 0.0
    %v2861 = vsel %vm2859, %v993, 0.0
    %v2862 = vadd.f32 %v2860, %v2861
    %v2863 = vsel %vm2859, %v1032, 0.0
    %v2864 = vadd.f32 %v2862, %v2863
    %v2865 = vsel %vm2859, %v1034, 0.0
    %v2866 = vadd.f32 %v2864, %v2865
    %v2867 = vsel %vm2859, %v1073, 0.0
    %v2868 = vadd.f32 %v2866, %v2867
    %v2869 = vsel %vm2859, %v1075, 0.0
    %v2870 = vadd.f32 %v2868, %v2869
    %v2871 = vsel %vm2859, %v1114, 0.0
    %v2872 = vadd.f32 %v2870, %v2871
    %v2873 = vsel %vm2859, %v1116, 0.0
    %v2874 = vadd.f32 %v2872, %v2873
    %v2875 = vsel %vm2859, %v1155, 0.0
    %v2876 = vadd.f32 %v2874, %v2875
    %v2877 = vsel %vm2859, %v1157, 0.0
    %v2878 = vadd.f32 %v2876, %v2877
    %v2879 = vsel %vm2859, %v1196, 0.0
    %v2880 = vadd.f32 %v2878, %v2879
    %v2881 = vsel %vm2859, %v1198, 0.0
    %v2882 = vadd.f32 %v2880, %v2881
    %v2883 = vsel %vm2859, %v1237, 0.0
    %v2884 = vadd.f32 %v2882, %v2883
    %v2885 = vsel %vm2859, %v1239, 0.0
    %v2886 = vadd.f32 %v2884, %v2885
    %v2887 = vsel %vm2859, %v1278, 0.0
    %v2888 = vadd.f32 %v2886, %v2887
    %v2889 = vsel %vm2859, %v1280, 0.0
    %v2890 = vadd.f32 %v2888, %v2889
    %v2891 = vsel %vm2859, %v1319, 0.0
    %v2892 = vadd.f32 %v2890, %v2891
    %v2893 = vsel %vm2859, %v1321, 0.0
    %v2894 = vadd.f32 %v2892, %v2893
    %v2895 = vsel %vm2859, %v1360, 0.0
    %v2896 = vadd.f32 %v2894, %v2895
    %v2897 = vsel %vm2859, %v1362, 0.0
    %v2898 = vadd.f32 %v2896, %v2897
    %v2899 = vsel %vm2859, %v1401, 0.0
    %v2900 = vadd.f32 %v2898, %v2899
    %v2901 = vsel %vm2859, %v1403, 0.0
    %v2902 = vadd.f32 %v2900, %v2901
    %v2903 = vsel %vm2859, %v1442, 0.0
    %v2904 = vadd.f32 %v2902, %v2903
    %v2905 = vsel %vm2859, %v1444, 0.0
    %v2906 = vadd.f32 %v2904, %v2905
    %v2907 = vsel %vm2859, %v1483, 0.0
    %v2908 = vadd.f32 %v2906, %v2907
    %v2909 = vsel %vm2859, %v1485, 0.0
    %v2910 = vadd.f32 %v2908, %v2909
    %v2911 = vsel %vm2859, %v1524, 0.0
    %v2912 = vadd.f32 %v2910, %v2911
    %v2913 = vsel %vm2859, %v1526, 0.0
    %v2914 = vadd.f32 %v2912, %v2913
    %v2915 = vsel %vm2859, %v1565, 0.0
    %v2916 = vadd.f32 %v2914, %v2915
    %v2917 = vsel %vm2859, %v1567, 0.0
    %v2918 = vadd.f32 %v2916, %v2917
    %v2919 = vsel %vm2859, %v1606, 0.0
    %v2920 = vadd.f32 %v2918, %v2919
    %v2921 = vsel %vm2859, %v1608, 0.0
    %v2922 = vadd.f32 %v2920, %v2921
    %v2923 = vsel %vm2859, %v1647, 0.0
    %v2924 = vadd.f32 %v2922, %v2923
    %v2925 = vsel %vm2859, %v1649, 0.0
    %v2926 = vadd.f32 %v2924, %v2925
    %v2927 = vsel %vm2859, %v1688, 0.0
    %v2928 = vadd.f32 %v2926, %v2927
    %v2929 = vsel %vm2859, %v1690, 0.0
    %v2930 = vadd.f32 %v2928, %v2929
    %v2931 = vsel %vm2859, %v1729, 0.0
    %v2932 = vadd.f32 %v2930, %v2931
    %v2933 = vsel %vm2859, %v1731, 0.0
    %v2934 = vadd.f32 %v2932, %v2933
    %v2935 = vsel %vm2859, %v1770, 0.0
    %v2936 = vadd.f32 %v2934, %v2935
    %v2937 = vsel %vm2859, %v1772, 0.0
    %v2938 = vadd.f32 %v2936, %v2937
    %v2939 = vsel %vm2859, %v1811, 0.0
    %v2940 = vadd.f32 %v2938, %v2939
    %v2941 = vsel %vm2859, %v1813, 0.0
    %v2942 = vadd.f32 %v2940, %v2941
    %v2943 = vsel %vm2859, %v1852, 0.0
    %v2944 = vadd.f32 %v2942, %v2943
    %v2945 = vsel %vm2859, %v1854, 0.0
    %v2946 = vadd.f32 %v2944, %v2945
    %v2947 = vsel %vm2859, %v1893, 0.0
    %v2948 = vadd.f32 %v2946, %v2947
    %v2949 = vsel %vm2859, %v1895, 0.0
    %v2950 = vadd.f32 %v2948, %v2949
    %v2951 = vsel %vm2859, %v1934, 0.0
    %v2952 = vadd.f32 %v2950, %v2951
    %v2953 = vsel %vm2859, %v1936, 0.0
    %v2954 = vadd.f32 %v2952, %v2953
    %v2955 = vsel %vm2859, %v1975, 0.0
    %v2956 = vadd.f32 %v2954, %v2955
    %v2957 = vsel %vm2859, %v1977, 0.0
    %v2958 = vadd.f32 %v2956, %v2957
    %v2959 = vsel %vm2859, %v2016, 0.0
    %v2960 = vadd.f32 %v2958, %v2959
    %v2961 = vsel %vm2859, %v2018, 0.0
    %v2962 = vadd.f32 %v2960, %v2961
    %v2963 = vsel %vm2859, %v2057, 0.0
    %v2964 = vadd.f32 %v2962, %v2963
    %v2965 = vsel %vm2859, %v2059, 0.0
    %v2966 = vadd.f32 %v2964, %v2965
    %v2967 = vsel %vm2859, %v2098, 0.0
    %v2968 = vadd.f32 %v2966, %v2967
    %v2969 = vsel %vm2859, %v2100, 0.0
    %v2970 = vadd.f32 %v2968, %v2969
    %v2971 = vsel %vm2859, %v2139, 0.0
    %v2972 = vadd.f32 %v2970, %v2971
    %v2973 = vsel %vm2859, %v2141, 0.0
    %v2974 = vadd.f32 %v2972, %v2973
    %v2975 = vsel %vm2859, %v2180, 0.0
    %v2976 = vadd.f32 %v2974, %v2975
    %v2977 = vsel %vm2859, %v2182, 0.0
    %v2978 = vadd.f32 %v2976, %v2977
    %v2979 = vsel %vm2859, %v2221, 0.0
    %v2980 = vadd.f32 %v2978, %v2979
    %v2981 = vsel %vm2859, %v2223, 0.0
    %v2982 = vadd.f32 %v2980, %v2981
    %v2983 = vsel %vm2859, %v2262, 0.0
    %v2984 = vadd.f32 %v2982, %v2983
    %v2985 = vsel %vm2859, %v2264, 0.0
    %v2986 = vadd.f32 %v2984, %v2985
    %2987 = vadd.xlane.f32.xlu0 %v2986
    %v2988 = vpop.xlane.xlu0 %2987
    %v2989 = vadd.f32 %v2858, %v2988
    %vm2990 = vcmask 0
    %2991 = vst.msk [vmem:[#allocation2] sm:$0x1] %vm2990, %v2989
    %v2992 = vld [vmem:[#allocation4] sm:$0x1]
    %v2993 = vmul.f32 %v991, %v991
    %v2994 = vmul.f32 %v993, %v993
    %v2995 = vmul.f32 %v1032, %v1032
    %v2996 = vmul.f32 %v1034, %v1034
    %v2997 = vmul.f32 %v1073, %v1073
    %v2998 = vmul.f32 %v1075, %v1075
    %v2999 = vmul.f32 %v1114, %v1114
    %v3000 = vmul.f32 %v1116, %v1116
    %v3001 = vmul.f32 %v1155, %v1155
    %v3002 = vmul.f32 %v1157, %v1157
    %v3003 = vmul.f32 %v1196, %v1196
    %v3004 = vmul.f32 %v1198, %v1198
    %v3005 = vmul.f32 %v1237, %v1237
    %v3006 = vmul.f32 %v1239, %v1239
    %v3007 = vmul.f32 %v1278, %v1278
    %v3008 = vmul.f32 %v1280, %v1280
    %v3009 = vmul.f32 %v1319, %v1319
    %v3010 = vmul.f32 %v1321, %v1321
    %v3011 = vmul.f32 %v1360, %v1360
    %v3012 = vmul.f32 %v1362, %v1362
    %v3013 = vmul.f32 %v1401, %v1401
    %v3014 = vmul.f32 %v1403, %v1403
    %v3015 = vmul.f32 %v1442, %v1442
    %v3016 = vmul.f32 %v1444, %v1444
    %v3017 = vmul.f32 %v1483, %v1483
    %v3018 = vmul.f32 %v1485, %v1485
    %v3019 = vmul.f32 %v1524, %v1524
    %v3020 = vmul.f32 %v1526, %v1526
    %v3021 = vmul.f32 %v1565, %v1565
    %v3022 = vmul.f32 %v1567, %v1567
    %v3023 = vmul.f32 %v1606, %v1606
    %v3024 = vmul.f32 %v1608, %v1608
    %v3025 = vmul.f32 %v1647, %v1647
    %v3026 = vmul.f32 %v1649, %v1649
    %v3027 = vmul.f32 %v1688, %v1688
    %v3028 = vmul.f32 %v1690, %v1690
    %v3029 = vmul.f32 %v1729, %v1729
    %v3030 = vmul.f32 %v1731, %v1731
    %v3031 = vmul.f32 %v1770, %v1770
    %v3032 = vmul.f32 %v1772, %v1772
    %v3033 = vmul.f32 %v1811, %v1811
    %v3034 = vmul.f32 %v1813, %v1813
    %v3035 = vmul.f32 %v1852, %v1852
    %v3036 = vmul.f32 %v1854, %v1854
    %v3037 = vmul.f32 %v1893, %v1893
    %v3038 = vmul.f32 %v1895, %v1895
    %v3039 = vmul.f32 %v1934, %v1934
    %v3040 = vmul.f32 %v1936, %v1936
    %v3041 = vmul.f32 %v1975, %v1975
    %v3042 = vmul.f32 %v1977, %v1977
    %v3043 = vmul.f32 %v2016, %v2016
    %v3044 = vmul.f32 %v2018, %v2018
    %v3045 = vmul.f32 %v2057, %v2057
    %v3046 = vmul.f32 %v2059, %v2059
    %v3047 = vmul.f32 %v2098, %v2098
    %v3048 = vmul.f32 %v2100, %v2100
    %v3049 = vmul.f32 %v2139, %v2139
    %v3050 = vmul.f32 %v2141, %v2141
    %v3051 = vmul.f32 %v2180, %v2180
    %v3052 = vmul.f32 %v2182, %v2182
    %v3053 = vmul.f32 %v2221, %v2221
    %v3054 = vmul.f32 %v2223, %v2223
    %v3055 = vmul.f32 %v2262, %v2262
    %v3056 = vmul.f32 %v2264, %v2264
    %v3057 = vsel %vm2859, %v2993, 0.0
    %v3058 = vsel %vm2859, %v2994, 0.0
    %v3059 = vadd.f32 %v3057, %v3058
    %v3060 = vsel %vm2859, %v2995, 0.0
    %v3061 = vadd.f32 %v3059, %v3060
    %v3062 = vsel %vm2859, %v2996, 0.0
    %v3063 = vadd.f32 %v3061, %v3062
    %v3064 = vsel %vm2859, %v2997, 0.0
    %v3065 = vadd.f32 %v3063, %v3064
    %v3066 = vsel %vm2859, %v2998, 0.0
    %v3067 = vadd.f32 %v3065, %v3066
    %v3068 = vsel %vm2859, %v2999, 0.0
    %v3069 = vadd.f32 %v3067, %v3068
    %v3070 = vsel %vm2859, %v3000, 0.0
    %v3071 = vadd.f32 %v3069, %v3070
    %v3072 = vsel %vm2859, %v3001, 0.0
    %v3073 = vadd.f32 %v3071, %v3072
    %v3074 = vsel %vm2859, %v3002, 0.0
    %v3075 = vadd.f32 %v3073, %v3074
    %v3076 = vsel %vm2859, %v3003, 0.0
    %v3077 = vadd.f32 %v3075, %v3076
    %v3078 = vsel %vm2859, %v3004, 0.0
    %v3079 = vadd.f32 %v3077, %v3078
    %v3080 = vsel %vm2859, %v3005, 0.0
    %v3081 = vadd.f32 %v3079, %v3080
    %v3082 = vsel %vm2859, %v3006, 0.0
    %v3083 = vadd.f32 %v3081, %v3082
    %v3084 = vsel %vm2859, %v3007, 0.0
    %v3085 = vadd.f32 %v3083, %v3084
    %v3086 = vsel %vm2859, %v3008, 0.0
    %v3087 = vadd.f32 %v3085, %v3086
    %v3088 = vsel %vm2859, %v3009, 0.0
    %v3089 = vadd.f32 %v3087, %v3088
    %v3090 = vsel %vm2859, %v3010, 0.0
    %v3091 = vadd.f32 %v3089, %v3090
    %v3092 = vsel %vm2859, %v3011, 0.0
    %v3093 = vadd.f32 %v3091, %v3092
    %v3094 = vsel %vm2859, %v3012, 0.0
    %v3095 = vadd.f32 %v3093, %v3094
    %v3096 = vsel %vm2859, %v3013, 0.0
    %v3097 = vadd.f32 %v3095, %v3096
    %v3098 = vsel %vm2859, %v3014, 0.0
    %v3099 = vadd.f32 %v3097, %v3098
    %v3100 = vsel %vm2859, %v3015, 0.0
    %v3101 = vadd.f32 %v3099, %v3100
    %v3102 = vsel %vm2859, %v3016, 0.0
    %v3103 = vadd.f32 %v3101, %v3102
    %v3104 = vsel %vm2859, %v3017, 0.0
    %v3105 = vadd.f32 %v3103, %v3104
    %v3106 = vsel %vm2859, %v3018, 0.0
    %v3107 = vadd.f32 %v3105, %v3106
    %v3108 = vsel %vm2859, %v3019, 0.0
    %v3109 = vadd.f32 %v3107, %v3108
    %v3110 = vsel %vm2859, %v3020, 0.0
    %v3111 = vadd.f32 %v3109, %v3110
    %v3112 = vsel %vm2859, %v3021, 0.0
    %v3113 = vadd.f32 %v3111, %v3112
    %v3114 = vsel %vm2859, %v3022, 0.0
    %v3115 = vadd.f32 %v3113, %v3114
    %v3116 = vsel %vm2859, %v3023, 0.0
    %v3117 = vadd.f32 %v3115, %v3116
    %v3118 = vsel %vm2859, %v3024, 0.0
    %v3119 = vadd.f32 %v3117, %v3118
    %v3120 = vsel %vm2859, %v3025, 0.0
    %v3121 = vadd.f32 %v3119, %v3120
    %v3122 = vsel %vm2859, %v3026, 0.0
    %v3123 = vadd.f32 %v3121, %v3122
    %v3124 = vsel %vm2859, %v3027, 0.0
    %v3125 = vadd.f32 %v3123, %v3124
    %v3126 = vsel %vm2859, %v3028, 0.0
    %v3127 = vadd.f32 %v3125, %v3126
    %v3128 = vsel %vm2859, %v3029, 0.0
    %v3129 = vadd.f32 %v3127, %v3128
    %v3130 = vsel %vm2859, %v3030, 0.0
    %v3131 = vadd.f32 %v3129, %v3130
    %v3132 = vsel %vm2859, %v3031, 0.0
    %v3133 = vadd.f32 %v3131, %v3132
    %v3134 = vsel %vm2859, %v3032, 0.0
    %v3135 = vadd.f32 %v3133, %v3134
    %v3136 = vsel %vm2859, %v3033, 0.0
    %v3137 = vadd.f32 %v3135, %v3136
    %v3138 = vsel %vm2859, %v3034, 0.0
    %v3139 = vadd.f32 %v3137, %v3138
    %v3140 = vsel %vm2859, %v3035, 0.0
    %v3141 = vadd.f32 %v3139, %v3140
    %v3142 = vsel %vm2859, %v3036, 0.0
    %v3143 = vadd.f32 %v3141, %v3142
    %v3144 = vsel %vm2859, %v3037, 0.0
    %v3145 = vadd.f32 %v3143, %v3144
    %v3146 = vsel %vm2859, %v3038, 0.0
    %v3147 = vadd.f32 %v3145, %v3146
    %v3148 = vsel %vm2859, %v3039, 0.0
    %v3149 = vadd.f32 %v3147, %v3148
    %v3150 = vsel %vm2859, %v3040, 0.0
    %v3151 = vadd.f32 %v3149, %v3150
    %v3152 = vsel %vm2859, %v3041, 0.0
    %v3153 = vadd.f32 %v3151, %v3152
    %v3154 = vsel %vm2859, %v3042, 0.0
    %v3155 = vadd.f32 %v3153, %v3154
    %v3156 = vsel %vm2859, %v3043, 0.0
    %v3157 = vadd.f32 %v3155, %v3156
    %v3158 = vsel %vm2859, %v3044, 0.0
    %v3159 = vadd.f32 %v3157, %v3158
    %v3160 = vsel %vm2859, %v3045, 0.0
    %v3161 = vadd.f32 %v3159, %v3160
    %v3162 = vsel %vm2859, %v3046, 0.0
    %v3163 = vadd.f32 %v3161, %v3162
    %v3164 = vsel %vm2859, %v3047, 0.0
    %v3165 = vadd.f32 %v3163, %v3164
    %v3166 = vsel %vm2859, %v3048, 0.0
    %v3167 = vadd.f32 %v3165, %v3166
    %v3168 = vsel %vm2859, %v3049, 0.0
    %v3169 = vadd.f32 %v3167, %v3168
    %v3170 = vsel %vm2859, %v3050, 0.0
    %v3171 = vadd.f32 %v3169, %v3170
    %v3172 = vsel %vm2859, %v3051, 0.0
    %v3173 = vadd.f32 %v3171, %v3172
    %v3174 = vsel %vm2859, %v3052, 0.0
    %v3175 = vadd.f32 %v3173, %v3174
    %v3176 = vsel %vm2859, %v3053, 0.0
    %v3177 = vadd.f32 %v3175, %v3176
    %v3178 = vsel %vm2859, %v3054, 0.0
    %v3179 = vadd.f32 %v3177, %v3178
    %v3180 = vsel %vm2859, %v3055, 0.0
    %v3181 = vadd.f32 %v3179, %v3180
    %v3182 = vsel %vm2859, %v3056, 0.0
    %v3183 = vadd.f32 %v3181, %v3182
    %3184 = vadd.xlane.f32.xlu0 %v3183
    %v3185 = vpop.xlane.xlu0 %3184
    %v3186 = vadd.f32 %v2992, %v3185
    %3187 = vst.msk [vmem:[#allocation4] sm:$0x1] %vm2990, %v3186
    %s3188 = sadd.s32 0, 0
    %s3189 = smul.u32 64, %s3188
    %p3190 = scmp.lt.s32.totalorder %s3189, 63
    %s3191 = scalar_select %p3190, %s3189, 63
    %s3192 = scalar_lea.vmem %s2, %s3191
    // Predicated region
    $region14: #{_lambda_.4} parent=1 // pred_check
      _
    $region15: #{_lambda_.4} parent=1 // pred_check_branch
      %3194 = sbr.rel (0) target = $region17
    $region16: #{_lambda_.4} parent=1 // pred_region
      %s3195 = sadd.s32 0, 0
      %s3196 = smul.u32 64, %s3195
    $region17: #{_lambda_.4} parent=1 // pred_fallthru
      _
    // Predicated region
    $region18: #{_lambda_.4} parent=1 // pred_check
      _
    $region19: #{_lambda_.4} parent=1 // pred_check_branch
      %3198 = sbr.rel (0) target = $region21
    $region20: #{_lambda_.4} parent=1 // pred_region
      %s3200 = ssub.s32 16, 16
      %3201 = vsyncadd [#allocation3], %s3200
      %s3203 = sshll.u32 [#allocation2], 4
      %s3204 = int_to_ptr.vmem [resolvable:$true] %s3203
      %3206 = dma.vmem_to_hbm [thread:$0]  %s3204, 16, %s3, [#allocation3]
    $region21: #{_lambda_.4} parent=1 // pred_fallthru
      _
    // Predicated region
    $region22: #{_lambda_.4} parent=1 // pred_check
      _
    $region23: #{_lambda_.4} parent=1 // pred_check_branch
      %3208 = sbr.rel (0) target = $region25
    $region24: #{_lambda_.4} parent=1 // pred_region
      %s3210 = ssub.s32 16, 16
      %3211 = vsyncadd [#allocation5], %s3210
      %s3213 = sshll.u32 [#allocation4], 4
      %s3214 = int_to_ptr.vmem [resolvable:$true] %s3213
      %3216 = dma.vmem_to_hbm [thread:$0]  %s3214, 16, %s4, [#allocation5]
    $region25: #{_lambda_.4} parent=1 // pred_fallthru
      _
    // Predicated region
    $region26: #{_lambda_.4} parent=1 // pred_check
      _
    $region27: #{_lambda_.4} parent=1 // pred_check_branch
      %3218 = sbr.rel (0) target = $region29
    $region28: #{_lambda_.4} parent=1 // pred_region
      %s3219 = sadd.s32 0, 0
      %s3220 = smul.u32 64, %s3219
      %p3221 = scmp.lt.s32.totalorder %s3220, 63
      %s3222 = scalar_select %p3221, %s3220, 63
      %s3223 = scalar_lea.vmem %s2, %s3222
    $region29: #{_lambda_.4} parent=1 // pred_fallthru
      _
    // Predicated region
    $region30: #{_lambda_.4} parent=1 // pred_check
      _
    $region31: #{_lambda_.4} parent=1 // pred_check_branch
      %3225 = sbr.rel (0) target = $region33
    $region32: #{_lambda_.4} parent=1 // pred_region
      %3226 = dma.done [#allocation3], 16
    $region33: #{_lambda_.4} parent=1 // pred_fallthru
      _
    // Predicated region
    $region34: #{_lambda_.4} parent=1 // pred_check
      _
    $region35: #{_lambda_.4} parent=1 // pred_check_branch
      %3228 = sbr.rel (0) target = $region37
    $region36: #{_lambda_.4} parent=1 // pred_region
      %3229 = dma.done [#allocation5], 16
    $region37: #{_lambda_.4} parent=1 // pred_fallthru
      _
    %3230 = vsyncpa [#allocation3], 1
    %3231 = vsyncpa [#allocation5], 1

// kernel: _lambda_.5
$region0: #{_lambda_.5}
  #allocation0 [shape = 'u32[]', space=smem, size = 0x4, offset = 0x4, fixed_abs, tag = 'smem constant byte address 0x4 - core index']
  #allocation1 [shape = 'u32[144,128]{1,0:T(1,128)}', space=vmem, size = 0x12000, scoped, tag = 'internal scratch']
  %s0 = inlined_call_operand.vmem [shape: bf16[4,125], index: 0, kind: input, shape index: {}]
  %s1 = inlined_call_operand.vmem [shape: bf16[125,1024], index: 1, kind: input, shape index: {}]
  %s2 = inlined_call_operand.vmem [shape: bf16[4,512], index: 2, kind: output, shape index: {0}]
  %s3 = inlined_call_operand.vmem [shape: f32[1,4,1], index: 3, kind: output, shape index: {1}]
  %s4 = inlined_call_operand.vmem [shape: f32[1,4,1], index: 4, kind: output, shape index: {2}]
  %5 = xla_tuple %s2, %s3, %s4
  %s6 = sld [smem:[#allocation0]]
  $region38: #{_lambda_.5} parent=0
    _
  %s8 = ssub.s32 1, %s6
  %s9 = scalar_select 0, %s8, %s6
  // Predicated region
  $region2: #{_lambda_.5} parent=0 // pred_check
    _
  $region3: #{_lambda_.5} parent=0 // pred_check_branch
    %11 = sbr.rel (0) target = $region5
  $region4: #{_lambda_.5} parent=0 // pred_region
    _
  $region5: #{_lambda_.5} parent=0 // pred_fallthru
    _
  // Predicated region
  $region6: #{_lambda_.5} parent=0 // pred_check
    _
  $region7: #{_lambda_.5} parent=0 // pred_check_branch
    %13 = sbr.rel (0) target = $region9
  $region8: #{_lambda_.5} parent=0 // pred_region
    %s14 = sadd.s32 0, 0
    %s15 = smul.u32 8, %s14
    %p16 = scmp.lt.s32.totalorder %s15, 7
    %s17 = scalar_select %p16, %s15, 7
    %s18 = smul.addr %s17, 4
    %s19 = scalar_lea.vmem %s1, %s18
    %s20 = sadd.s32 0, 0
    %s21 = smul.u32 8, %s20
  $region9: #{_lambda_.5} parent=0 // pred_fallthru
    _
  %s22 = sadd.s32 0, 0
  %s23 = smul.u32 8, %s22
  %p24 = scmp.lt.s32.totalorder %s23, 7
  %s25 = scalar_select %p24, %s23, 7
  %s26 = smul.addr %s25, 4
  %s27 = scalar_lea.vmem %s1, %s26
  %s28 = sadd.s32 0, 0
  %s29 = smul.u32 4, %s28
  %p30 = scmp.lt.s32.totalorder %s29, 3
  %s31 = scalar_select %p30, %s29, 3
  %s32 = smul.addr %s31, 2
  %s33 = scalar_lea.vmem %s2, %s32
  %s34 = sadd.s32 0, 0
  %s35 = smul.u32 8, %s34
  %p36 = scmp.lt.s32.totalorder %s35, 7
  %s37 = scalar_select %p36, %s35, 7
  %s38 = smul.addr %s37, 4
  %s39 = scalar_lea.vmem %s1, %s38
  %s40 = sadd.s32 0, 0
  %s41 = smul.u32 8, %s40
  %s42 = sadd.s32 0, 0
  %s43 = smul.u32 4, %s42
  %p44 = scmp.lt.s32.totalorder %s43, 3
  %s45 = scalar_select %p44, %s43, 3
  %s46 = smul.addr %s45, 2
  %s47 = scalar_lea.vmem %s2, %s46
  %s48 = sadd.s32 0, 0
  %s49 = smul.u32 4, %s48
  %v51 = vld [vmem:[%s0] sm:$0x3]
  %v52 = vld [vmem:[%s39] sm:$0xff]
  %v53 = vld [vmem:[%s39 + $0x8] sm:$0xff]
  %v54 = vld [vmem:[%s39 + $0x10] sm:$0xff]
  %v55 = vld [vmem:[%s39 + $0x18] sm:$0xff]
  %v56 = vld [vmem:[%s39 + $0x20] sm:$0xff]
  %v57 = vld [vmem:[%s39 + $0x28] sm:$0xff]
  %v58 = vld [vmem:[%s39 + $0x30] sm:$0xff]
  %v59 = vld [vmem:[%s39 + $0x38] sm:$0xff]
  %v60 = vld [vmem:[%s39 + $0x40] sm:$0xff]
  %v61 = vld [vmem:[%s39 + $0x48] sm:$0xff]
  %v62 = vld [vmem:[%s39 + $0x50] sm:$0xff]
  %v63 = vld [vmem:[%s39 + $0x58] sm:$0xff]
  %v64 = vld [vmem:[%s39 + $0x60] sm:$0xff]
  %v65 = vld [vmem:[%s39 + $0x68] sm:$0xff]
  %v66 = vld [vmem:[%s39 + $0x70] sm:$0xff]
  %v67 = vld [vmem:[%s39 + $0x78] sm:$0xff]
  %v68 = vld [vmem:[%s39 + $0x80] sm:$0xff]
  %v69 = vld [vmem:[%s39 + $0x88] sm:$0xff]
  %v70 = vld [vmem:[%s39 + $0x90] sm:$0xff]
  %v71 = vld [vmem:[%s39 + $0x98] sm:$0xff]
  %v72 = vld [vmem:[%s39 + $0xa0] sm:$0xff]
  %v73 = vld [vmem:[%s39 + $0xa8] sm:$0xff]
  %v74 = vld [vmem:[%s39 + $0xb0] sm:$0xff]
  %v75 = vld [vmem:[%s39 + $0xb8] sm:$0xff]
  %v76 = vld [vmem:[%s39 + $0xc0] sm:$0xff]
  %v77 = vld [vmem:[%s39 + $0xc8] sm:$0xff]
  %v78 = vld [vmem:[%s39 + $0xd0] sm:$0xff]
  %v79 = vld [vmem:[%s39 + $0xd8] sm:$0xff]
  %v80 = vld [vmem:[%s39 + $0xe0] sm:$0xff]
  %v81 = vld [vmem:[%s39 + $0xe8] sm:$0xff]
  %v82 = vld [vmem:[%s39 + $0xf0] sm:$0xff]
  %v83 = vld [vmem:[%s39 + $0xf8] sm:$0xff]
  %v84 = vld [vmem:[%s39 + $0x100] sm:$0xff]
  %v85 = vld [vmem:[%s39 + $0x108] sm:$0xff]
  %v86 = vld [vmem:[%s39 + $0x110] sm:$0xff]
  %v87 = vld [vmem:[%s39 + $0x118] sm:$0xff]
  %v88 = vld [vmem:[%s39 + $0x120] sm:$0xff]
  %v89 = vld [vmem:[%s39 + $0x128] sm:$0xff]
  %v90 = vld [vmem:[%s39 + $0x130] sm:$0xff]
  %v91 = vld [vmem:[%s39 + $0x138] sm:$0xff]
  %v92 = vld [vmem:[%s39 + $0x140] sm:$0xff]
  %v93 = vld [vmem:[%s39 + $0x148] sm:$0xff]
  %v94 = vld [vmem:[%s39 + $0x150] sm:$0xff]
  %v95 = vld [vmem:[%s39 + $0x158] sm:$0xff]
  %v96 = vld [vmem:[%s39 + $0x160] sm:$0xff]
  %v97 = vld [vmem:[%s39 + $0x168] sm:$0xff]
  %v98 = vld [vmem:[%s39 + $0x170] sm:$0xff]
  %v99 = vld [vmem:[%s39 + $0x178] sm:$0xff]
  %v100 = vld [vmem:[%s39 + $0x180] sm:$0xff]
  %v101 = vld [vmem:[%s39 + $0x188] sm:$0xff]
  %v102 = vld [vmem:[%s39 + $0x190] sm:$0xff]
  %v103 = vld [vmem:[%s39 + $0x198] sm:$0xff]
  %v104 = vld [vmem:[%s39 + $0x1a0] sm:$0xff]
  %v105 = vld [vmem:[%s39 + $0x1a8] sm:$0xff]
  %v106 = vld [vmem:[%s39 + $0x1b0] sm:$0xff]
  %v107 = vld [vmem:[%s39 + $0x1b8] sm:$0xff]
  %v108 = vld [vmem:[%s39 + $0x1c0] sm:$0xff]
  %v109 = vld [vmem:[%s39 + $0x1c8] sm:$0xff]
  %v110 = vld [vmem:[%s39 + $0x1d0] sm:$0xff]
  %v111 = vld [vmem:[%s39 + $0x1d8] sm:$0xff]
  %v112 = vld [vmem:[%s39 + $0x1e0] sm:$0x77]
  %v113 = vld [vmem:[%s39 + $0x1e8] sm:$0x77]
  %v114 = vld [vmem:[%s39 + $0x1f0] sm:$0x77]
  %v115 = vld [vmem:[%s39 + $0x1f8] sm:$0x77]
  %v180 = vunpack.c.l.b16 %v52
  %v181 = vunpack.c.h.b16 %v52
  %v182 = vunpack.c.l.b16 %v53
  %v183 = vunpack.c.h.b16 %v53
  %v184 = vunpack.c.l.b16 %v54
  %v185 = vunpack.c.h.b16 %v54
  %v186 = vunpack.c.l.b16 %v55
  %v187 = vunpack.c.h.b16 %v55
  %v188 = vunpack.c.l.b16 %v56
  %v189 = vunpack.c.h.b16 %v56
  %v190 = vunpack.c.l.b16 %v57
  %v191 = vunpack.c.h.b16 %v57
  %v192 = vunpack.c.l.b16 %v58
  %v193 = vunpack.c.h.b16 %v58
  %v194 = vunpack.c.l.b16 %v59
  %v195 = vunpack.c.h.b16 %v59
  %v196 = vunpack.c.l.b16 %v60
  %v197 = vunpack.c.h.b16 %v60
  %v198 = vunpack.c.l.b16 %v61
  %v199 = vunpack.c.h.b16 %v61
  %v200 = vunpack.c.l.b16 %v62
  %v201 = vunpack.c.h.b16 %v62
  %v202 = vunpack.c.l.b16 %v63
  %v203 = vunpack.c.h.b16 %v63
  %v204 = vunpack.c.l.b16 %v64
  %v205 = vunpack.c.h.b16 %v64
  %v206 = vunpack.c.l.b16 %v65
  %v207 = vunpack.c.h.b16 %v65
  %v208 = vunpack.c.l.b16 %v66
  %v209 = vunpack.c.h.b16 %v66
  %v210 = vunpack.c.l.b16 %v67
  %v211 = vunpack.c.h.b16 %v67
  %v212 = vunpack.c.l.b16 %v68
  %v213 = vunpack.c.h.b16 %v68
  %v214 = vunpack.c.l.b16 %v69
  %v215 = vunpack.c.h.b16 %v69
  %v216 = vunpack.c.l.b16 %v70
  %v217 = vunpack.c.h.b16 %v70
  %v218 = vunpack.c.l.b16 %v71
  %v219 = vunpack.c.h.b16 %v71
  %v220 = vunpack.c.l.b16 %v72
  %v221 = vunpack.c.h.b16 %v72
  %v222 = vunpack.c.l.b16 %v73
  %v223 = vunpack.c.h.b16 %v73
  %v224 = vunpack.c.l.b16 %v74
  %v225 = vunpack.c.h.b16 %v74
  %v226 = vunpack.c.l.b16 %v75
  %v227 = vunpack.c.h.b16 %v75
  %v228 = vunpack.c.l.b16 %v76
  %v229 = vunpack.c.h.b16 %v76
  %v230 = vunpack.c.l.b16 %v77
  %v231 = vunpack.c.h.b16 %v77
  %v232 = vunpack.c.l.b16 %v78
  %v233 = vunpack.c.h.b16 %v78
  %v234 = vunpack.c.l.b16 %v79
  %v235 = vunpack.c.h.b16 %v79
  %v236 = vunpack.c.l.b16 %v80
  %v237 = vunpack.c.h.b16 %v80
  %v238 = vunpack.c.l.b16 %v81
  %v239 = vunpack.c.h.b16 %v81
  %v240 = vunpack.c.l.b16 %v82
  %v241 = vunpack.c.h.b16 %v82
  %v242 = vunpack.c.l.b16 %v83
  %v243 = vunpack.c.h.b16 %v83
  %v244 = vunpack.c.l.b16 %v84
  %v245 = vunpack.c.h.b16 %v84
  %v246 = vunpack.c.l.b16 %v85
  %v247 = vunpack.c.h.b16 %v85
  %v248 = vunpack.c.l.b16 %v86
  %v249 = vunpack.c.h.b16 %v86
  %v250 = vunpack.c.l.b16 %v87
  %v251 = vunpack.c.h.b16 %v87
  %v252 = vunpack.c.l.b16 %v88
  %v253 = vunpack.c.h.b16 %v88
  %v254 = vunpack.c.l.b16 %v89
  %v255 = vunpack.c.h.b16 %v89
  %v256 = vunpack.c.l.b16 %v90
  %v257 = vunpack.c.h.b16 %v90
  %v258 = vunpack.c.l.b16 %v91
  %v259 = vunpack.c.h.b16 %v91
  %v260 = vunpack.c.l.b16 %v92
  %v261 = vunpack.c.h.b16 %v92
  %v262 = vunpack.c.l.b16 %v93
  %v263 = vunpack.c.h.b16 %v93
  %v264 = vunpack.c.l.b16 %v94
  %v265 = vunpack.c.h.b16 %v94
  %v266 = vunpack.c.l.b16 %v95
  %v267 = vunpack.c.h.b16 %v95
  %v268 = vunpack.c.l.b16 %v96
  %v269 = vunpack.c.h.b16 %v96
  %v270 = vunpack.c.l.b16 %v97
  %v271 = vunpack.c.h.b16 %v97
  %v272 = vunpack.c.l.b16 %v98
  %v273 = vunpack.c.h.b16 %v98
  %v274 = vunpack.c.l.b16 %v99
  %v275 = vunpack.c.h.b16 %v99
  %v276 = vunpack.c.l.b16 %v100
  %v277 = vunpack.c.h.b16 %v100
  %v278 = vunpack.c.l.b16 %v101
  %v279 = vunpack.c.h.b16 %v101
  %v280 = vunpack.c.l.b16 %v102
  %v281 = vunpack.c.h.b16 %v102
  %v282 = vunpack.c.l.b16 %v103
  %v283 = vunpack.c.h.b16 %v103
  %v284 = vunpack.c.l.b16 %v104
  %v285 = vunpack.c.h.b16 %v104
  %v286 = vunpack.c.l.b16 %v105
  %v287 = vunpack.c.h.b16 %v105
  %v288 = vunpack.c.l.b16 %v106
  %v289 = vunpack.c.h.b16 %v106
  %v290 = vunpack.c.l.b16 %v107
  %v291 = vunpack.c.h.b16 %v107
  %v292 = vunpack.c.l.b16 %v108
  %v293 = vunpack.c.h.b16 %v108
  %v294 = vunpack.c.l.b16 %v109
  %v295 = vunpack.c.h.b16 %v109
  %v296 = vunpack.c.l.b16 %v110
  %v297 = vunpack.c.h.b16 %v110
  %v298 = vunpack.c.l.b16 %v111
  %v299 = vunpack.c.h.b16 %v111
  %v300 = vunpack.c.l.b16 %v112
  %v301 = vunpack.c.h.b16 %v112
  %v302 = vunpack.c.l.b16 %v113
  %v303 = vunpack.c.h.b16 %v113
  %v304 = vunpack.c.l.b16 %v114
  %v305 = vunpack.c.h.b16 %v114
  %v306 = vunpack.c.l.b16 %v115
  %v307 = vunpack.c.h.b16 %v115
  %v308 = vpack.c.b16 %v188, %v180
  %v309 = vpack.c.b16 %v189, %v181
  %v310 = vpack.c.b16 %v190, %v182
  %v311 = vpack.c.b16 %v191, %v183
  %v312 = vpack.c.b16 %v192, %v184
  %v313 = vpack.c.b16 %v193, %v185
  %v314 = vpack.c.b16 %v194, %v186
  %v315 = vpack.c.b16 %v195, %v187
  %v316 = vpack.c.b16 %v204, %v196
  %v317 = vpack.c.b16 %v205, %v197
  %v318 = vpack.c.b16 %v206, %v198
  %v319 = vpack.c.b16 %v207, %v199
  %v320 = vpack.c.b16 %v208, %v200
  %v321 = vpack.c.b16 %v209, %v201
  %v322 = vpack.c.b16 %v210, %v202
  %v323 = vpack.c.b16 %v211, %v203
  %v324 = vpack.c.b16 %v220, %v212
  %v325 = vpack.c.b16 %v221, %v213
  %v326 = vpack.c.b16 %v222, %v214
  %v327 = vpack.c.b16 %v223, %v215
  %v328 = vpack.c.b16 %v224, %v216
  %v329 = vpack.c.b16 %v225, %v217
  %v330 = vpack.c.b16 %v226, %v218
  %v331 = vpack.c.b16 %v227, %v219
  %v332 = vpack.c.b16 %v236, %v228
  %v333 = vpack.c.b16 %v237, %v229
  %v334 = vpack.c.b16 %v238, %v230
  %v335 = vpack.c.b16 %v239, %v231
  %v336 = vpack.c.b16 %v240, %v232
  %v337 = vpack.c.b16 %v241, %v233
  %v338 = vpack.c.b16 %v242, %v234
  %v339 = vpack.c.b16 %v243, %v235
  %v340 = vpack.c.b16 %v252, %v244
  %v341 = vpack.c.b16 %v253, %v245
  %v342 = vpack.c.b16 %v254, %v246
  %v343 = vpack.c.b16 %v255, %v247
  %v344 = vpack.c.b16 %v256, %v248
  %v345 = vpack.c.b16 %v257, %v249
  %v346 = vpack.c.b16 %v258, %v250
  %v347 = vpack.c.b16 %v259, %v251
  %v348 = vpack.c.b16 %v268, %v260
  %v349 = vpack.c.b16 %v269, %v261
  %v350 = vpack.c.b16 %v270, %v262
  %v351 = vpack.c.b16 %v271, %v263
  %v352 = vpack.c.b16 %v272, %v264
  %v353 = vpack.c.b16 %v273, %v265
  %v354 = vpack.c.b16 %v274, %v266
  %v355 = vpack.c.b16 %v275, %v267
  %v356 = vpack.c.b16 %v284, %v276
  %v357 = vpack.c.b16 %v285, %v277
  %v358 = vpack.c.b16 %v286, %v278
  %v359 = vpack.c.b16 %v287, %v279
  %v360 = vpack.c.b16 %v288, %v280
  %v361 = vpack.c.b16 %v289, %v281
  %v362 = vpack.c.b16 %v290, %v282
  %v363 = vpack.c.b16 %v291, %v283
  %v364 = vpack.c.b16 %v300, %v292
  %v365 = vpack.c.b16 %v301, %v293
  %v366 = vpack.c.b16 %v302, %v294
  %v367 = vpack.c.b16 %v303, %v295
  %v368 = vpack.c.b16 %v304, %v296
  %v369 = vpack.c.b16 %v305, %v297
  %v370 = vpack.c.b16 %v306, %v298
  %v371 = vpack.c.b16 %v307, %v299
  %vm428 = vcmask 1022976
  %v430 = vsel %vm428, %v51, 0
  %vm432 = vcmask 1045504
  %vm433 = vcmask 1046528
  %v434 = vsel %vm432, 4294967295, 65535
  %v435 = vsel %vm433, %v434, 0
  %v437 = vand.u32 %v364, %v435
  %v440 = vand.u32 %v365, %v435
  %v443 = vand.u32 %v366, %v435
  %v446 = vand.u32 %v367, %v435
  %v449 = vand.u32 %v368, %v435
  %v452 = vand.u32 %v369, %v435
  %v455 = vand.u32 %v370, %v435
  %v458 = vand.u32 %v371, %v435
  %460 = vmatprep.subr.bf16.mxu0 %v309
  %461 = vmatpush1.bf16.msra.mxu0 %v308
  %462 = vmatprep.subr.bf16.mxu0 %v317
  %463 = vmatpush1.bf16.msra.mxu0 %v316
  %464 = vmatprep.subr.bf16.mxu0 %v325
  %465 = vmatpush1.bf16.msra.mxu0 %v324
  %466 = vmatprep.subr.bf16.mxu0 %v333
  %467 = vmatpush1.bf16.msra.mxu0 %v332
  %468 = vmatprep.subr.bf16.mxu0 %v341
  %469 = vmatpush1.bf16.msra.mxu0 %v340
  %470 = vmatprep.subr.bf16.mxu0 %v349
  %471 = vmatpush1.bf16.msra.mxu0 %v348
  %472 = vmatprep.subr.bf16.mxu0 %v357
  %473 = vmatpush1.bf16.msra.mxu0 %v356
  %474 = vmatprep.subr.bf16.mxu0 %v440
  %475 = vmatpush1.bf16.msra.mxu0 %v437
  %476 = vmatprep.subr.bf16.mxu0 0
  %477 = vmatpush1.bf16.msra.mxu0 0
  %478 = vmatprep.subr.bf16.mxu0 0
  %479 = vmatpush1.bf16.msra.mxu0 0
  %480 = vmatprep.subr.bf16.mxu0 0
  %481 = vmatpush1.bf16.msra.mxu0 0
  %482 = vmatprep.subr.bf16.mxu0 0
  %483 = vmatpush1.bf16.msra.mxu0 0
  %484 = vmatprep.subr.bf16.mxu0 0
  %485 = vmatpush1.bf16.msra.mxu0 0
  %486 = vmatprep.subr.bf16.mxu0 0
  %487 = vmatpush1.bf16.msra.mxu0 0
  %488 = vmatprep.subr.bf16.mxu0 0
  %489 = vmatpush1.bf16.msra.mxu0 0
  %490 = vmatprep.subr.bf16.mxu0 0
  %491 = vmatpush1.bf16.msra.mxu0 0
  %492 = vmatprep.mubr.bf16.mxu0 0
  %493 = vmatmul.mubr.bf16.gmra.mrb[0].mxu0 %v430
  %v494 = vpop.f32.mrb[0].mxu0
  %v495 = vadd.f32 0.0, %v494
  %v496 = vpop.f32.mrb[0].mxu0
  %v497 = vadd.f32 0.0, %v496
  %v498 = vpop.f32.mrb[0].mxu0
  %v499 = vpop.f32.mrb[0].mxu0
  %500 = vdwg.mxu0
  %501 = vmatprep.subr.bf16.mxu0 %v311
  %502 = vmatpush1.bf16.msra.mxu0 %v310
  %503 = vmatprep.subr.bf16.mxu0 %v319
  %504 = vmatpush1.bf16.msra.mxu0 %v318
  %505 = vmatprep.subr.bf16.mxu0 %v327
  %506 = vmatpush1.bf16.msra.mxu0 %v326
  %507 = vmatprep.subr.bf16.mxu0 %v335
  %508 = vmatpush1.bf16.msra.mxu0 %v334
  %509 = vmatprep.subr.bf16.mxu0 %v343
  %510 = vmatpush1.bf16.msra.mxu0 %v342
  %511 = vmatprep.subr.bf16.mxu0 %v351
  %512 = vmatpush1.bf16.msra.mxu0 %v350
  %513 = vmatprep.subr.bf16.mxu0 %v359
  %514 = vmatpush1.bf16.msra.mxu0 %v358
  %515 = vmatprep.subr.bf16.mxu0 %v446
  %516 = vmatpush1.bf16.msra.mxu0 %v443
  %517 = vmatprep.subr.bf16.mxu0 0
  %518 = vmatpush1.bf16.msra.mxu0 0
  %519 = vmatprep.subr.bf16.mxu0 0
  %520 = vmatpush1.bf16.msra.mxu0 0
  %521 = vmatprep.subr.bf16.mxu0 0
  %522 = vmatpush1.bf16.msra.mxu0 0
  %523 = vmatprep.subr.bf16.mxu0 0
  %524 = vmatpush1.bf16.msra.mxu0 0
  %525 = vmatprep.subr.bf16.mxu0 0
  %526 = vmatpush1.bf16.msra.mxu0 0
  %527 = vmatprep.subr.bf16.mxu0 0
  %528 = vmatpush1.bf16.msra.mxu0 0
  %529 = vmatprep.subr.bf16.mxu0 0
  %530 = vmatpush1.bf16.msra.mxu0 0
  %531 = vmatprep.subr.bf16.mxu0 0
  %532 = vmatpush1.bf16.msra.mxu0 0
  %533 = vmatprep.mubr.bf16.mxu0 0
  %534 = vmatmul.mubr.bf16.gmra.mrb[0].mxu0 %v430
  %v535 = vpop.f32.mrb[0].mxu0
  %v536 = vadd.f32 0.0, %v535
  %v537 = vpop.f32.mrb[0].mxu0
  %v538 = vadd.f32 0.0, %v537
  %v539 = vpop.f32.mrb[0].mxu0
  %v540 = vpop.f32.mrb[0].mxu0
  %541 = vdwg.mxu0
  %542 = vmatprep.subr.bf16.mxu0 %v313
  %543 = vmatpush1.bf16.msra.mxu0 %v312
  %544 = vmatprep.subr.bf16.mxu0 %v321
  %545 = vmatpush1.bf16.msra.mxu0 %v320
  %546 = vmatprep.subr.bf16.mxu0 %v329
  %547 = vmatpush1.bf16.msra.mxu0 %v328
  %548 = vmatprep.subr.bf16.mxu0 %v337
  %549 = vmatpush1.bf16.msra.mxu0 %v336
  %550 = vmatprep.subr.bf16.mxu0 %v345
  %551 = vmatpush1.bf16.msra.mxu0 %v344
  %552 = vmatprep.subr.bf16.mxu0 %v353
  %553 = vmatpush1.bf16.msra.mxu0 %v352
  %554 = vmatprep.subr.bf16.mxu0 %v361
  %555 = vmatpush1.bf16.msra.mxu0 %v360
  %556 = vmatprep.subr.bf16.mxu0 %v452
  %557 = vmatpush1.bf16.msra.mxu0 %v449
  %558 = vmatprep.subr.bf16.mxu0 0
  %559 = vmatpush1.bf16.msra.mxu0 0
  %560 = vmatprep.subr.bf16.mxu0 0
  %561 = vmatpush1.bf16.msra.mxu0 0
  %562 = vmatprep.subr.bf16.mxu0 0
  %563 = vmatpush1.bf16.msra.mxu0 0
  %564 = vmatprep.subr.bf16.mxu0 0
  %565 = vmatpush1.bf16.msra.mxu0 0
  %566 = vmatprep.subr.bf16.mxu0 0
  %567 = vmatpush1.bf16.msra.mxu0 0
  %568 = vmatprep.subr.bf16.mxu0 0
  %569 = vmatpush1.bf16.msra.mxu0 0
  %570 = vmatprep.subr.bf16.mxu0 0
  %571 = vmatpush1.bf16.msra.mxu0 0
  %572 = vmatprep.subr.bf16.mxu0 0
  %573 = vmatpush1.bf16.msra.mxu0 0
  %574 = vmatprep.mubr.bf16.mxu0 0
  %575 = vmatmul.mubr.bf16.gmra.mrb[0].mxu0 %v430
  %v576 = vpop.f32.mrb[0].mxu0
  %v577 = vadd.f32 0.0, %v576
  %v578 = vpop.f32.mrb[0].mxu0
  %v579 = vadd.f32 0.0, %v578
  %v580 = vpop.f32.mrb[0].mxu0
  %v581 = vpop.f32.mrb[0].mxu0
  %582 = vdwg.mxu0
  %583 = vmatprep.subr.bf16.mxu0 %v315
  %584 = vmatpush1.bf16.msra.mxu0 %v314
  %585 = vmatprep.subr.bf16.mxu0 %v323
  %586 = vmatpush1.bf16.msra.mxu0 %v322
  %587 = vmatprep.subr.bf16.mxu0 %v331
  %588 = vmatpush1.bf16.msra.mxu0 %v330
  %589 = vmatprep.subr.bf16.mxu0 %v339
  %590 = vmatpush1.bf16.msra.mxu0 %v338
  %591 = vmatprep.subr.bf16.mxu0 %v347
  %592 = vmatpush1.bf16.msra.mxu0 %v346
  %593 = vmatprep.subr.bf16.mxu0 %v355
  %594 = vmatpush1.bf16.msra.mxu0 %v354
  %595 = vmatprep.subr.bf16.mxu0 %v363
  %596 = vmatpush1.bf16.msra.mxu0 %v362
  %597 = vmatprep.subr.bf16.mxu0 %v458
  %598 = vmatpush1.bf16.msra.mxu0 %v455
  %599 = vmatprep.subr.bf16.mxu0 0
  %600 = vmatpush1.bf16.msra.mxu0 0
  %601 = vmatprep.subr.bf16.mxu0 0
  %602 = vmatpush1.bf16.msra.mxu0 0
  %603 = vmatprep.subr.bf16.mxu0 0
  %604 = vmatpush1.bf16.msra.mxu0 0
  %605 = vmatprep.subr.bf16.mxu0 0
  %606 = vmatpush1.bf16.msra.mxu0 0
  %607 = vmatprep.subr.bf16.mxu0 0
  %608 = vmatpush1.bf16.msra.mxu0 0
  %609 = vmatprep.subr.bf16.mxu0 0
  %610 = vmatpush1.bf16.msra.mxu0 0
  %611 = vmatprep.subr.bf16.mxu0 0
  %612 = vmatpush1.bf16.msra.mxu0 0
  %613 = vmatprep.subr.bf16.mxu0 0
  %614 = vmatpush1.bf16.msra.mxu0 0
  %615 = vmatprep.mubr.bf16.mxu0 0
  %616 = vmatmul.mubr.bf16.gmra.mrb[0].mxu0 %v430
  %v617 = vpop.f32.mrb[0].mxu0
  %v618 = vadd.f32 0.0, %v617
  %v619 = vpop.f32.mrb[0].mxu0
  %v620 = vadd.f32 0.0, %v619
  %v621 = vpop.f32.mrb[0].mxu0
  %v622 = vpop.f32.mrb[0].mxu0
  %623 = vdwg.mxu0
  %v624 = vadd.f32 %v495, %v497
  %v625 = vmul.f32 %v624, 0.5
  %v626 = vadd.f32 %v536, %v538
  %v627 = vmul.f32 %v626, 0.5
  %v628 = vadd.f32 %v577, %v579
  %v629 = vmul.f32 %v628, 0.5
  %v630 = vadd.f32 %v618, %v620
  %v631 = vmul.f32 %v630, 0.5
  %v632 = vpack.c.bf16 %v625, %v625
  %v633 = vpack.c.bf16 %v627, %v627
  %v634 = vpack.c.bf16 %v629, %v629
  %v635 = vpack.c.bf16 %v631, %v631
  %v640 = vcombine.low %v632, %v633
  %v641 = vcombine.low %v634, %v635
  %v643 = vunpack.c.l.s4 1983009808
  %v644 = vunpack.c.0.s8 %v643
  %v645 = vlaneseq
  %v646 = vshrl.u32 %v645, 7
  %v647 = vsub.s32 %v644, %v646
  %v648 = vrot.slane %v640, %v647
  %v650 = vunpack.c.l.s4 1983009808
  %v651 = vunpack.c.0.s8 %v650
  %v652 = vlaneseq
  %v653 = vshrl.u32 %v652, 7
  %v654 = vsub.s32 %v651, %v653
  %v655 = vrot.slane %v641, %v654
  %v656 = vcombine.low %v648, %v655
  %658 = vst [vmem:[%s47] sm:$0xff] %v656
  %p659 = scmp.eq.s32.totalorder 0, 0
  // Predicated region
  $region10: #{_lambda_.5} parent=0 // pred_check
    %p660 = pneg %p659
  $region11: #{_lambda_.5} parent=0 // pred_check_branch
    %662 = sbr.rel (%p660) target = $region13
  $region12: #{_lambda_.5} parent=0 // pred_region
    %vm663 = vcmask 3072
    %664 = vst.msk [vmem:[%s3] sm:$0xf] %vm663, 0.0
    %665 = vst.msk [vmem:[%s4] sm:$0xf] %vm663, 0.0
  $region13: #{_lambda_.5} parent=0 // pred_fallthru
    _
  %v666 = vld [vmem:[%s3] sm:$0xf]
  %vm667 = vcmask 1043456
  %v668 = vsel %vm667, %v625, 0.0
  %v669 = vsel %vm667, %v627, 0.0
  %v670 = vadd.f32 %v668, %v669
  %v671 = vsel %vm667, %v629, 0.0
  %v672 = vadd.f32 %v670, %v671
  %v673 = vsel %vm667, %v631, 0.0
  %v674 = vadd.f32 %v672, %v673
  %675 = vadd.xlane.f32.xlu0 %v674
  %v676 = vpop.xlane.xlu0 %675
  %v677 = vadd.f32 %v666, %v676
  %vm678 = vcmask 3072
  %679 = vst.msk [vmem:[%s3] sm:$0xf] %vm678, %v677
  %v680 = vld [vmem:[%s4] sm:$0xf]
  %v681 = vmul.f32 %v625, %v625
  %v682 = vmul.f32 %v627, %v627
  %v683 = vmul.f32 %v629, %v629
  %v684 = vmul.f32 %v631, %v631
  %v685 = vsel %vm667, %v681, 0.0
  %v686 = vsel %vm667, %v682, 0.0
  %v687 = vadd.f32 %v685, %v686
  %v688 = vsel %vm667, %v683, 0.0
  %v689 = vadd.f32 %v687, %v688
  %v690 = vsel %vm667, %v684, 0.0
  %v691 = vadd.f32 %v689, %v690
  %692 = vadd.xlane.f32.xlu0 %v691
  %v693 = vpop.xlane.xlu0 %692
  %v694 = vadd.f32 %v680, %v693
  %695 = vst.msk [vmem:[%s4] sm:$0xf] %vm678, %v694
  %s696 = sadd.s32 0, 0
  %s697 = smul.u32 4, %s696
  %p698 = scmp.lt.s32.totalorder %s697, 3
  %s699 = scalar_select %p698, %s697, 3
  %s700 = smul.addr %s699, 2
  %s701 = scalar_lea.vmem %s2, %s700
  // Predicated region
  $region14: #{_lambda_.5} parent=0 // pred_check
    _
  $region15: #{_lambda_.5} parent=0 // pred_check_branch
    %703 = sbr.rel (0) target = $region17
  $region16: #{_lambda_.5} parent=0 // pred_region
    %s704 = sadd.s32 0, 0
    %s705 = smul.u32 4, %s704
  $region17: #{_lambda_.5} parent=0 // pred_fallthru
    _
  // Predicated region
  $region18: #{_lambda_.5} parent=0 // pred_check
    _
  $region19: #{_lambda_.5} parent=0 // pred_check_branch
    %707 = sbr.rel (0) target = $region21
  $region20: #{_lambda_.5} parent=0 // pred_region
    _
  $region21: #{_lambda_.5} parent=0 // pred_fallthru
    _
  // Predicated region
  $region22: #{_lambda_.5} parent=0 // pred_check
    _
  $region23: #{_lambda_.5} parent=0 // pred_check_branch
    %709 = sbr.rel (0) target = $region25
  $region24: #{_lambda_.5} parent=0 // pred_region
    _
  $region25: #{_lambda_.5} parent=0 // pred_fallthru
    _
  // Predicated region
  $region26: #{_lambda_.5} parent=0 // pred_check
    _
  $region27: #{_lambda_.5} parent=0 // pred_check_branch
    %711 = sbr.rel (0) target = $region29
  $region28: #{_lambda_.5} parent=0 // pred_region
    %s712 = sadd.s32 0, 0
    %s713 = smul.u32 4, %s712
    %p714 = scmp.lt.s32.totalorder %s713, 3
    %s715 = scalar_select %p714, %s713, 3
    %s716 = smul.addr %s715, 2
    %s717 = scalar_lea.vmem %s2, %s716
  $region29: #{_lambda_.5} parent=0 // pred_fallthru
    _
  // Predicated region
  $region30: #{_lambda_.5} parent=0 // pred_check
    _
  $region31: #{_lambda_.5} parent=0 // pred_check_branch
    %719 = sbr.rel (0) target = $region33
  $region32: #{_lambda_.5} parent=0 // pred_region
    _
  $region33: #{_lambda_.5} parent=0 // pred_fallthru
    _
  // Predicated region
  $region34: #{_lambda_.5} parent=0 // pred_check
    _
  $region35: #{_lambda_.5} parent=0 // pred_check_branch
    %721 = sbr.rel (0) target = $region37
  $region36: #{_lambda_.5} parent=0 // pred_region
    _
  $region37: #{_lambda_.5} parent=0 // pred_fallthru
    _

// kernel: _lambda_.6
$region0: #{_lambda_.6}
  #allocation0 [shape = 'u32[]', space=smem, size = 0x4, offset = 0x4, fixed_abs, tag = 'smem constant byte address 0x4 - core index']
  #allocation1 [shape = 'u32[144,128]{1,0:T(1,128)}', space=vmem, size = 0x12000, scoped, tag = 'internal scratch']
  %s0 = inlined_call_operand.vmem [shape: bf16[8,108], index: 0, kind: input, shape index: {}]
  %s1 = inlined_call_operand.vmem [shape: bf16[108,512], index: 1, kind: input, shape index: {}]
  %s2 = inlined_call_operand.vmem [shape: bf16[8,256], index: 2, kind: output, shape index: {0}]
  %s3 = inlined_call_operand.vmem [shape: f32[1,8,1], index: 3, kind: output, shape index: {1}]
  %s4 = inlined_call_operand.vmem [shape: f32[1,8,1], index: 4, kind: output, shape index: {2}]
  %5 = xla_tuple %s2, %s3, %s4
  %s6 = sld [smem:[#allocation0]]
  $region38: #{_lambda_.6} parent=0
    _
  %s8 = ssub.s32 1, %s6
  %s9 = scalar_select 0, %s8, %s6
  // Predicated region
  $region2: #{_lambda_.6} parent=0 // pred_check
    _
  $region3: #{_lambda_.6} parent=0 // pred_check_branch
    %11 = sbr.rel (0) target = $region5
  $region4: #{_lambda_.6} parent=0 // pred_region
    _
  $region5: #{_lambda_.6} parent=0 // pred_fallthru
    _
  // Predicated region
  $region6: #{_lambda_.6} parent=0 // pred_check
    _
  $region7: #{_lambda_.6} parent=0 // pred_check_branch
    %13 = sbr.rel (0) target = $region9
  $region8: #{_lambda_.6} parent=0 // pred_region
    %s14 = sadd.s32 0, 0
    %s15 = smul.u32 4, %s14
    %p16 = scmp.lt.s32.totalorder %s15, 3
    %s17 = scalar_select %p16, %s15, 3
    %s18 = smul.addr %s17, 4
    %s19 = scalar_lea.vmem %s1, %s18
    %s20 = sadd.s32 0, 0
    %s21 = smul.u32 4, %s20
  $region9: #{_lambda_.6} parent=0 // pred_fallthru
    _
  %s22 = sadd.s32 0, 0
  %s23 = smul.u32 4, %s22
  %p24 = scmp.lt.s32.totalorder %s23, 3
  %s25 = scalar_select %p24, %s23, 3
  %s26 = smul.addr %s25, 4
  %s27 = scalar_lea.vmem %s1, %s26
  %s28 = sadd.s32 0, 0
  %s29 = smul.u32 2, %s28
  %p30 = scmp.lt.s32.totalorder %s29, 1
  %s31 = scalar_select %p30, %s29, 1
  %s32 = smul.addr %s31, 4
  %s33 = scalar_lea.vmem %s2, %s32
  %s34 = sadd.s32 0, 0
  %s35 = smul.u32 4, %s34
  %p36 = scmp.lt.s32.totalorder %s35, 3
  %s37 = scalar_select %p36, %s35, 3
  %s38 = smul.addr %s37, 4
  %s39 = scalar_lea.vmem %s1, %s38
  %s40 = sadd.s32 0, 0
  %s41 = smul.u32 4, %s40
  %s42 = sadd.s32 0, 0
  %s43 = smul.u32 2, %s42
  %p44 = scmp.lt.s32.totalorder %s43, 1
  %s45 = scalar_select %p44, %s43, 1
  %s46 = smul.addr %s45, 4
  %s47 = scalar_lea.vmem %s2, %s46
  %s48 = sadd.s32 0, 0
  %s49 = smul.u32 2, %s48
  %v51 = vld [vmem:[%s0] sm:$0xf]
  %v52 = vld [vmem:[%s39] sm:$0xff]
  %v53 = vld [vmem:[%s39 + $0x8] sm:$0xff]
  %v54 = vld [vmem:[%s39 + $0x10] sm:$0xff]
  %v55 = vld [vmem:[%s39 + $0x18] sm:$0xff]
  %v56 = vld [vmem:[%s39 + $0x20] sm:$0xff]
  %v57 = vld [vmem:[%s39 + $0x28] sm:$0xff]
  %v58 = vld [vmem:[%s39 + $0x30] sm:$0xff]
  %v59 = vld [vmem:[%s39 + $0x38] sm:$0xff]
  %v60 = vld [vmem:[%s39 + $0x40] sm:$0xff]
  %v61 = vld [vmem:[%s39 + $0x48] sm:$0xff]
  %v62 = vld [vmem:[%s39 + $0x50] sm:$0xff]
  %v63 = vld [vmem:[%s39 + $0x58] sm:$0xff]
  %v64 = vld [vmem:[%s39 + $0x60] sm:$0xff]
  %v65 = vld [vmem:[%s39 + $0x68] sm:$0xff]
  %v66 = vld [vmem:[%s39 + $0x70] sm:$0xff]
  %v67 = vld [vmem:[%s39 + $0x78] sm:$0xff]
  %v68 = vld [vmem:[%s39 + $0x80] sm:$0xff]
  %v69 = vld [vmem:[%s39 + $0x88] sm:$0xff]
  %v70 = vld [vmem:[%s39 + $0x90] sm:$0xff]
  %v71 = vld [vmem:[%s39 + $0x98] sm:$0xff]
  %v72 = vld [vmem:[%s39 + $0xa0] sm:$0xff]
  %v73 = vld [vmem:[%s39 + $0xa8] sm:$0xff]
  %v74 = vld [vmem:[%s39 + $0xb0] sm:$0xff]
  %v75 = vld [vmem:[%s39 + $0xb8] sm:$0xff]
  %v76 = vld [vmem:[%s39 + $0xc0] sm:$0xff]
  %v77 = vld [vmem:[%s39 + $0xc8] sm:$0xff]
  %v78 = vld [vmem:[%s39 + $0xd0] sm:$0x33]
  %v79 = vld [vmem:[%s39 + $0xd8] sm:$0x33]
  %v108 = vunpack.c.l.b16 %v52
  %v109 = vunpack.c.h.b16 %v52
  %v110 = vunpack.c.l.b16 %v53
  %v111 = vunpack.c.h.b16 %v53
  %v112 = vunpack.c.l.b16 %v54
  %v113 = vunpack.c.h.b16 %v54
  %v114 = vunpack.c.l.b16 %v55
  %v115 = vunpack.c.h.b16 %v55
  %v116 = vunpack.c.l.b16 %v56
  %v117 = vunpack.c.h.b16 %v56
  %v118 = vunpack.c.l.b16 %v57
  %v119 = vunpack.c.h.b16 %v57
  %v120 = vunpack.c.l.b16 %v58
  %v121 = vunpack.c.h.b16 %v58
  %v122 = vunpack.c.l.b16 %v59
  %v123 = vunpack.c.h.b16 %v59
  %v124 = vunpack.c.l.b16 %v60
  %v125 = vunpack.c.h.b16 %v60
  %v126 = vunpack.c.l.b16 %v61
  %v127 = vunpack.c.h.b16 %v61
  %v128 = vunpack.c.l.b16 %v62
  %v129 = vunpack.c.h.b16 %v62
  %v130 = vunpack.c.l.b16 %v63
  %v131 = vunpack.c.h.b16 %v63
  %v132 = vunpack.c.l.b16 %v64
  %v133 = vunpack.c.h.b16 %v64
  %v134 = vunpack.c.l.b16 %v65
  %v135 = vunpack.c.h.b16 %v65
  %v136 = vunpack.c.l.b16 %v66
  %v137 = vunpack.c.h.b16 %v66
  %v138 = vunpack.c.l.b16 %v67
  %v139 = vunpack.c.h.b16 %v67
  %v140 = vunpack.c.l.b16 %v68
  %v141 = vunpack.c.h.b16 %v68
  %v142 = vunpack.c.l.b16 %v69
  %v143 = vunpack.c.h.b16 %v69
  %v144 = vunpack.c.l.b16 %v70
  %v145 = vunpack.c.h.b16 %v70
  %v146 = vunpack.c.l.b16 %v71
  %v147 = vunpack.c.h.b16 %v71
  %v148 = vunpack.c.l.b16 %v72
  %v149 = vunpack.c.h.b16 %v72
  %v150 = vunpack.c.l.b16 %v73
  %v151 = vunpack.c.h.b16 %v73
  %v152 = vunpack.c.l.b16 %v74
  %v153 = vunpack.c.h.b16 %v74
  %v154 = vunpack.c.l.b16 %v75
  %v155 = vunpack.c.h.b16 %v75
  %v156 = vunpack.c.l.b16 %v76
  %v157 = vunpack.c.h.b16 %v76
  %v158 = vunpack.c.l.b16 %v77
  %v159 = vunpack.c.h.b16 %v77
  %v160 = vunpack.c.l.b16 %v78
  %v161 = vunpack.c.h.b16 %v78
  %v162 = vunpack.c.l.b16 %v79
  %v163 = vunpack.c.h.b16 %v79
  %v164 = vpack.c.b16 %v112, %v108
  %v165 = vpack.c.b16 %v113, %v109
  %v166 = vpack.c.b16 %v114, %v110
  %v167 = vpack.c.b16 %v115, %v111
  %v168 = vpack.c.b16 %v120, %v116
  %v169 = vpack.c.b16 %v121, %v117
  %v170 = vpack.c.b16 %v122, %v118
  %v171 = vpack.c.b16 %v123, %v119
  %v172 = vpack.c.b16 %v128, %v124
  %v173 = vpack.c.b16 %v129, %v125
  %v174 = vpack.c.b16 %v130, %v126
  %v175 = vpack.c.b16 %v131, %v127
  %v176 = vpack.c.b16 %v136, %v132
  %v177 = vpack.c.b16 %v137, %v133
  %v178 = vpack.c.b16 %v138, %v134
  %v179 = vpack.c.b16 %v139, %v135
  %v180 = vpack.c.b16 %v144, %v140
  %v181 = vpack.c.b16 %v145, %v141
  %v182 = vpack.c.b16 %v146, %v142
  %v183 = vpack.c.b16 %v147, %v143
  %v184 = vpack.c.b16 %v152, %v148
  %v185 = vpack.c.b16 %v153, %v149
  %v186 = vpack.c.b16 %v154, %v150
  %v187 = vpack.c.b16 %v155, %v151
  %v188 = vpack.c.b16 %v160, %v156
  %v189 = vpack.c.b16 %v161, %v157
  %v190 = vpack.c.b16 %v162, %v158
  %v191 = vpack.c.b16 %v163, %v159
  %vm216 = vcmask 883712
  %v218 = vsel %vm216, %v51, 0
  %vm220 = vcmask 1045504
  %v222 = vsel %vm220, %v188, 0
  %v225 = vsel %vm220, %v189, 0
  %v228 = vsel %vm220, %v190, 0
  %v231 = vsel %vm220, %v191, 0
  %233 = vmatprep.subr.bf16.mxu0 %v165
  %234 = vmatpush1.bf16.msra.mxu0 %v164
  %235 = vmatprep.subr.bf16.mxu0 %v169
  %236 = vmatpush1.bf16.msra.mxu0 %v168
  %237 = vmatprep.subr.bf16.mxu0 %v173
  %238 = vmatpush1.bf16.msra.mxu0 %v172
  %239 = vmatprep.subr.bf16.mxu0 %v177
  %240 = vmatpush1.bf16.msra.mxu0 %v176
  %241 = vmatprep.subr.bf16.mxu0 %v181
  %242 = vmatpush1.bf16.msra.mxu0 %v180
  %243 = vmatprep.subr.bf16.mxu0 %v185
  %244 = vmatpush1.bf16.msra.mxu0 %v184
  %245 = vmatprep.subr.bf16.mxu0 %v225
  %246 = vmatpush1.bf16.msra.mxu0 %v222
  %247 = vmatprep.subr.bf16.mxu0 0
  %248 = vmatpush1.bf16.msra.mxu0 0
  %249 = vmatprep.subr.bf16.mxu0 0
  %250 = vmatpush1.bf16.msra.mxu0 0
  %251 = vmatprep.subr.bf16.mxu0 0
  %252 = vmatpush1.bf16.msra.mxu0 0
  %253 = vmatprep.subr.bf16.mxu0 0
  %254 = vmatpush1.bf16.msra.mxu0 0
  %255 = vmatprep.subr.bf16.mxu0 0
  %256 = vmatpush1.bf16.msra.mxu0 0
  %257 = vmatprep.subr.bf16.mxu0 0
  %258 = vmatpush1.bf16.msra.mxu0 0
  %259 = vmatprep.subr.bf16.mxu0 0
  %260 = vmatpush1.bf16.msra.mxu0 0
  %261 = vmatprep.subr.bf16.mxu0 0
  %262 = vmatpush1.bf16.msra.mxu0 0
  %263 = vmatprep.subr.bf16.mxu0 0
  %264 = vmatpush1.bf16.msra.mxu0 0
  %265 = vmatprep.mubr.bf16.mxu0 0
  %266 = vmatmul.mubr.bf16.gmra.mrb[0].mxu0 %v218
  %v267 = vpop.f32.mrb[0].mxu0
  %v268 = vadd.f32 0.0, %v267
  %v269 = vpop.f32.mrb[0].mxu0
  %v270 = vadd.f32 0.0, %v269
  %v271 = vpop.f32.mrb[0].mxu0
  %v272 = vpop.f32.mrb[0].mxu0
  %273 = vdwg.mxu0
  %274 = vmatprep.subr.bf16.mxu0 %v167
  %275 = vmatpush1.bf16.msra.mxu0 %v166
  %276 = vmatprep.subr.bf16.mxu0 %v171
  %277 = vmatpush1.bf16.msra.mxu0 %v170
  %278 = vmatprep.subr.bf16.mxu0 %v175
  %279 = vmatpush1.bf16.msra.mxu0 %v174
  %280 = vmatprep.subr.bf16.mxu0 %v179
  %281 = vmatpush1.bf16.msra.mxu0 %v178
  %282 = vmatprep.subr.bf16.mxu0 %v183
  %283 = vmatpush1.bf16.msra.mxu0 %v182
  %284 = vmatprep.subr.bf16.mxu0 %v187
  %285 = vmatpush1.bf16.msra.mxu0 %v186
  %286 = vmatprep.subr.bf16.mxu0 %v231
  %287 = vmatpush1.bf16.msra.mxu0 %v228
  %288 = vmatprep.subr.bf16.mxu0 0
  %289 = vmatpush1.bf16.msra.mxu0 0
  %290 = vmatprep.subr.bf16.mxu0 0
  %291 = vmatpush1.bf16.msra.mxu0 0
  %292 = vmatprep.subr.bf16.mxu0 0
  %293 = vmatpush1.bf16.msra.mxu0 0
  %294 = vmatprep.subr.bf16.mxu0 0
  %295 = vmatpush1.bf16.msra.mxu0 0
  %296 = vmatprep.subr.bf16.mxu0 0
  %297 = vmatpush1.bf16.msra.mxu0 0
  %298 = vmatprep.subr.bf16.mxu0 0
  %299 = vmatpush1.bf16.msra.mxu0 0
  %300 = vmatprep.subr.bf16.mxu0 0
  %301 = vmatpush1.bf16.msra.mxu0 0
  %302 = vmatprep.subr.bf16.mxu0 0
  %303 = vmatpush1.bf16.msra.mxu0 0
  %304 = vmatprep.subr.bf16.mxu0 0
  %305 = vmatpush1.bf16.msra.mxu0 0
  %306 = vmatprep.mubr.bf16.mxu0 0
  %307 = vmatmul.mubr.bf16.gmra.mrb[0].mxu0 %v218
  %v308 = vpop.f32.mrb[0].mxu0
  %v309 = vadd.f32 0.0, %v308
  %v310 = vpop.f32.mrb[0].mxu0
  %v311 = vadd.f32 0.0, %v310
  %v312 = vpop.f32.mrb[0].mxu0
  %v313 = vpop.f32.mrb[0].mxu0
  %314 = vdwg.mxu0
  %v315 = vadd.f32 %v268, %v270
  %v316 = vmul.f32 %v315, 0.5
  %v317 = vadd.f32 %v309, %v311
  %v318 = vmul.f32 %v317, 0.5
  %v319 = vpack.c.bf16 %v316, %v316
  %v320 = vpack.c.bf16 %v318, %v318
  %v323 = vunpack.c.l.b16 %v319
  %v324 = vunpack.c.l.b16 %v320
  %v325 = vpack.c.b16 %v324, %v323
  %327 = vst [vmem:[%s47] sm:$0xff] %v325
  %p328 = scmp.eq.s32.totalorder 0, 0
  // Predicated region
  $region10: #{_lambda_.6} parent=0 // pred_check
    %p329 = pneg %p328
  $region11: #{_lambda_.6} parent=0 // pred_check_branch
    %331 = sbr.rel (%p329) target = $region13
  $region12: #{_lambda_.6} parent=0 // pred_region
    %vm332 = vcmask 7168
    %333 = vst.msk [vmem:[%s3] sm:$0xff] %vm332, 0.0
    %334 = vst.msk [vmem:[%s4] sm:$0xff] %vm332, 0.0
  $region13: #{_lambda_.6} parent=0 // pred_fallthru
    _
  %v335 = vld [vmem:[%s3] sm:$0xff]
  %v336 = vadd.f32 %v316, %v318
  %337 = vadd.xlane.f32.xlu0 %v336
  %v338 = vpop.xlane.xlu0 %337
  %v339 = vadd.f32 %v335, %v338
  %vm340 = vcmask 7168
  %341 = vst.msk [vmem:[%s3] sm:$0xff] %vm340, %v339
  %v342 = vld [vmem:[%s4] sm:$0xff]
  %v343 = vmul.f32 %v316, %v316
  %v344 = vmul.f32 %v318, %v318
  %v345 = vadd.f32 %v343, %v344
  %346 = vadd.xlane.f32.xlu0 %v345
  %v347 = vpop.xlane.xlu0 %346
  %v348 = vadd.f32 %v342, %v347
  %349 = vst.msk [vmem:[%s4] sm:$0xff] %vm340, %v348
  %s350 = sadd.s32 0, 0
  %s351 = smul.u32 2, %s350
  %p352 = scmp.lt.s32.totalorder %s351, 1
  %s353 = scalar_select %p352, %s351, 1
  %s354 = smul.addr %s353, 4
  %s355 = scalar_lea.vmem %s2, %s354
  // Predicated region
  $region14: #{_lambda_.6} parent=0 // pred_check
    _
  $region15: #{_lambda_.6} parent=0 // pred_check_branch
    %357 = sbr.rel (0) target = $region17
  $region16: #{_lambda_.6} parent=0 // pred_region
    %s358 = sadd.s32 0, 0
    %s359 = smul.u32 2, %s358
  $region17: #{_lambda_.6} parent=0 // pred_fallthru
    _
  // Predicated region
  $region18: #{_lambda_.6} parent=0 // pred_check
    _
  $region19: #{_lambda_.6} parent=0 // pred_check_branch
    %361 = sbr.rel (0) target = $region21
  $region20: #{_lambda_.6} parent=0 // pred_region
    _
  $region21: #{_lambda_.6} parent=0 // pred_fallthru
    _
  // Predicated region
  $region22: #{_lambda_.6} parent=0 // pred_check
    _
  $region23: #{_lambda_.6} parent=0 // pred_check_branch
    %363 = sbr.rel (0) target = $region25
  $region24: #{_lambda_.6} parent=0 // pred_region
    _
  $region25: #{_lambda_.6} parent=0 // pred_fallthru
    _
  // Predicated region
  $region26: #{_lambda_.6} parent=0 // pred_check
    _
  $region27: #{_lambda_.6} parent=0 // pred_check_branch
    %365 = sbr.rel (0) target = $region29
  $region28: #{_lambda_.6} parent=0 // pred_region
    %s366 = sadd.s32 0, 0
    %s367 = smul.u32 2, %s366
    %p368 = scmp.lt.s32.totalorder %s367, 1
    %s369 = scalar_select %p368, %s367, 1
    %s370 = smul.addr %s369, 4
    %s371 = scalar_lea.vmem %s2, %s370
  $region29: #{_lambda_.6} parent=0 // pred_fallthru
    _
  // Predicated region
  $region30: #{_lambda_.6} parent=0 // pred_check
    _
  $region31: #{_lambda_.6} parent=0 // pred_check_branch
    %373 = sbr.rel (0) target = $region33
  $region32: #{_lambda_.6} parent=0 // pred_region
    _
  $region33: #{_lambda_.6} parent=0 // pred_fallthru
    _
  // Predicated region
  $region34: #{_lambda_.6} parent=0 // pred_check
    _
  $region35: #{_lambda_.6} parent=0 // pred_check_branch
    %375 = sbr.rel (0) target = $region37
  $region36: #{_lambda_.6} parent=0 // pred_region
    _
  $region37: #{_lambda_.6} parent=0 // pred_fallthru
    _

// kernel: _lambda_.7
$region0: #{_lambda_.7}
  #allocation0 [shape = 'u32[]', space=smem, size = 0x4, offset = 0x4, fixed_abs, tag = 'smem constant byte address 0x4 - core index']
  #allocation1 [shape = 'u32[144,128]{1,0:T(1,128)}', space=vmem, size = 0x12000, scoped, tag = 'internal scratch']
  %s0 = inlined_call_operand.vmem [shape: bf16[8,256], index: 0, kind: input, shape index: {}]
  %s1 = inlined_call_operand.vmem [shape: f32[8,1], index: 1, kind: input, shape index: {}]
  %s2 = inlined_call_operand.vmem [shape: f32[8,1], index: 2, kind: input, shape index: {}]
  %s3 = inlined_call_operand.vmem [shape: f32[2,2], index: 3, kind: input, shape index: {}]
  %s4 = inlined_call_operand.vmem [shape: f32[1,2], index: 4, kind: input, shape index: {}]
  %s5 = inlined_call_operand.vmem [shape: f32[2,2], index: 5, kind: input, shape index: {}]
  %s6 = inlined_call_operand.vmem [shape: f32[1,2], index: 6, kind: input, shape index: {}]
  %s7 = inlined_call_operand.vmem [shape: f32[8,1], index: 7, kind: input, shape index: {}]
  %s8 = inlined_call_operand.vmem [shape: f32[8,1], index: 8, kind: input, shape index: {}]
  %s9 = inlined_call_operand.vmem [shape: f32[8,128], index: 9, kind: output, shape index: {}]
  %s10 = sld [smem:[#allocation0]]
  $region46: #{_lambda_.7} parent=0
    _
  %s12 = ssub.s32 1, %s10
  %s13 = scalar_select 0, %s12, %s10
  // Predicated region
  $region2: #{_lambda_.7} parent=0 // pred_check
    _
  $region3: #{_lambda_.7} parent=0 // pred_check_branch
    %15 = sbr.rel (0) target = $region5
  $region4: #{_lambda_.7} parent=0 // pred_region
    _
  $region5: #{_lambda_.7} parent=0 // pred_fallthru
    _
  // Predicated region
  $region6: #{_lambda_.7} parent=0 // pred_check
    _
  $region7: #{_lambda_.7} parent=0 // pred_check_branch
    %17 = sbr.rel (0) target = $region9
  $region8: #{_lambda_.7} parent=0 // pred_region
    _
  $region9: #{_lambda_.7} parent=0 // pred_fallthru
    _
  // Predicated region
  $region10: #{_lambda_.7} parent=0 // pred_check
    _
  $region11: #{_lambda_.7} parent=0 // pred_check_branch
    %19 = sbr.rel (0) target = $region13
  $region12: #{_lambda_.7} parent=0 // pred_region
    _
  $region13: #{_lambda_.7} parent=0 // pred_fallthru
    _
  // Predicated region
  $region14: #{_lambda_.7} parent=0 // pred_check
    _
  $region15: #{_lambda_.7} parent=0 // pred_check_branch
    %21 = sbr.rel (0) target = $region17
  $region16: #{_lambda_.7} parent=0 // pred_region
    _
  $region17: #{_lambda_.7} parent=0 // pred_fallthru
    _
  // Predicated region
  $region18: #{_lambda_.7} parent=0 // pred_check
    _
  $region19: #{_lambda_.7} parent=0 // pred_check_branch
    %23 = sbr.rel (0) target = $region21
  $region20: #{_lambda_.7} parent=0 // pred_region
    _
  $region21: #{_lambda_.7} parent=0 // pred_fallthru
    _
  // Predicated region
  $region22: #{_lambda_.7} parent=0 // pred_check
    _
  $region23: #{_lambda_.7} parent=0 // pred_check_branch
    %25 = sbr.rel (0) target = $region25
  $region24: #{_lambda_.7} parent=0 // pred_region
    _
  $region25: #{_lambda_.7} parent=0 // pred_fallthru
    _
  // Predicated region
  $region26: #{_lambda_.7} parent=0 // pred_check
    _
  $region27: #{_lambda_.7} parent=0 // pred_check_branch
    %27 = sbr.rel (0) target = $region29
  $region28: #{_lambda_.7} parent=0 // pred_region
    _
  $region29: #{_lambda_.7} parent=0 // pred_fallthru
    _
  // Predicated region
  $region30: #{_lambda_.7} parent=0 // pred_check
    _
  $region31: #{_lambda_.7} parent=0 // pred_check_branch
    %29 = sbr.rel (0) target = $region33
  $region32: #{_lambda_.7} parent=0 // pred_region
    _
  $region33: #{_lambda_.7} parent=0 // pred_fallthru
    _
  // Predicated region
  $region34: #{_lambda_.7} parent=0 // pred_check
    _
  $region35: #{_lambda_.7} parent=0 // pred_check_branch
    %31 = sbr.rel (0) target = $region37
  $region36: #{_lambda_.7} parent=0 // pred_region
    _
  $region37: #{_lambda_.7} parent=0 // pred_fallthru
    _
  %v32 = vld [vmem:[%s0] sm:$0xff]
  %v33 = vunpack.c.l.bf16 %v32
  %v34 = vunpack.c.h.bf16 %v32
  %v35 = vld [vmem:[%s1] sm:$0xff]
  %37 = vset.pattern.permute.xlu0 0
  %38 = vperm.xlu0 %37, %v35
  %v39 = vpop.permute.xlu0 %38
  %v41 = vmul.f32 %v33, %v39
  %v42 = vmul.f32 %v34, %v39
  %v43 = vld [vmem:[%s2] sm:$0xff]
  %45 = vset.pattern.permute.xlu0 0
  %46 = vperm.xlu0 %45, %v43
  %v47 = vpop.permute.xlu0 %46
  %v49 = vadd.f32 %v41, %v47
  %v50 = vadd.f32 %v42, %v47
  %v51 = vxor.u32 %v49, 2147483648
  %v52 = vxor.u32 %v50, 2147483648
  %v53 = vmul.f32 %v51, 1.442695
  %v54 = vpow.pop %v53
  %v55 = vmul.f32 %v52, 1.442695
  %v56 = vpow.pop %v55
  %v57 = vadd.f32 %v54, 1.0
  %v58 = vadd.f32 %v56, 1.0
  %v59 = vrcp.pop %v57
  %v60 = vmul.f32 1.0, %v59
  %v61 = vrcp.pop %v58
  %v62 = vmul.f32 1.0, %v61
  %v63 = vmul.f32 %v49, %v60
  %v64 = vmul.f32 %v50, %v62
  %vm65 = vcmask 523264
  %v66 = vsel %vm65, %v63, 0.0
  %67 = vadd.xlane.f32.xlu0 %v66
  %v68 = vpop.xlane.xlu0 %67
  %v69 = vmul.f32 %v68, 0.015625
  %v70 = vsel %vm65, %v64, 0.0
  %71 = vadd.xlane.f32.xlu0 %v70
  %v72 = vpop.xlane.xlu0 %71
  %v73 = vmul.f32 %v72, 0.015625
  %v74 = vld [vmem:[%s4] sm:$0x1]
  %v75 = vld [vmem:[%s3] sm:$0x1]
  %v76 = vlaneseq
  %v77 = vshrl.u32 %v76, 7
  %v78 = vsub.s32 0, %v77
  %v79 = vrot.slane %v75, %v78
  %v80 = vmul.f32 %v69, %v79
  %v82 = vlaneseq
  %v83 = vshrl.u32 %v82, 7
  %v84 = vsub.s32 0, %v83
  %v85 = vrot.slane %v74, %v84
  %v87 = vadd.f32 %v85, %v80
  %v88 = vld [vmem:[%s3 + $0x1] sm:$0x1]
  %v89 = vlaneseq
  %v90 = vshrl.u32 %v89, 7
  %v91 = vsub.s32 0, %v90
  %v92 = vrot.slane %v88, %v91
  %v93 = vmul.f32 %v73, %v92
  %v94 = vadd.f32 %v87, %v93
  %v95 = vxor.u32 %v94, 2147483648
  %v96 = vmul.f32 %v95, 1.442695
  %v97 = vpow.pop %v96
  %v98 = vadd.f32 %v97, 1.0
  %v99 = vrcp.pop %v98
  %v100 = vmul.f32 1.0, %v99
  %v101 = vmul.f32 %v94, %v100
  %v102 = vld [vmem:[%s6] sm:$0x1]
  %v103 = vld [vmem:[%s5] sm:$0x1]
  %105 = vset.pattern.permute.xlu0 0
  %106 = vperm.xlu0 %105, %v101
  %v107 = vpop.permute.xlu0 %106
  %v109 = vlaneseq
  %v110 = vshrl.u32 %v109, 7
  %v111 = vsub.s32 0, %v110
  %v112 = vrot.slane %v103, %v111
  %v113 = vmul.f32 %v107, %v112
  %v115 = vlaneseq
  %v116 = vshrl.u32 %v115, 7
  %v117 = vsub.s32 0, %v116
  %v118 = vrot.slane %v102, %v117
  %v120 = vadd.f32 %v118, %v113
  %v121 = vld [vmem:[%s5 + $0x1] sm:$0x1]
  %122 = vset.pattern.permute.xlu0 1
  %123 = vperm.xlu0 %122, %v101
  %v124 = vpop.permute.xlu0 %123
  %v126 = vlaneseq
  %v127 = vshrl.u32 %v126, 7
  %v128 = vsub.s32 0, %v127
  %v129 = vrot.slane %v121, %v128
  %v130 = vmul.f32 %v124, %v129
  %v131 = vadd.f32 %v120, %v130
  %v132 = vxor.u32 %v131, 2147483648
  %v133 = vmul.f32 %v132, 1.442695
  %v134 = vpow.pop %v133
  %v135 = vadd.f32 %v134, 1.0
  %v136 = vrcp.pop %v135
  %v137 = vmul.f32 1.0, %v136
  %139 = vset.pattern.permute.xlu0 0
  %140 = vperm.xlu0 %139, %v137
  %v141 = vpop.permute.xlu0 %140
  %v143 = vmul.f32 %v63, %v141
  %144 = vset.pattern.permute.xlu0 1
  %145 = vperm.xlu0 %144, %v137
  %v146 = vpop.permute.xlu0 %145
  %v148 = vmul.f32 %v64, %v146
  %v149 = vadd.f32 %v143, %v148
  %v150 = vmul.f32 %v149, 0.5
  %152 = vrot.lane.b32.xlu0 %v63, 64
  %v153 = vpop.permute.xlu0 %152
  %v155 = vsel %vm65, %v153, 0.0
  %156 = vadd.xlane.f32.xlu0 %v155
  %v157 = vpop.xlane.xlu0 %156
  %v158 = vmul.f32 %v157, 0.015625
  %160 = vrot.lane.b32.xlu0 %v64, 64
  %v161 = vpop.permute.xlu0 %160
  %v163 = vsel %vm65, %v161, 0.0
  %164 = vadd.xlane.f32.xlu0 %v163
  %v165 = vpop.xlane.xlu0 %164
  %v166 = vmul.f32 %v165, 0.015625
  %v167 = vmul.f32 %v158, %v79
  %v168 = vadd.f32 %v85, %v167
  %v169 = vmul.f32 %v166, %v92
  %v170 = vadd.f32 %v168, %v169
  %v171 = vxor.u32 %v170, 2147483648
  %v172 = vmul.f32 %v171, 1.442695
  %v173 = vpow.pop %v172
  %v174 = vadd.f32 %v173, 1.0
  %v175 = vrcp.pop %v174
  %v176 = vmul.f32 1.0, %v175
  %v177 = vmul.f32 %v170, %v176
  %179 = vset.pattern.permute.xlu0 0
  %180 = vperm.xlu0 %179, %v177
  %v181 = vpop.permute.xlu0 %180
  %v183 = vmul.f32 %v181, %v112
  %v184 = vadd.f32 %v118, %v183
  %185 = vset.pattern.permute.xlu0 1
  %186 = vperm.xlu0 %185, %v177
  %v187 = vpop.permute.xlu0 %186
  %v189 = vmul.f32 %v187, %v129
  %v190 = vadd.f32 %v184, %v189
  %v191 = vxor.u32 %v190, 2147483648
  %v192 = vmul.f32 %v191, 1.442695
  %v193 = vpow.pop %v192
  %v194 = vadd.f32 %v193, 1.0
  %v195 = vrcp.pop %v194
  %v196 = vmul.f32 1.0, %v195
  %198 = vset.pattern.permute.xlu0 0
  %199 = vperm.xlu0 %198, %v196
  %v200 = vpop.permute.xlu0 %199
  %v202 = vmul.f32 %v63, %v200
  %203 = vset.pattern.permute.xlu0 1
  %204 = vperm.xlu0 %203, %v196
  %v205 = vpop.permute.xlu0 %204
  %v207 = vmul.f32 %v64, %v205
  %v208 = vadd.f32 %v202, %v207
  %v209 = vmul.f32 %v208, 0.5
  %v210 = vsel %vm65, %v150, %v209
  %211 = vadd.xlane.f32.xlu0 %v210
  %v212 = vpop.xlane.xlu0 %211
  %v213 = vmul.f32 %v212, 0.0078125
  %v214 = vmul.f32 %v210, %v210
  %215 = vadd.xlane.f32.xlu0 %v214
  %v216 = vpop.xlane.xlu0 %215
  %v217 = vmul.f32 %v216, 0.0078125
  %v218 = vmul.f32 %v213, %v213
  %v219 = vsub.f32 %v217, %v218
  %v220 = vmax.f32 %v219, 0.0
  %v221 = vld [vmem:[%s7] sm:$0xff]
  %v222 = vadd.f32 %v220, 1e-05
  %v223 = vrsqrt.pop %v222
  %v224 = vmul.f32 %v221, %v223
  %v225 = vld [vmem:[%s8] sm:$0xff]
  %v226 = vmul.f32 %v213, %v224
  %v227 = vsub.f32 %v225, %v226
  %229 = vset.pattern.permute.xlu0 0
  %230 = vperm.xlu0 %229, %v224
  %v231 = vpop.permute.xlu0 %230
  %v233 = vmul.f32 %v210, %v231
  %235 = vset.pattern.permute.xlu0 0
  %236 = vperm.xlu0 %235, %v227
  %v237 = vpop.permute.xlu0 %236
  %v239 = vadd.f32 %v233, %v237
  %240 = vst [vmem:[%s9] sm:$0xff] %v239
  // Predicated region
  $region38: #{_lambda_.7} parent=0 // pred_check
    _
  $region39: #{_lambda_.7} parent=0 // pred_check_branch
    %242 = sbr.rel (0) target = $region41
  $region40: #{_lambda_.7} parent=0 // pred_region
    _
  $region41: #{_lambda_.7} parent=0 // pred_fallthru
    _
  // Predicated region
  $region42: #{_lambda_.7} parent=0 // pred_check
    _
  $region43: #{_lambda_.7} parent=0 // pred_check_branch
    %244 = sbr.rel (0) target = $region45
  $region44: #{_lambda_.7} parent=0 // pred_region
    _
  $region45: #{_lambda_.7} parent=0 // pred_fallthru
    _

</llo_original>
